<compile_context>
chip_gen: v6e
topology: v6e:2x2x1
jax: 0.10.0
libtpu: 0.0.40
codegen_flags: <defaults>
</compile_context>

<pallas_src>
import functools
import math

import jax
import jax.numpy as jnp
from jax.experimental import pallas as pl
from jax.experimental.pallas import tpu as pltpu

LOG_STD_MIN = -20.0
LOG_STD_MAX = 2.0
HIDDEN = 400        # logical hidden width of the reference MLP
HIDDEN_PAD = 512    # lane-dense padded width (zero-padded -> identical math)
CNN_OUT = 32


# ----------------------------------------------------------------------------
# Fused Pallas kernel: CNN + MLP + tanh-squashed Gaussian head
# ----------------------------------------------------------------------------
def _fused_actor_kernel(*refs, use_mean):
    if use_mean:
        (x_ref, vec_ref,
         m1_ref, cb1_ref, m2_ref, cb2_ref, wp_ref, pb_ref,
         w1a_ref, w1b_ref, fb1_ref, w2f_ref, fb2_ref,
         wm_ref, bm_ref, ws_ref, bs_ref,
         act_ref, logp_ref) = refs
        eps_ref = None
    else:
        (x_ref, vec_ref, eps_ref,
         m1_ref, cb1_ref, m2_ref, cb2_ref, wp_ref, pb_ref,
         w1a_ref, w1b_ref, fb1_ref, w2f_ref, fb2_ref,
         wm_ref, bm_ref, ws_ref, bs_ref,
         act_ref, logp_ref) = refs

    def dot(a, b):
        return jnp.dot(a, b, preferred_element_type=jnp.float32)

    def relu(t):
        return jnp.maximum(t, 0.0)

    # --- CNN: convs as dense matmuls; activations never leave the chip ---
    h = relu(dot(x_ref[...], m1_ref[...]) + cb1_ref[...])    # conv1 -> (B, 7*7*8)
    h = relu(dot(h, m2_ref[...]) + cb2_ref[...])             # conv2 -> (B, 3*3*8)
    cnn = relu(dot(h, wp_ref[...]) + pb_ref[...])            # projection -> (B, 32)

    # --- MLP: concat([cnn, vec]) folded into a split fc1 (no lane concat) ---
    h = relu(dot(cnn, w1a_ref[...]) + dot(vec_ref[...], w1b_ref[...]) + fb1_ref[...])
    h = relu(dot(h, w2f_ref[...]) + fb2_ref[...])
    mean = dot(h, wm_ref[...]) + bm_ref[...]                 # (B, A)
    log_std = dot(h, ws_ref[...]) + bs_ref[...]              # (B, A)

    # --- _get_std ---
    log_std = jnp.tanh(log_std)
    log_std = LOG_STD_MIN + 0.5 * (LOG_STD_MAX - LOG_STD_MIN) * (log_std + 1.0)
    std = jnp.exp(log_std)
    inv_std = jnp.exp(-log_std)

    # --- sample / mean ---
    if use_mean:
        act = mean
    else:
        act = mean + std * eps_ref[...]          # rsample with external N(0,1) noise

    # --- Normal(mean, std).log_prob(act), summed over action dim ---
    z = (act - mean) * inv_std
    logp_el = -0.5 * z * z - log_std - 0.5 * math.log(2.0 * math.pi)
    logp = jnp.sum(logp_el, axis=-1, keepdims=True)          # (B, 1)

    # --- _squash (same epsilon convention as the PyTorch reference) ---
    sq_act = jnp.tanh(act)
    sq_logp = logp - jnp.sum(jnp.log(1.0 - sq_act * sq_act + 1e-6),
                             axis=-1, keepdims=True)

    act_ref[...] = sq_act.astype(act_ref.dtype)
    logp_ref[...] = sq_logp.astype(logp_ref.dtype)


def _full_block(a):
    return pl.BlockSpec(a.shape, lambda i, _nd=a.ndim: (0,) * _nd)


@functools.partial(jax.jit, static_argnames=("use_mean",))
def actor_forward(prepared, img_nchw, vec, eps=None, use_mean=False):
    B = img_nchw.shape[0]
    A = prepared["bm"].shape[-1]

    # NCHW -> NHWC -> flat (B, H*W*C); pure layout glue, fused by XLA under jit.
    x = jnp.transpose(img_nchw, (0, 2, 3, 1)).astype(jnp.float32).reshape(B, -1)
    vec = vec.astype(jnp.float32)

    weights = [prepared[k] for k in (
        "m1", "cb1", "m2", "cb2", "wp", "pb",
        "w1a", "w1b", "fb1", "w2f", "fb2",
        "wm", "bm", "ws", "bs")]
    if use_mean:
        inputs = [x, vec] + weights          # no eps DMA in the deterministic path
    else:
        inputs = [x, vec, eps.astype(jnp.float32)] + weights

    act, logp = pl.pallas_call(
        functools.partial(_fused_actor_kernel, use_mean=use_mean),
        grid=(1,),
        in_specs=[_full_block(a) for a in inputs],
        out_specs=(pl.BlockSpec((B, A), lambda i: (0, 0)),
                   pl.BlockSpec((B, 1), lambda i: (0, 0))),
        out_shape=(jax.ShapeDtypeStruct((B, A), jnp.float32),
                   jax.ShapeDtypeStruct((B, 1), jnp.float32)),
        compiler_params=pltpu.CompilerParams(dimension_semantics=("arbitrary",)),
    )(*inputs)
    return act, jnp.squeeze(logp, axis=-1)


# ----------------------------------------------------------------------------
# Parameter init and one-time preparation (conv -> dense matrix, padding)
# ----------------------------------------------------------------------------
def _init_linear(key, fan_in, fan_out):
    kw, kb = jax.random.split(key)
    lim = 1.0 / math.sqrt(fan_in)
    w = jax.random.uniform(kw, (fan_in, fan_out), jnp.float32, -lim, lim)
    b = jax.random.uniform(kb, (fan_out,), jnp.float32, -lim, lim)
    return w, b


def init_params(key, *, img_channels, obs_dim, act_dim):
    keys = jax.random.split(key, 6)
    p = {}
    # CNN: conv3x3/s2 (C->8), conv3x3/s2 (8->8), flatten, linear -> 32
    p["conv1_w"], p["conv1_b"] = _init_linear(keys[0], 3 * 3 * img_channels, 8)
    p["conv2_w"], p["conv2_b"] = _init_linear(keys[1], 3 * 3 * 8, 8)
    p["proj_w"], p["proj_b"] = _init_linear(keys[2], 8 * 3 * 3, CNN_OUT)
    # MLP: (32 + obs_dim) -> 400 -> 400 -> 2*act_dim
    in_dim = CNN_OUT + obs_dim
    p["fc1_w"], p["fc1_b"] = _init_linear(keys[3], in_dim, HIDDEN)
    p["fc2_w"], p["fc2_b"] = _init_linear(keys[4], HIDDEN, HIDDEN)
    p["fc3_w"], p["fc3_b"] = _init_linear(keys[5], HIDDEN, 2 * act_dim)
    return p


def _conv_to_matrix(w, b, in_h, in_w, stride):
    """Dense M s.t. (NHWC-flattened x) @ M == conv2d(x, w, stride) flattened NHWC."""
    kh, kw, cin, cout = w.shape
    oh = (in_h - kh) // stride + 1
    ow = (in_w - kw) // stride + 1
    i, j, p, q, c, o = jnp.meshgrid(
        jnp.arange(kh), jnp.arange(kw), jnp.arange(oh), jnp.arange(ow),
        jnp.arange(cin), jnp.arange(cout), indexing="ij")
    rows = ((stride * p + i) * in_w + (stride * q + j)) * cin + c
    cols = (p * ow + q) * cout + o
    vals = w[i, j, c, o]
    m = jnp.zeros((in_h * in_w * cin, oh * ow * cout), jnp.float32)
    m = m.at[rows.ravel(), cols.ravel()].set(vals.ravel())
    b_full = jnp.tile(b, oh * ow)
    return m, b_full, oh, ow


def prepare_inference_params(params, *, img_hw, img_channels, act_dim):
    H, W = img_hw
    prep = {}

    # Convs folded into dense matrices (exact same math, done once at init).
    w1 = params["conv1_w"].reshape(3, 3, img_channels, 8)
    m1, cb1, oh1, ow1 = _conv_to_matrix(w1, params["conv1_b"], H, W, 2)
    w2 = params["conv2_w"].reshape(3, 3, 8, 8)
    m2, cb2, oh2, ow2 = _conv_to_matrix(w2, params["conv2_b"], oh1, ow1, 2)
    assert oh2 * ow2 * 8 == params["proj_w"].shape[0]

    prep["m1"], prep["cb1"] = m1, cb1.reshape(1, -1)
    prep["m2"], prep["cb2"] = m2, cb2.reshape(1, -1)
    prep["wp"], prep["pb"] = params["proj_w"], params["proj_b"].reshape(1, -1)

    # MLP: pad hidden 400 -> 512 with zeros (identical math, lane-dense tiles),
    # split fc1 into (cnn-part, vec-part) and fc3 into (mean, log_std).
    pad = HIDDEN_PAD - HIDDEN
    fc1_w = params["fc1_w"]
    prep["w1a"] = jnp.pad(fc1_w[:CNN_OUT], ((0, 0), (0, pad)))
    prep["w1b"] = jnp.pad(fc1_w[CNN_OUT:], ((0, 0), (0, pad)))
    prep["fb1"] = jnp.pad(params["fc1_b"], (0, pad)).reshape(1, -1)
    prep["w2f"] = jnp.pad(params["fc2_w"], ((0, pad), (0, pad)))
    prep["fb2"] = jnp.pad(params["fc2_b"], (0, pad)).reshape(1, -1)
    prep["wm"] = jnp.pad(params["fc3_w"][:, :act_dim], ((0, pad), (0, 0)))
    prep["ws"] = jnp.pad(params["fc3_w"][:, act_dim:], ((0, pad), (0, 0)))
    prep["bm"] = params["fc3_b"][:act_dim].reshape(1, -1)
    prep["bs"] = params["fc3_b"][act_dim:].reshape(1, -1)
    return prep


# ----------------------------------------------------------------------------
if __name__ == "__main__":
    key = jax.random.PRNGKey(0)
    k_img, k_vec, k_eps, k_params = jax.random.split(key, 4)

    B, C, H, W = 2, 4, 16, 16
    obs_dim, act_dim = 8, 4

    img = jax.random.normal(k_img, (B, C, H, W), jnp.float32)
    vec = jax.random.normal(k_vec, (B, obs_dim), jnp.float32)
    eps = jax.random.normal(k_eps, (B, act_dim), jnp.float32)  # rsample noise

    params = init_params(k_params, img_channels=C, obs_dim=obs_dim, act_dim=act_dim)
    prepared = prepare_inference_params(params, img_hw=(H, W),
                                        img_channels=C, act_dim=act_dim)

    # Stochastic path (rsample) and deterministic path (use_mean=True, no eps).
    act, logp = actor_forward(prepared, img, vec, eps, use_mean=False)
    act_m, logp_m = actor_forward(prepared, img, vec, use_mean=True)
    jax.block_until_ready((act, logp, act_m, logp_m))

    assert act.shape == (B, act_dim) and logp.shape == (B,)
    assert act_m.shape == (B, act_dim) and logp_m.shape == (B,)
    assert bool(jnp.all(jnp.isfinite(act))) and bool(jnp.all(jnp.isfinite(logp)))
    print("KERNEL_OK")
</pallas_src>

<mosaic_0001>
module attributes {stable_mosaic.version = 11 : i64} {
  func.func @_fused_actor_kernel(%arg0: i32, %arg1: memref<2x1024xf32, #tpu.memory_space<vmem>>, %arg2: memref<2x8xf32, #tpu.memory_space<vmem>>, %arg3: memref<2x4xf32, #tpu.memory_space<vmem>>, %arg4: memref<1024x392xf32, #tpu.memory_space<vmem>>, %arg5: memref<1x392xf32, #tpu.memory_space<vmem>>, %arg6: memref<392x72xf32, #tpu.memory_space<vmem>>, %arg7: memref<1x72xf32, #tpu.memory_space<vmem>>, %arg8: memref<72x32xf32, #tpu.memory_space<vmem>>, %arg9: memref<1x32xf32, #tpu.memory_space<vmem>>, %arg10: memref<32x512xf32, #tpu.memory_space<vmem>>, %arg11: memref<8x512xf32, #tpu.memory_space<vmem>>, %arg12: memref<1x512xf32, #tpu.memory_space<vmem>>, %arg13: memref<512x512xf32, #tpu.memory_space<vmem>>, %arg14: memref<1x512xf32, #tpu.memory_space<vmem>>, %arg15: memref<512x4xf32, #tpu.memory_space<vmem>>, %arg16: memref<1x4xf32, #tpu.memory_space<vmem>>, %arg17: memref<512x4xf32, #tpu.memory_space<vmem>>, %arg18: memref<1x4xf32, #tpu.memory_space<vmem>>, %arg19: memref<2x4xf32, #tpu.memory_space<vmem>>, %arg20: memref<2x1xf32, #tpu.memory_space<vmem>>) attributes {dimension_semantics = [#tpu.dimension_semantics<arbitrary>], iteration_bounds = array<i64: 1>, scalar_prefetch = 0 : i64, scratch_operands = 0 : i64, tpu.core_type = #tpu.core_type<tc>, window_params = [{pipeline_mode = #tpu.pipeline_mode<synchronous>, transform_indices = @transform_0, window_bounds = array<i64: 2, 1024>}, {pipeline_mode = #tpu.pipeline_mode<synchronous>, transform_indices = @transform_1, window_bounds = array<i64: 2, 8>}, {pipeline_mode = #tpu.pipeline_mode<synchronous>, transform_indices = @transform_2, window_bounds = array<i64: 2, 4>}, {pipeline_mode = #tpu.pipeline_mode<synchronous>, transform_indices = @transform_3, window_bounds = array<i64: 1024, 392>}, {pipeline_mode = #tpu.pipeline_mode<synchronous>, transform_indices = @transform_4, window_bounds = array<i64: 1, 392>}, {pipeline_mode = #tpu.pipeline_mode<synchronous>, transform_indices = @transform_5, window_bounds = array<i64: 392, 72>}, {pipeline_mode = #tpu.pipeline_mode<synchronous>, transform_indices = @transform_6, window_bounds = array<i64: 1, 72>}, {pipeline_mode = #tpu.pipeline_mode<synchronous>, transform_indices = @transform_7, window_bounds = array<i64: 72, 32>}, {pipeline_mode = #tpu.pipeline_mode<synchronous>, transform_indices = @transform_8, window_bounds = array<i64: 1, 32>}, {pipeline_mode = #tpu.pipeline_mode<synchronous>, transform_indices = @transform_9, window_bounds = array<i64: 32, 512>}, {pipeline_mode = #tpu.pipeline_mode<synchronous>, transform_indices = @transform_10, window_bounds = array<i64: 8, 512>}, {pipeline_mode = #tpu.pipeline_mode<synchronous>, transform_indices = @transform_11, window_bounds = array<i64: 1, 512>}, {pipeline_mode = #tpu.pipeline_mode<synchronous>, transform_indices = @transform_12, window_bounds = array<i64: 512, 512>}, {pipeline_mode = #tpu.pipeline_mode<synchronous>, transform_indices = @transform_13, window_bounds = array<i64: 1, 512>}, {pipeline_mode = #tpu.pipeline_mode<synchronous>, transform_indices = @transform_14, window_bounds = array<i64: 512, 4>}, {pipeline_mode = #tpu.pipeline_mode<synchronous>, transform_indices = @transform_15, window_bounds = array<i64: 1, 4>}, {pipeline_mode = #tpu.pipeline_mode<synchronous>, transform_indices = @transform_16, window_bounds = array<i64: 512, 4>}, {pipeline_mode = #tpu.pipeline_mode<synchronous>, transform_indices = @transform_17, window_bounds = array<i64: 1, 4>}, {pipeline_mode = #tpu.pipeline_mode<synchronous>, transform_indices = @transform_18, window_bounds = array<i64: 2, 4>}, {pipeline_mode = #tpu.pipeline_mode<synchronous>, transform_indices = @transform_19, window_bounds = array<i64: 2, 1>}]} {
    %c0 = arith.constant 0 : index
    %c0_0 = arith.constant 0 : index
    %0 = vector.load %arg1[%c0, %c0_0] : memref<2x1024xf32, #tpu.memory_space<vmem>>, vector<2x1024xf32>
    %c0_1 = arith.constant 0 : index
    %c0_2 = arith.constant 0 : index
    %1 = vector.load %arg4[%c0_1, %c0_2] : memref<1024x392xf32, #tpu.memory_space<vmem>>, vector<1024x392xf32>
    %cst = arith.constant dense<0.000000e+00> : vector<2x392xf32>
    %2 = tpu.matmul %0, %1, %cst {dimension_numbers = #tpu.dot_dimension_numbers<[1], [0], [0], [1], [0, 0, 1, 1], [], []>} : vector<2x1024xf32>, vector<1024x392xf32>, vector<2x392xf32> -> vector<2x392xf32>
    %c0_3 = arith.constant 0 : index
    %c0_4 = arith.constant 0 : index
    %3 = vector.load %arg5[%c0_3, %c0_4] : memref<1x392xf32, #tpu.memory_space<vmem>>, vector<1x392xf32>
    %4 = vector.broadcast %3 : vector<1x392xf32> to vector<2x392xf32>
    %5 = arith.addf %2, %4 : vector<2x392xf32>
    %cst_5 = arith.constant 0.000000e+00 : f32
    %6 = vector.broadcast %cst_5 : f32 to vector<2x392xf32>
    %7 = arith.maximumf %5, %6 : vector<2x392xf32>
    %c0_6 = arith.constant 0 : index
    %c0_7 = arith.constant 0 : index
    %8 = vector.load %arg6[%c0_6, %c0_7] : memref<392x72xf32, #tpu.memory_space<vmem>>, vector<392x72xf32>
    %cst_8 = arith.constant dense<0.000000e+00> : vector<2x72xf32>
    %9 = tpu.matmul %7, %8, %cst_8 {dimension_numbers = #tpu.dot_dimension_numbers<[1], [0], [0], [1], [0, 0, 1, 1], [], []>} : vector<2x392xf32>, vector<392x72xf32>, vector<2x72xf32> -> vector<2x72xf32>
    %c0_9 = arith.constant 0 : index
    %c0_10 = arith.constant 0 : index
    %10 = vector.load %arg7[%c0_9, %c0_10] : memref<1x72xf32, #tpu.memory_space<vmem>>, vector<1x72xf32>
    %11 = vector.broadcast %10 : vector<1x72xf32> to vector<2x72xf32>
    %12 = arith.addf %9, %11 : vector<2x72xf32>
    %cst_11 = arith.constant 0.000000e+00 : f32
    %13 = vector.broadcast %cst_11 : f32 to vector<2x72xf32>
    %14 = arith.maximumf %12, %13 : vector<2x72xf32>
    %c0_12 = arith.constant 0 : index
    %c0_13 = arith.constant 0 : index
    %15 = vector.load %arg8[%c0_12, %c0_13] : memref<72x32xf32, #tpu.memory_space<vmem>>, vector<72x32xf32>
    %cst_14 = arith.constant dense<0.000000e+00> : vector<2x32xf32>
    %16 = tpu.matmul %14, %15, %cst_14 {dimension_numbers = #tpu.dot_dimension_numbers<[1], [0], [0], [1], [0, 0, 1, 1], [], []>} : vector<2x72xf32>, vector<72x32xf32>, vector<2x32xf32> -> vector<2x32xf32>
    %c0_15 = arith.constant 0 : index
    %c0_16 = arith.constant 0 : index
    %17 = vector.load %arg9[%c0_15, %c0_16] : memref<1x32xf32, #tpu.memory_space<vmem>>, vector<1x32xf32>
    %18 = vector.broadcast %17 : vector<1x32xf32> to vector<2x32xf32>
    %19 = arith.addf %16, %18 : vector<2x32xf32>
    %cst_17 = arith.constant 0.000000e+00 : f32
    %20 = vector.broadcast %cst_17 : f32 to vector<2x32xf32>
    %21 = arith.maximumf %19, %20 : vector<2x32xf32>
    %c0_18 = arith.constant 0 : index
    %c0_19 = arith.constant 0 : index
    %22 = vector.load %arg10[%c0_18, %c0_19] : memref<32x512xf32, #tpu.memory_space<vmem>>, vector<32x512xf32>
    %cst_20 = arith.constant dense<0.000000e+00> : vector<2x512xf32>
    %23 = tpu.matmul %21, %22, %cst_20 {dimension_numbers = #tpu.dot_dimension_numbers<[1], [0], [0], [1], [0, 0, 1, 1], [], []>} : vector<2x32xf32>, vector<32x512xf32>, vector<2x512xf32> -> vector<2x512xf32>
    %c0_21 = arith.constant 0 : index
    %c0_22 = arith.constant 0 : index
    %24 = vector.load %arg2[%c0_21, %c0_22] : memref<2x8xf32, #tpu.memory_space<vmem>>, vector<2x8xf32>
    %c0_23 = arith.constant 0 : index
    %c0_24 = arith.constant 0 : index
    %25 = vector.load %arg11[%c0_23, %c0_24] : memref<8x512xf32, #tpu.memory_space<vmem>>, vector<8x512xf32>
    %cst_25 = arith.constant dense<0.000000e+00> : vector<2x512xf32>
    %26 = tpu.matmul %24, %25, %cst_25 {dimension_numbers = #tpu.dot_dimension_numbers<[1], [0], [0], [1], [0, 0, 1, 1], [], []>} : vector<2x8xf32>, vector<8x512xf32>, vector<2x512xf32> -> vector<2x512xf32>
    %27 = arith.addf %23, %26 : vector<2x512xf32>
    %c0_26 = arith.constant 0 : index
    %c0_27 = arith.constant 0 : index
    %28 = vector.load %arg12[%c0_26, %c0_27] : memref<1x512xf32, #tpu.memory_space<vmem>>, vector<1x512xf32>
    %29 = vector.broadcast %28 : vector<1x512xf32> to vector<2x512xf32>
    %30 = arith.addf %27, %29 : vector<2x512xf32>
    %cst_28 = arith.constant 0.000000e+00 : f32
    %31 = vector.broadcast %cst_28 : f32 to vector<2x512xf32>
    %32 = arith.maximumf %30, %31 : vector<2x512xf32>
    %c0_29 = arith.constant 0 : index
    %c0_30 = arith.constant 0 : index
    %33 = vector.load %arg13[%c0_29, %c0_30] : memref<512x512xf32, #tpu.memory_space<vmem>>, vector<512x512xf32>
    %cst_31 = arith.constant dense<0.000000e+00> : vector<2x512xf32>
    %34 = tpu.matmul %32, %33, %cst_31 {dimension_numbers = #tpu.dot_dimension_numbers<[1], [0], [0], [1], [0, 0, 1, 1], [], []>} : vector<2x512xf32>, vector<512x512xf32>, vector<2x512xf32> -> vector<2x512xf32>
    %c0_32 = arith.constant 0 : index
    %c0_33 = arith.constant 0 : index
    %35 = vector.load %arg14[%c0_32, %c0_33] : memref<1x512xf32, #tpu.memory_space<vmem>>, vector<1x512xf32>
    %36 = vector.broadcast %35 : vector<1x512xf32> to vector<2x512xf32>
    %37 = arith.addf %34, %36 : vector<2x512xf32>
    %cst_34 = arith.constant 0.000000e+00 : f32
    %38 = vector.broadcast %cst_34 : f32 to vector<2x512xf32>
    %39 = arith.maximumf %37, %38 : vector<2x512xf32>
    %c0_35 = arith.constant 0 : index
    %c0_36 = arith.constant 0 : index
    %40 = vector.load %arg15[%c0_35, %c0_36] : memref<512x4xf32, #tpu.memory_space<vmem>>, vector<512x4xf32>
    %cst_37 = arith.constant dense<0.000000e+00> : vector<2x4xf32>
    %41 = tpu.matmul %39, %40, %cst_37 {dimension_numbers = #tpu.dot_dimension_numbers<[1], [0], [0], [1], [0, 0, 1, 1], [], []>} : vector<2x512xf32>, vector<512x4xf32>, vector<2x4xf32> -> vector<2x4xf32>
    %c0_38 = arith.constant 0 : index
    %c0_39 = arith.constant 0 : index
    %42 = vector.load %arg16[%c0_38, %c0_39] : memref<1x4xf32, #tpu.memory_space<vmem>>, vector<1x4xf32>
    %43 = vector.broadcast %42 : vector<1x4xf32> to vector<2x4xf32>
    %44 = arith.addf %41, %43 : vector<2x4xf32>
    %c0_40 = arith.constant 0 : index
    %c0_41 = arith.constant 0 : index
    %45 = vector.load %arg17[%c0_40, %c0_41] : memref<512x4xf32, #tpu.memory_space<vmem>>, vector<512x4xf32>
    %cst_42 = arith.constant dense<0.000000e+00> : vector<2x4xf32>
    %46 = tpu.matmul %39, %45, %cst_42 {dimension_numbers = #tpu.dot_dimension_numbers<[1], [0], [0], [1], [0, 0, 1, 1], [], []>} : vector<2x512xf32>, vector<512x4xf32>, vector<2x4xf32> -> vector<2x4xf32>
    %c0_43 = arith.constant 0 : index
    %c0_44 = arith.constant 0 : index
    %47 = vector.load %arg18[%c0_43, %c0_44] : memref<1x4xf32, #tpu.memory_space<vmem>>, vector<1x4xf32>
    %48 = vector.broadcast %47 : vector<1x4xf32> to vector<2x4xf32>
    %49 = arith.addf %46, %48 : vector<2x4xf32>
    %50 = math.tanh %49 : vector<2x4xf32>
    %cst_45 = arith.constant 1.000000e+00 : f32
    %51 = vector.broadcast %cst_45 : f32 to vector<2x4xf32>
    %52 = arith.addf %50, %51 : vector<2x4xf32>
    %cst_46 = arith.constant 1.100000e+01 : f32
    %53 = vector.broadcast %cst_46 : f32 to vector<2x4xf32>
    %54 = arith.mulf %53, %52 : vector<2x4xf32>
    %cst_47 = arith.constant -2.000000e+01 : f32
    %55 = vector.broadcast %cst_47 : f32 to vector<2x4xf32>
    %56 = arith.addf %55, %54 : vector<2x4xf32>
    %57 = math.exp %56 : vector<2x4xf32>
    %cst_48 = arith.constant 0.000000e+00 : f32
    %58 = vector.broadcast %cst_48 : f32 to vector<2x4xf32>
    %59 = arith.subf %58, %56 : vector<2x4xf32>
    %60 = math.exp %59 : vector<2x4xf32>
    %c0_49 = arith.constant 0 : index
    %c0_50 = arith.constant 0 : index
    %61 = vector.load %arg3[%c0_49, %c0_50] : memref<2x4xf32, #tpu.memory_space<vmem>>, vector<2x4xf32>
    %62 = arith.mulf %57, %61 : vector<2x4xf32>
    %63 = arith.addf %44, %62 : vector<2x4xf32>
    %64 = arith.subf %63, %44 : vector<2x4xf32>
    %65 = arith.mulf %64, %60 : vector<2x4xf32>
    %cst_51 = arith.constant -5.000000e-01 : f32
    %66 = vector.broadcast %cst_51 : f32 to vector<2x4xf32>
    %67 = arith.mulf %66, %65 : vector<2x4xf32>
    %68 = arith.mulf %67, %65 : vector<2x4xf32>
    %69 = arith.subf %68, %56 : vector<2x4xf32>
    %cst_52 = arith.constant 0.918938517 : f32
    %70 = vector.broadcast %cst_52 : f32 to vector<2x4xf32>
    %71 = arith.subf %69, %70 : vector<2x4xf32>
    %cst_53 = arith.constant dense<0.000000e+00> : vector<2xf32>
    %72 = vector.multi_reduction <add>, %71, %cst_53 [1] : vector<2x4xf32> to vector<2xf32>
    %73 = vector.shape_cast %72 : vector<2xf32> to vector<2x1xf32>
    %74 = math.tanh %63 : vector<2x4xf32>
    %75 = arith.mulf %74, %74 : vector<2x4xf32>
    %cst_54 = arith.constant 1.000000e+00 : f32
    %76 = vector.broadcast %cst_54 : f32 to vector<2x4xf32>
    %77 = arith.subf %76, %75 : vector<2x4xf32>
    %cst_55 = arith.constant 9.99999997E-7 : f32
    %78 = vector.broadcast %cst_55 : f32 to vector<2x4xf32>
    %79 = arith.addf %77, %78 : vector<2x4xf32>
    %80 = math.log %79 : vector<2x4xf32>
    %cst_56 = arith.constant dense<0.000000e+00> : vector<2xf32>
    %81 = vector.multi_reduction <add>, %80, %cst_56 [1] : vector<2x4xf32> to vector<2xf32>
    %82 = vector.shape_cast %81 : vector<2xf32> to vector<2x1xf32>
    %83 = arith.subf %73, %82 : vector<2x1xf32>
    %c0_57 = arith.constant 0 : index
    %c0_58 = arith.constant 0 : index
    %84 = vector.load %arg19[%c0_57, %c0_58] : memref<2x4xf32, #tpu.memory_space<vmem>>, vector<2x4xf32>
    tpu.vector_store %arg19[%c0_57, %c0_58], %74 {strides = array<i32>} : memref<2x4xf32, #tpu.memory_space<vmem>>, vector<2x4xf32>,
    %c0_59 = arith.constant 0 : index
    %c0_60 = arith.constant 0 : index
    %85 = vector.load %arg20[%c0_59, %c0_60] : memref<2x1xf32, #tpu.memory_space<vmem>>, vector<2x1xf32>
    tpu.vector_store %arg20[%c0_59, %c0_60], %83 {strides = array<i32>} : memref<2x1xf32, #tpu.memory_space<vmem>>, vector<2x1xf32>,
    return
  }
  func.func @transform_0(%arg0: i32) -> (i32, i32) {
    %c0_i32 = arith.constant 0 : i32
    %c0_i32_0 = arith.constant 0 : i32
    %c0_i32_1 = arith.constant 0 : i32
    return %c0_i32, %c0_i32_0 : i32, i32
  }
  func.func @transform_1(%arg0: i32) -> (i32, i32) {
    %c0_i32 = arith.constant 0 : i32
    %c0_i32_0 = arith.constant 0 : i32
    %c0_i32_1 = arith.constant 0 : i32
    return %c0_i32, %c0_i32_0 : i32, i32
  }
  func.func @transform_2(%arg0: i32) -> (i32, i32) {
    %c0_i32 = arith.constant 0 : i32
    %c0_i32_0 = arith.constant 0 : i32
    %c0_i32_1 = arith.constant 0 : i32
    return %c0_i32, %c0_i32_0 : i32, i32
  }
  func.func @transform_3(%arg0: i32) -> (i32, i32) {
    %c0_i32 = arith.constant 0 : i32
    %c0_i32_0 = arith.constant 0 : i32
    %c0_i32_1 = arith.constant 0 : i32
    return %c0_i32, %c0_i32_0 : i32, i32
  }
  func.func @transform_4(%arg0: i32) -> (i32, i32) {
    %c0_i32 = arith.constant 0 : i32
    %c0_i32_0 = arith.constant 0 : i32
    %c0_i32_1 = arith.constant 0 : i32
    return %c0_i32, %c0_i32_0 : i32, i32
  }
  func.func @transform_5(%arg0: i32) -> (i32, i32) {
    %c0_i32 = arith.constant 0 : i32
    %c0_i32_0 = arith.constant 0 : i32
    %c0_i32_1 = arith.constant 0 : i32
    return %c0_i32, %c0_i32_0 : i32, i32
  }
  func.func @transform_6(%arg0: i32) -> (i32, i32) {
    %c0_i32 = arith.constant 0 : i32
    %c0_i32_0 = arith.constant 0 : i32
    %c0_i32_1 = arith.constant 0 : i32
    return %c0_i32, %c0_i32_0 : i32, i32
  }
  func.func @transform_7(%arg0: i32) -> (i32, i32) {
    %c0_i32 = arith.constant 0 : i32
    %c0_i32_0 = arith.constant 0 : i32
    %c0_i32_1 = arith.constant 0 : i32
    return %c0_i32, %c0_i32_0 : i32, i32
  }
  func.func @transform_8(%arg0: i32) -> (i32, i32) {
    %c0_i32 = arith.constant 0 : i32
    %c0_i32_0 = arith.constant 0 : i32
    %c0_i32_1 = arith.constant 0 : i32
    return %c0_i32, %c0_i32_0 : i32, i32
  }
  func.func @transform_9(%arg0: i32) -> (i32, i32) {
    %c0_i32 = arith.constant 0 : i32
    %c0_i32_0 = arith.constant 0 : i32
    %c0_i32_1 = arith.constant 0 : i32
    return %c0_i32, %c0_i32_0 : i32, i32
  }
  func.func @transform_10(%arg0: i32) -> (i32, i32) {
    %c0_i32 = arith.constant 0 : i32
    %c0_i32_0 = arith.constant 0 : i32
    %c0_i32_1 = arith.constant 0 : i32
    return %c0_i32, %c0_i32_0 : i32, i32
  }
  func.func @transform_11(%arg0: i32) -> (i32, i32) {
    %c0_i32 = arith.constant 0 : i32
    %c0_i32_0 = arith.constant 0 : i32
    %c0_i32_1 = arith.constant 0 : i32
    return %c0_i32, %c0_i32_0 : i32, i32
  }
  func.func @transform_12(%arg0: i32) -> (i32, i32) {
    %c0_i32 = arith.constant 0 : i32
    %c0_i32_0 = arith.constant 0 : i32
    %c0_i32_1 = arith.constant 0 : i32
    return %c0_i32, %c0_i32_0 : i32, i32
  }
  func.func @transform_13(%arg0: i32) -> (i32, i32) {
    %c0_i32 = arith.constant 0 : i32
    %c0_i32_0 = arith.constant 0 : i32
    %c0_i32_1 = arith.constant 0 : i32
    return %c0_i32, %c0_i32_0 : i32, i32
  }
  func.func @transform_14(%arg0: i32) -> (i32, i32) {
    %c0_i32 = arith.constant 0 : i32
    %c0_i32_0 = arith.constant 0 : i32
    %c0_i32_1 = arith.constant 0 : i32
    return %c0_i32, %c0_i32_0 : i32, i32
  }
  func.func @transform_15(%arg0: i32) -> (i32, i32) {
    %c0_i32 = arith.constant 0 : i32
    %c0_i32_0 = arith.constant 0 : i32
    %c0_i32_1 = arith.constant 0 : i32
    return %c0_i32, %c0_i32_0 : i32, i32
  }
  func.func @transform_16(%arg0: i32) -> (i32, i32) {
    %c0_i32 = arith.constant 0 : i32
    %c0_i32_0 = arith.constant 0 : i32
    %c0_i32_1 = arith.constant 0 : i32
    return %c0_i32, %c0_i32_0 : i32, i32
  }
  func.func @transform_17(%arg0: i32) -> (i32, i32) {
    %c0_i32 = arith.constant 0 : i32
    %c0_i32_0 = arith.constant 0 : i32
    %c0_i32_1 = arith.constant 0 : i32
    return %c0_i32, %c0_i32_0 : i32, i32
  }
  func.func @transform_18(%arg0: i32) -> (i32, i32) {
    %c0_i32 = arith.constant 0 : i32
    %c0_i32_0 = arith.constant 0 : i32
    %c0_i32_1 = arith.constant 0 : i32
    return %c0_i32, %c0_i32_0 : i32, i32
  }
  func.func @transform_19(%arg0: i32) -> (i32, i32) {
    %c0_i32 = arith.constant 0 : i32
    %c0_i32_0 = arith.constant 0 : i32
    %c0_i32_1 = arith.constant 0 : i32
    return %c0_i32, %c0_i32_0 : i32, i32
  }
}

</mosaic_0001>

<llo_original>
// kernel: actor_forward.1
$region0: #{actor_forward.1}
  #allocation0 [shape = 'u32[]', space=smem, size = 0x4, offset = 0x4, fixed_abs, tag = 'smem constant byte address 0x4 - core index']
  #allocation1 [shape = 'u32[144,128]{1,0:T(1,128)}', space=vmem, size = 0x12000, scoped, tag = 'internal scratch']
  %s0 = inlined_call_operand.vmem [shape: f32[2,1024], index: 0, kind: input, shape index: {}]
  %s1 = inlined_call_operand.vmem [shape: f32[2,8], index: 1, kind: input, shape index: {}]
  %s2 = inlined_call_operand.vmem [shape: f32[2,4], index: 2, kind: input, shape index: {}]
  %s3 = inlined_call_operand.vmem [shape: f32[1024,392], index: 3, kind: input, shape index: {}]
  %s4 = inlined_call_operand.vmem [shape: f32[1,392], index: 4, kind: input, shape index: {}]
  %s5 = inlined_call_operand.vmem [shape: f32[392,72], index: 5, kind: input, shape index: {}]
  %s6 = inlined_call_operand.vmem [shape: f32[1,72], index: 6, kind: input, shape index: {}]
  %s7 = inlined_call_operand.vmem [shape: f32[72,32], index: 7, kind: input, shape index: {}]
  %s8 = inlined_call_operand.vmem [shape: f32[1,32], index: 8, kind: input, shape index: {}]
  %s9 = inlined_call_operand.vmem [shape: f32[32,512], index: 9, kind: input, shape index: {}]
  %s10 = inlined_call_operand.vmem [shape: f32[8,512], index: 10, kind: input, shape index: {}]
  %s11 = inlined_call_operand.vmem [shape: f32[1,512], index: 11, kind: input, shape index: {}]
  %s12 = inlined_call_operand.vmem [shape: f32[512,512], index: 12, kind: input, shape index: {}]
  %s13 = inlined_call_operand.vmem [shape: f32[1,512], index: 13, kind: input, shape index: {}]
  %s14 = inlined_call_operand.vmem [shape: f32[512,4], index: 14, kind: input, shape index: {}]
  %s15 = inlined_call_operand.vmem [shape: f32[1,4], index: 15, kind: input, shape index: {}]
  %s16 = inlined_call_operand.vmem [shape: f32[512,4], index: 16, kind: input, shape index: {}]
  %s17 = inlined_call_operand.vmem [shape: f32[1,4], index: 17, kind: input, shape index: {}]
  %s18 = inlined_call_operand.hbm [shape: f32[2,4], index: 18, kind: output, shape index: {0}]
  %s19 = inlined_call_operand.vmem [shape: f32[2,1], index: 19, kind: output, shape index: {1}]
  %20 = xla_tuple %s18, %s19
  %s21 = sld [smem:[#allocation0]]
  $region90: #{actor_forward.1} parent=0
    _
  %s23 = ssub.s32 1, %s21
  %s24 = scalar_select 0, %s23, %s21
  $region1: #{actor_forward.1} parent=0
    #allocation2 [shape = 'u8[1024]{0}', space=vmem, size = 0x400, scoped, tag = 'output window, operand 0, single buffered']
    #allocation3 [shape = 's32[1]{0}', space=sflag, size = 0x4, scoped, tag = 'scoped memory for actor_forward.1']
    %25 = vsyncpa [#allocation3], 0
    // Predicated region
    $region2: #{actor_forward.1} parent=1 // pred_check
      _
    $region3: #{actor_forward.1} parent=1 // pred_check_branch
      %27 = sbr.rel (0) target = $region5
    $region4: #{actor_forward.1} parent=1 // pred_region
      _
    $region5: #{actor_forward.1} parent=1 // pred_fallthru
      _
    // Predicated region
    $region6: #{actor_forward.1} parent=1 // pred_check
      _
    $region7: #{actor_forward.1} parent=1 // pred_check_branch
      %29 = sbr.rel (0) target = $region9
    $region8: #{actor_forward.1} parent=1 // pred_region
      _
    $region9: #{actor_forward.1} parent=1 // pred_fallthru
      _
    // Predicated region
    $region10: #{actor_forward.1} parent=1 // pred_check
      _
    $region11: #{actor_forward.1} parent=1 // pred_check_branch
      %31 = sbr.rel (0) target = $region13
    $region12: #{actor_forward.1} parent=1 // pred_region
      _
    $region13: #{actor_forward.1} parent=1 // pred_fallthru
      _
    // Predicated region
    $region14: #{actor_forward.1} parent=1 // pred_check
      _
    $region15: #{actor_forward.1} parent=1 // pred_check_branch
      %33 = sbr.rel (0) target = $region17
    $region16: #{actor_forward.1} parent=1 // pred_region
      _
    $region17: #{actor_forward.1} parent=1 // pred_fallthru
      _
    // Predicated region
    $region18: #{actor_forward.1} parent=1 // pred_check
      _
    $region19: #{actor_forward.1} parent=1 // pred_check_branch
      %35 = sbr.rel (0) target = $region21
    $region20: #{actor_forward.1} parent=1 // pred_region
      _
    $region21: #{actor_forward.1} parent=1 // pred_fallthru
      _
    // Predicated region
    $region22: #{actor_forward.1} parent=1 // pred_check
      _
    $region23: #{actor_forward.1} parent=1 // pred_check_branch
      %37 = sbr.rel (0) target = $region25
    $region24: #{actor_forward.1} parent=1 // pred_region
      _
    $region25: #{actor_forward.1} parent=1 // pred_fallthru
      _
    // Predicated region
    $region26: #{actor_forward.1} parent=1 // pred_check
      _
    $region27: #{actor_forward.1} parent=1 // pred_check_branch
      %39 = sbr.rel (0) target = $region29
    $region28: #{actor_forward.1} parent=1 // pred_region
      _
    $region29: #{actor_forward.1} parent=1 // pred_fallthru
      _
    // Predicated region
    $region30: #{actor_forward.1} parent=1 // pred_check
      _
    $region31: #{actor_forward.1} parent=1 // pred_check_branch
      %41 = sbr.rel (0) target = $region33
    $region32: #{actor_forward.1} parent=1 // pred_region
      _
    $region33: #{actor_forward.1} parent=1 // pred_fallthru
      _
    // Predicated region
    $region34: #{actor_forward.1} parent=1 // pred_check
      _
    $region35: #{actor_forward.1} parent=1 // pred_check_branch
      %43 = sbr.rel (0) target = $region37
    $region36: #{actor_forward.1} parent=1 // pred_region
      _
    $region37: #{actor_forward.1} parent=1 // pred_fallthru
      _
    // Predicated region
    $region38: #{actor_forward.1} parent=1 // pred_check
      _
    $region39: #{actor_forward.1} parent=1 // pred_check_branch
      %45 = sbr.rel (0) target = $region41
    $region40: #{actor_forward.1} parent=1 // pred_region
      _
    $region41: #{actor_forward.1} parent=1 // pred_fallthru
      _
    // Predicated region
    $region42: #{actor_forward.1} parent=1 // pred_check
      _
    $region43: #{actor_forward.1} parent=1 // pred_check_branch
      %47 = sbr.rel (0) target = $region45
    $region44: #{actor_forward.1} parent=1 // pred_region
      _
    $region45: #{actor_forward.1} parent=1 // pred_fallthru
      _
    // Predicated region
    $region46: #{actor_forward.1} parent=1 // pred_check
      _
    $region47: #{actor_forward.1} parent=1 // pred_check_branch
      %49 = sbr.rel (0) target = $region49
    $region48: #{actor_forward.1} parent=1 // pred_region
      _
    $region49: #{actor_forward.1} parent=1 // pred_fallthru
      _
    // Predicated region
    $region50: #{actor_forward.1} parent=1 // pred_check
      _
    $region51: #{actor_forward.1} parent=1 // pred_check_branch
      %51 = sbr.rel (0) target = $region53
    $region52: #{actor_forward.1} parent=1 // pred_region
      _
    $region53: #{actor_forward.1} parent=1 // pred_fallthru
      _
    // Predicated region
    $region54: #{actor_forward.1} parent=1 // pred_check
      _
    $region55: #{actor_forward.1} parent=1 // pred_check_branch
      %53 = sbr.rel (0) target = $region57
    $region56: #{actor_forward.1} parent=1 // pred_region
      _
    $region57: #{actor_forward.1} parent=1 // pred_fallthru
      _
    // Predicated region
    $region58: #{actor_forward.1} parent=1 // pred_check
      _
    $region59: #{actor_forward.1} parent=1 // pred_check_branch
      %55 = sbr.rel (0) target = $region61
    $region60: #{actor_forward.1} parent=1 // pred_region
      _
    $region61: #{actor_forward.1} parent=1 // pred_fallthru
      _
    // Predicated region
    $region62: #{actor_forward.1} parent=1 // pred_check
      _
    $region63: #{actor_forward.1} parent=1 // pred_check_branch
      %57 = sbr.rel (0) target = $region65
    $region64: #{actor_forward.1} parent=1 // pred_region
      _
    $region65: #{actor_forward.1} parent=1 // pred_fallthru
      _
    // Predicated region
    $region66: #{actor_forward.1} parent=1 // pred_check
      _
    $region67: #{actor_forward.1} parent=1 // pred_check_branch
      %59 = sbr.rel (0) target = $region69
    $region68: #{actor_forward.1} parent=1 // pred_region
      _
    $region69: #{actor_forward.1} parent=1 // pred_fallthru
      _
    // Predicated region
    $region70: #{actor_forward.1} parent=1 // pred_check
      _
    $region71: #{actor_forward.1} parent=1 // pred_check_branch
      %61 = sbr.rel (0) target = $region73
    $region72: #{actor_forward.1} parent=1 // pred_region
      _
    $region73: #{actor_forward.1} parent=1 // pred_fallthru
      _
    %v62 = vld [vmem:[%s0] sm:$0xff]
    %v63 = vld [vmem:[%s0 + $0x8] sm:$0xff]
    %v64 = vld [vmem:[%s3] sm:$0xff]
    %v65 = vld [vmem:[%s3 + $0x8] sm:$0xff]
    %v66 = vld [vmem:[%s3 + $0x10] sm:$0xff]
    %v67 = vld [vmem:[%s3 + $0x18] sm:$0xff]
    %v68 = vld [vmem:[%s3 + $0x20] sm:$0xff]
    %v69 = vld [vmem:[%s3 + $0x28] sm:$0xff]
    %v70 = vld [vmem:[%s3 + $0x30] sm:$0xff]
    %v71 = vld [vmem:[%s3 + $0x38] sm:$0xff]
    %v72 = vld [vmem:[%s3 + $0x40] sm:$0xff]
    %v73 = vld [vmem:[%s3 + $0x48] sm:$0xff]
    %v74 = vld [vmem:[%s3 + $0x50] sm:$0xff]
    %v75 = vld [vmem:[%s3 + $0x58] sm:$0xff]
    %v76 = vld [vmem:[%s3 + $0x60] sm:$0xff]
    %v77 = vld [vmem:[%s3 + $0x68] sm:$0xff]
    %v78 = vld [vmem:[%s3 + $0x70] sm:$0xff]
    %v79 = vld [vmem:[%s3 + $0x78] sm:$0xff]
    %v80 = vld [vmem:[%s3 + $0x80] sm:$0xff]
    %v81 = vld [vmem:[%s3 + $0x88] sm:$0xff]
    %v82 = vld [vmem:[%s3 + $0x90] sm:$0xff]
    %v83 = vld [vmem:[%s3 + $0x98] sm:$0xff]
    %v84 = vld [vmem:[%s3 + $0xa0] sm:$0xff]
    %v85 = vld [vmem:[%s3 + $0xa8] sm:$0xff]
    %v86 = vld [vmem:[%s3 + $0xb0] sm:$0xff]
    %v87 = vld [vmem:[%s3 + $0xb8] sm:$0xff]
    %v88 = vld [vmem:[%s3 + $0xc0] sm:$0xff]
    %v89 = vld [vmem:[%s3 + $0xc8] sm:$0xff]
    %v90 = vld [vmem:[%s3 + $0xd0] sm:$0xff]
    %v91 = vld [vmem:[%s3 + $0xd8] sm:$0xff]
    %v92 = vld [vmem:[%s3 + $0xe0] sm:$0xff]
    %v93 = vld [vmem:[%s3 + $0xe8] sm:$0xff]
    %v94 = vld [vmem:[%s3 + $0xf0] sm:$0xff]
    %v95 = vld [vmem:[%s3 + $0xf8] sm:$0xff]
    %v96 = vld [vmem:[%s3 + $0x100] sm:$0xff]
    %v97 = vld [vmem:[%s3 + $0x108] sm:$0xff]
    %v98 = vld [vmem:[%s3 + $0x110] sm:$0xff]
    %v99 = vld [vmem:[%s3 + $0x118] sm:$0xff]
    %v100 = vld [vmem:[%s3 + $0x120] sm:$0xff]
    %v101 = vld [vmem:[%s3 + $0x128] sm:$0xff]
    %v102 = vld [vmem:[%s3 + $0x130] sm:$0xff]
    %v103 = vld [vmem:[%s3 + $0x138] sm:$0xff]
    %v104 = vld [vmem:[%s3 + $0x140] sm:$0xff]
    %v105 = vld [vmem:[%s3 + $0x148] sm:$0xff]
    %v106 = vld [vmem:[%s3 + $0x150] sm:$0xff]
    %v107 = vld [vmem:[%s3 + $0x158] sm:$0xff]
    %v108 = vld [vmem:[%s3 + $0x160] sm:$0xff]
    %v109 = vld [vmem:[%s3 + $0x168] sm:$0xff]
    %v110 = vld [vmem:[%s3 + $0x170] sm:$0xff]
    %v111 = vld [vmem:[%s3 + $0x178] sm:$0xff]
    %v112 = vld [vmem:[%s3 + $0x180] sm:$0xff]
    %v113 = vld [vmem:[%s3 + $0x188] sm:$0xff]
    %v114 = vld [vmem:[%s3 + $0x190] sm:$0xff]
    %v115 = vld [vmem:[%s3 + $0x198] sm:$0xff]
    %v116 = vld [vmem:[%s3 + $0x1a0] sm:$0xff]
    %v117 = vld [vmem:[%s3 + $0x1a8] sm:$0xff]
    %v118 = vld [vmem:[%s3 + $0x1b0] sm:$0xff]
    %v119 = vld [vmem:[%s3 + $0x1b8] sm:$0xff]
    %v120 = vld [vmem:[%s3 + $0x1c0] sm:$0xff]
    %v121 = vld [vmem:[%s3 + $0x1c8] sm:$0xff]
    %v122 = vld [vmem:[%s3 + $0x1d0] sm:$0xff]
    %v123 = vld [vmem:[%s3 + $0x1d8] sm:$0xff]
    %v124 = vld [vmem:[%s3 + $0x1e0] sm:$0xff]
    %v125 = vld [vmem:[%s3 + $0x1e8] sm:$0xff]
    %v126 = vld [vmem:[%s3 + $0x1f0] sm:$0xff]
    %v127 = vld [vmem:[%s3 + $0x1f8] sm:$0xff]
    %v128 = vld [vmem:[%s3 + $0x200] sm:$0xff]
    %v129 = vld [vmem:[%s3 + $0x208] sm:$0xff]
    %v130 = vld [vmem:[%s3 + $0x210] sm:$0xff]
    %v131 = vld [vmem:[%s3 + $0x218] sm:$0xff]
    %v132 = vld [vmem:[%s3 + $0x220] sm:$0xff]
    %v133 = vld [vmem:[%s3 + $0x228] sm:$0xff]
    %v134 = vld [vmem:[%s3 + $0x230] sm:$0xff]
    %v135 = vld [vmem:[%s3 + $0x238] sm:$0xff]
    %v136 = vld [vmem:[%s3 + $0x240] sm:$0xff]
    %v137 = vld [vmem:[%s3 + $0x248] sm:$0xff]
    %v138 = vld [vmem:[%s3 + $0x250] sm:$0xff]
    %v139 = vld [vmem:[%s3 + $0x258] sm:$0xff]
    %v140 = vld [vmem:[%s3 + $0x260] sm:$0xff]
    %v141 = vld [vmem:[%s3 + $0x268] sm:$0xff]
    %v142 = vld [vmem:[%s3 + $0x270] sm:$0xff]
    %v143 = vld [vmem:[%s3 + $0x278] sm:$0xff]
    %v144 = vld [vmem:[%s3 + $0x280] sm:$0xff]
    %v145 = vld [vmem:[%s3 + $0x288] sm:$0xff]
    %v146 = vld [vmem:[%s3 + $0x290] sm:$0xff]
    %v147 = vld [vmem:[%s3 + $0x298] sm:$0xff]
    %v148 = vld [vmem:[%s3 + $0x2a0] sm:$0xff]
    %v149 = vld [vmem:[%s3 + $0x2a8] sm:$0xff]
    %v150 = vld [vmem:[%s3 + $0x2b0] sm:$0xff]
    %v151 = vld [vmem:[%s3 + $0x2b8] sm:$0xff]
    %v152 = vld [vmem:[%s3 + $0x2c0] sm:$0xff]
    %v153 = vld [vmem:[%s3 + $0x2c8] sm:$0xff]
    %v154 = vld [vmem:[%s3 + $0x2d0] sm:$0xff]
    %v155 = vld [vmem:[%s3 + $0x2d8] sm:$0xff]
    %v156 = vld [vmem:[%s3 + $0x2e0] sm:$0xff]
    %v157 = vld [vmem:[%s3 + $0x2e8] sm:$0xff]
    %v158 = vld [vmem:[%s3 + $0x2f0] sm:$0xff]
    %v159 = vld [vmem:[%s3 + $0x2f8] sm:$0xff]
    %v160 = vld [vmem:[%s3 + $0x300] sm:$0xff]
    %v161 = vld [vmem:[%s3 + $0x308] sm:$0xff]
    %v162 = vld [vmem:[%s3 + $0x310] sm:$0xff]
    %v163 = vld [vmem:[%s3 + $0x318] sm:$0xff]
    %v164 = vld [vmem:[%s3 + $0x320] sm:$0xff]
    %v165 = vld [vmem:[%s3 + $0x328] sm:$0xff]
    %v166 = vld [vmem:[%s3 + $0x330] sm:$0xff]
    %v167 = vld [vmem:[%s3 + $0x338] sm:$0xff]
    %v168 = vld [vmem:[%s3 + $0x340] sm:$0xff]
    %v169 = vld [vmem:[%s3 + $0x348] sm:$0xff]
    %v170 = vld [vmem:[%s3 + $0x350] sm:$0xff]
    %v171 = vld [vmem:[%s3 + $0x358] sm:$0xff]
    %v172 = vld [vmem:[%s3 + $0x360] sm:$0xff]
    %v173 = vld [vmem:[%s3 + $0x368] sm:$0xff]
    %v174 = vld [vmem:[%s3 + $0x370] sm:$0xff]
    %v175 = vld [vmem:[%s3 + $0x378] sm:$0xff]
    %v176 = vld [vmem:[%s3 + $0x380] sm:$0xff]
    %v177 = vld [vmem:[%s3 + $0x388] sm:$0xff]
    %v178 = vld [vmem:[%s3 + $0x390] sm:$0xff]
    %v179 = vld [vmem:[%s3 + $0x398] sm:$0xff]
    %v180 = vld [vmem:[%s3 + $0x3a0] sm:$0xff]
    %v181 = vld [vmem:[%s3 + $0x3a8] sm:$0xff]
    %v182 = vld [vmem:[%s3 + $0x3b0] sm:$0xff]
    %v183 = vld [vmem:[%s3 + $0x3b8] sm:$0xff]
    %v184 = vld [vmem:[%s3 + $0x3c0] sm:$0xff]
    %v185 = vld [vmem:[%s3 + $0x3c8] sm:$0xff]
    %v186 = vld [vmem:[%s3 + $0x3d0] sm:$0xff]
    %v187 = vld [vmem:[%s3 + $0x3d8] sm:$0xff]
    %v188 = vld [vmem:[%s3 + $0x3e0] sm:$0xff]
    %v189 = vld [vmem:[%s3 + $0x3e8] sm:$0xff]
    %v190 = vld [vmem:[%s3 + $0x3f0] sm:$0xff]
    %v191 = vld [vmem:[%s3 + $0x3f8] sm:$0xff]
    %v192 = vld [vmem:[%s3 + $0x400] sm:$0xff]
    %v193 = vld [vmem:[%s3 + $0x408] sm:$0xff]
    %v194 = vld [vmem:[%s3 + $0x410] sm:$0xff]
    %v195 = vld [vmem:[%s3 + $0x418] sm:$0xff]
    %v196 = vld [vmem:[%s3 + $0x420] sm:$0xff]
    %v197 = vld [vmem:[%s3 + $0x428] sm:$0xff]
    %v198 = vld [vmem:[%s3 + $0x430] sm:$0xff]
    %v199 = vld [vmem:[%s3 + $0x438] sm:$0xff]
    %v200 = vld [vmem:[%s3 + $0x440] sm:$0xff]
    %v201 = vld [vmem:[%s3 + $0x448] sm:$0xff]
    %v202 = vld [vmem:[%s3 + $0x450] sm:$0xff]
    %v203 = vld [vmem:[%s3 + $0x458] sm:$0xff]
    %v204 = vld [vmem:[%s3 + $0x460] sm:$0xff]
    %v205 = vld [vmem:[%s3 + $0x468] sm:$0xff]
    %v206 = vld [vmem:[%s3 + $0x470] sm:$0xff]
    %v207 = vld [vmem:[%s3 + $0x478] sm:$0xff]
    %v208 = vld [vmem:[%s3 + $0x480] sm:$0xff]
    %v209 = vld [vmem:[%s3 + $0x488] sm:$0xff]
    %v210 = vld [vmem:[%s3 + $0x490] sm:$0xff]
    %v211 = vld [vmem:[%s3 + $0x498] sm:$0xff]
    %v212 = vld [vmem:[%s3 + $0x4a0] sm:$0xff]
    %v213 = vld [vmem:[%s3 + $0x4a8] sm:$0xff]
    %v214 = vld [vmem:[%s3 + $0x4b0] sm:$0xff]
    %v215 = vld [vmem:[%s3 + $0x4b8] sm:$0xff]
    %v216 = vld [vmem:[%s3 + $0x4c0] sm:$0xff]
    %v217 = vld [vmem:[%s3 + $0x4c8] sm:$0xff]
    %v218 = vld [vmem:[%s3 + $0x4d0] sm:$0xff]
    %v219 = vld [vmem:[%s3 + $0x4d8] sm:$0xff]
    %v220 = vld [vmem:[%s3 + $0x4e0] sm:$0xff]
    %v221 = vld [vmem:[%s3 + $0x4e8] sm:$0xff]
    %v222 = vld [vmem:[%s3 + $0x4f0] sm:$0xff]
    %v223 = vld [vmem:[%s3 + $0x4f8] sm:$0xff]
    %v224 = vld [vmem:[%s3 + $0x500] sm:$0xff]
    %v225 = vld [vmem:[%s3 + $0x508] sm:$0xff]
    %v226 = vld [vmem:[%s3 + $0x510] sm:$0xff]
    %v227 = vld [vmem:[%s3 + $0x518] sm:$0xff]
    %v228 = vld [vmem:[%s3 + $0x520] sm:$0xff]
    %v229 = vld [vmem:[%s3 + $0x528] sm:$0xff]
    %v230 = vld [vmem:[%s3 + $0x530] sm:$0xff]
    %v231 = vld [vmem:[%s3 + $0x538] sm:$0xff]
    %v232 = vld [vmem:[%s3 + $0x540] sm:$0xff]
    %v233 = vld [vmem:[%s3 + $0x548] sm:$0xff]
    %v234 = vld [vmem:[%s3 + $0x550] sm:$0xff]
    %v235 = vld [vmem:[%s3 + $0x558] sm:$0xff]
    %v236 = vld [vmem:[%s3 + $0x560] sm:$0xff]
    %v237 = vld [vmem:[%s3 + $0x568] sm:$0xff]
    %v238 = vld [vmem:[%s3 + $0x570] sm:$0xff]
    %v239 = vld [vmem:[%s3 + $0x578] sm:$0xff]
    %v240 = vld [vmem:[%s3 + $0x580] sm:$0xff]
    %v241 = vld [vmem:[%s3 + $0x588] sm:$0xff]
    %v242 = vld [vmem:[%s3 + $0x590] sm:$0xff]
    %v243 = vld [vmem:[%s3 + $0x598] sm:$0xff]
    %v244 = vld [vmem:[%s3 + $0x5a0] sm:$0xff]
    %v245 = vld [vmem:[%s3 + $0x5a8] sm:$0xff]
    %v246 = vld [vmem:[%s3 + $0x5b0] sm:$0xff]
    %v247 = vld [vmem:[%s3 + $0x5b8] sm:$0xff]
    %v248 = vld [vmem:[%s3 + $0x5c0] sm:$0xff]
    %v249 = vld [vmem:[%s3 + $0x5c8] sm:$0xff]
    %v250 = vld [vmem:[%s3 + $0x5d0] sm:$0xff]
    %v251 = vld [vmem:[%s3 + $0x5d8] sm:$0xff]
    %v252 = vld [vmem:[%s3 + $0x5e0] sm:$0xff]
    %v253 = vld [vmem:[%s3 + $0x5e8] sm:$0xff]
    %v254 = vld [vmem:[%s3 + $0x5f0] sm:$0xff]
    %v255 = vld [vmem:[%s3 + $0x5f8] sm:$0xff]
    %v256 = vld [vmem:[%s3 + $0x600] sm:$0xff]
    %v257 = vld [vmem:[%s3 + $0x608] sm:$0xff]
    %v258 = vld [vmem:[%s3 + $0x610] sm:$0xff]
    %v259 = vld [vmem:[%s3 + $0x618] sm:$0xff]
    %v260 = vld [vmem:[%s3 + $0x620] sm:$0xff]
    %v261 = vld [vmem:[%s3 + $0x628] sm:$0xff]
    %v262 = vld [vmem:[%s3 + $0x630] sm:$0xff]
    %v263 = vld [vmem:[%s3 + $0x638] sm:$0xff]
    %v264 = vld [vmem:[%s3 + $0x640] sm:$0xff]
    %v265 = vld [vmem:[%s3 + $0x648] sm:$0xff]
    %v266 = vld [vmem:[%s3 + $0x650] sm:$0xff]
    %v267 = vld [vmem:[%s3 + $0x658] sm:$0xff]
    %v268 = vld [vmem:[%s3 + $0x660] sm:$0xff]
    %v269 = vld [vmem:[%s3 + $0x668] sm:$0xff]
    %v270 = vld [vmem:[%s3 + $0x670] sm:$0xff]
    %v271 = vld [vmem:[%s3 + $0x678] sm:$0xff]
    %v272 = vld [vmem:[%s3 + $0x680] sm:$0xff]
    %v273 = vld [vmem:[%s3 + $0x688] sm:$0xff]
    %v274 = vld [vmem:[%s3 + $0x690] sm:$0xff]
    %v275 = vld [vmem:[%s3 + $0x698] sm:$0xff]
    %v276 = vld [vmem:[%s3 + $0x6a0] sm:$0xff]
    %v277 = vld [vmem:[%s3 + $0x6a8] sm:$0xff]
    %v278 = vld [vmem:[%s3 + $0x6b0] sm:$0xff]
    %v279 = vld [vmem:[%s3 + $0x6b8] sm:$0xff]
    %v280 = vld [vmem:[%s3 + $0x6c0] sm:$0xff]
    %v281 = vld [vmem:[%s3 + $0x6c8] sm:$0xff]
    %v282 = vld [vmem:[%s3 + $0x6d0] sm:$0xff]
    %v283 = vld [vmem:[%s3 + $0x6d8] sm:$0xff]
    %v284 = vld [vmem:[%s3 + $0x6e0] sm:$0xff]
    %v285 = vld [vmem:[%s3 + $0x6e8] sm:$0xff]
    %v286 = vld [vmem:[%s3 + $0x6f0] sm:$0xff]
    %v287 = vld [vmem:[%s3 + $0x6f8] sm:$0xff]
    %v288 = vld [vmem:[%s3 + $0x700] sm:$0xff]
    %v289 = vld [vmem:[%s3 + $0x708] sm:$0xff]
    %v290 = vld [vmem:[%s3 + $0x710] sm:$0xff]
    %v291 = vld [vmem:[%s3 + $0x718] sm:$0xff]
    %v292 = vld [vmem:[%s3 + $0x720] sm:$0xff]
    %v293 = vld [vmem:[%s3 + $0x728] sm:$0xff]
    %v294 = vld [vmem:[%s3 + $0x730] sm:$0xff]
    %v295 = vld [vmem:[%s3 + $0x738] sm:$0xff]
    %v296 = vld [vmem:[%s3 + $0x740] sm:$0xff]
    %v297 = vld [vmem:[%s3 + $0x748] sm:$0xff]
    %v298 = vld [vmem:[%s3 + $0x750] sm:$0xff]
    %v299 = vld [vmem:[%s3 + $0x758] sm:$0xff]
    %v300 = vld [vmem:[%s3 + $0x760] sm:$0xff]
    %v301 = vld [vmem:[%s3 + $0x768] sm:$0xff]
    %v302 = vld [vmem:[%s3 + $0x770] sm:$0xff]
    %v303 = vld [vmem:[%s3 + $0x778] sm:$0xff]
    %v304 = vld [vmem:[%s3 + $0x780] sm:$0xff]
    %v305 = vld [vmem:[%s3 + $0x788] sm:$0xff]
    %v306 = vld [vmem:[%s3 + $0x790] sm:$0xff]
    %v307 = vld [vmem:[%s3 + $0x798] sm:$0xff]
    %v308 = vld [vmem:[%s3 + $0x7a0] sm:$0xff]
    %v309 = vld [vmem:[%s3 + $0x7a8] sm:$0xff]
    %v310 = vld [vmem:[%s3 + $0x7b0] sm:$0xff]
    %v311 = vld [vmem:[%s3 + $0x7b8] sm:$0xff]
    %v312 = vld [vmem:[%s3 + $0x7c0] sm:$0xff]
    %v313 = vld [vmem:[%s3 + $0x7c8] sm:$0xff]
    %v314 = vld [vmem:[%s3 + $0x7d0] sm:$0xff]
    %v315 = vld [vmem:[%s3 + $0x7d8] sm:$0xff]
    %v316 = vld [vmem:[%s3 + $0x7e0] sm:$0xff]
    %v317 = vld [vmem:[%s3 + $0x7e8] sm:$0xff]
    %v318 = vld [vmem:[%s3 + $0x7f0] sm:$0xff]
    %v319 = vld [vmem:[%s3 + $0x7f8] sm:$0xff]
    %v320 = vld [vmem:[%s3 + $0x800] sm:$0xff]
    %v321 = vld [vmem:[%s3 + $0x808] sm:$0xff]
    %v322 = vld [vmem:[%s3 + $0x810] sm:$0xff]
    %v323 = vld [vmem:[%s3 + $0x818] sm:$0xff]
    %v324 = vld [vmem:[%s3 + $0x820] sm:$0xff]
    %v325 = vld [vmem:[%s3 + $0x828] sm:$0xff]
    %v326 = vld [vmem:[%s3 + $0x830] sm:$0xff]
    %v327 = vld [vmem:[%s3 + $0x838] sm:$0xff]
    %v328 = vld [vmem:[%s3 + $0x840] sm:$0xff]
    %v329 = vld [vmem:[%s3 + $0x848] sm:$0xff]
    %v330 = vld [vmem:[%s3 + $0x850] sm:$0xff]
    %v331 = vld [vmem:[%s3 + $0x858] sm:$0xff]
    %v332 = vld [vmem:[%s3 + $0x860] sm:$0xff]
    %v333 = vld [vmem:[%s3 + $0x868] sm:$0xff]
    %v334 = vld [vmem:[%s3 + $0x870] sm:$0xff]
    %v335 = vld [vmem:[%s3 + $0x878] sm:$0xff]
    %v336 = vld [vmem:[%s3 + $0x880] sm:$0xff]
    %v337 = vld [vmem:[%s3 + $0x888] sm:$0xff]
    %v338 = vld [vmem:[%s3 + $0x890] sm:$0xff]
    %v339 = vld [vmem:[%s3 + $0x898] sm:$0xff]
    %v340 = vld [vmem:[%s3 + $0x8a0] sm:$0xff]
    %v341 = vld [vmem:[%s3 + $0x8a8] sm:$0xff]
    %v342 = vld [vmem:[%s3 + $0x8b0] sm:$0xff]
    %v343 = vld [vmem:[%s3 + $0x8b8] sm:$0xff]
    %v344 = vld [vmem:[%s3 + $0x8c0] sm:$0xff]
    %v345 = vld [vmem:[%s3 + $0x8c8] sm:$0xff]
    %v346 = vld [vmem:[%s3 + $0x8d0] sm:$0xff]
    %v347 = vld [vmem:[%s3 + $0x8d8] sm:$0xff]
    %v348 = vld [vmem:[%s3 + $0x8e0] sm:$0xff]
    %v349 = vld [vmem:[%s3 + $0x8e8] sm:$0xff]
    %v350 = vld [vmem:[%s3 + $0x8f0] sm:$0xff]
    %v351 = vld [vmem:[%s3 + $0x8f8] sm:$0xff]
    %v352 = vld [vmem:[%s3 + $0x900] sm:$0xff]
    %v353 = vld [vmem:[%s3 + $0x908] sm:$0xff]
    %v354 = vld [vmem:[%s3 + $0x910] sm:$0xff]
    %v355 = vld [vmem:[%s3 + $0x918] sm:$0xff]
    %v356 = vld [vmem:[%s3 + $0x920] sm:$0xff]
    %v357 = vld [vmem:[%s3 + $0x928] sm:$0xff]
    %v358 = vld [vmem:[%s3 + $0x930] sm:$0xff]
    %v359 = vld [vmem:[%s3 + $0x938] sm:$0xff]
    %v360 = vld [vmem:[%s3 + $0x940] sm:$0xff]
    %v361 = vld [vmem:[%s3 + $0x948] sm:$0xff]
    %v362 = vld [vmem:[%s3 + $0x950] sm:$0xff]
    %v363 = vld [vmem:[%s3 + $0x958] sm:$0xff]
    %v364 = vld [vmem:[%s3 + $0x960] sm:$0xff]
    %v365 = vld [vmem:[%s3 + $0x968] sm:$0xff]
    %v366 = vld [vmem:[%s3 + $0x970] sm:$0xff]
    %v367 = vld [vmem:[%s3 + $0x978] sm:$0xff]
    %v368 = vld [vmem:[%s3 + $0x980] sm:$0xff]
    %v369 = vld [vmem:[%s3 + $0x988] sm:$0xff]
    %v370 = vld [vmem:[%s3 + $0x990] sm:$0xff]
    %v371 = vld [vmem:[%s3 + $0x998] sm:$0xff]
    %v372 = vld [vmem:[%s3 + $0x9a0] sm:$0xff]
    %v373 = vld [vmem:[%s3 + $0x9a8] sm:$0xff]
    %v374 = vld [vmem:[%s3 + $0x9b0] sm:$0xff]
    %v375 = vld [vmem:[%s3 + $0x9b8] sm:$0xff]
    %v376 = vld [vmem:[%s3 + $0x9c0] sm:$0xff]
    %v377 = vld [vmem:[%s3 + $0x9c8] sm:$0xff]
    %v378 = vld [vmem:[%s3 + $0x9d0] sm:$0xff]
    %v379 = vld [vmem:[%s3 + $0x9d8] sm:$0xff]
    %v380 = vld [vmem:[%s3 + $0x9e0] sm:$0xff]
    %v381 = vld [vmem:[%s3 + $0x9e8] sm:$0xff]
    %v382 = vld [vmem:[%s3 + $0x9f0] sm:$0xff]
    %v383 = vld [vmem:[%s3 + $0x9f8] sm:$0xff]
    %v384 = vld [vmem:[%s3 + $0xa00] sm:$0xff]
    %v385 = vld [vmem:[%s3 + $0xa08] sm:$0xff]
    %v386 = vld [vmem:[%s3 + $0xa10] sm:$0xff]
    %v387 = vld [vmem:[%s3 + $0xa18] sm:$0xff]
    %v388 = vld [vmem:[%s3 + $0xa20] sm:$0xff]
    %v389 = vld [vmem:[%s3 + $0xa28] sm:$0xff]
    %v390 = vld [vmem:[%s3 + $0xa30] sm:$0xff]
    %v391 = vld [vmem:[%s3 + $0xa38] sm:$0xff]
    %v392 = vld [vmem:[%s3 + $0xa40] sm:$0xff]
    %v393 = vld [vmem:[%s3 + $0xa48] sm:$0xff]
    %v394 = vld [vmem:[%s3 + $0xa50] sm:$0xff]
    %v395 = vld [vmem:[%s3 + $0xa58] sm:$0xff]
    %v396 = vld [vmem:[%s3 + $0xa60] sm:$0xff]
    %v397 = vld [vmem:[%s3 + $0xa68] sm:$0xff]
    %v398 = vld [vmem:[%s3 + $0xa70] sm:$0xff]
    %v399 = vld [vmem:[%s3 + $0xa78] sm:$0xff]
    %v400 = vld [vmem:[%s3 + $0xa80] sm:$0xff]
    %v401 = vld [vmem:[%s3 + $0xa88] sm:$0xff]
    %v402 = vld [vmem:[%s3 + $0xa90] sm:$0xff]
    %v403 = vld [vmem:[%s3 + $0xa98] sm:$0xff]
    %v404 = vld [vmem:[%s3 + $0xaa0] sm:$0xff]
    %v405 = vld [vmem:[%s3 + $0xaa8] sm:$0xff]
    %v406 = vld [vmem:[%s3 + $0xab0] sm:$0xff]
    %v407 = vld [vmem:[%s3 + $0xab8] sm:$0xff]
    %v408 = vld [vmem:[%s3 + $0xac0] sm:$0xff]
    %v409 = vld [vmem:[%s3 + $0xac8] sm:$0xff]
    %v410 = vld [vmem:[%s3 + $0xad0] sm:$0xff]
    %v411 = vld [vmem:[%s3 + $0xad8] sm:$0xff]
    %v412 = vld [vmem:[%s3 + $0xae0] sm:$0xff]
    %v413 = vld [vmem:[%s3 + $0xae8] sm:$0xff]
    %v414 = vld [vmem:[%s3 + $0xaf0] sm:$0xff]
    %v415 = vld [vmem:[%s3 + $0xaf8] sm:$0xff]
    %v416 = vld [vmem:[%s3 + $0xb00] sm:$0xff]
    %v417 = vld [vmem:[%s3 + $0xb08] sm:$0xff]
    %v418 = vld [vmem:[%s3 + $0xb10] sm:$0xff]
    %v419 = vld [vmem:[%s3 + $0xb18] sm:$0xff]
    %v420 = vld [vmem:[%s3 + $0xb20] sm:$0xff]
    %v421 = vld [vmem:[%s3 + $0xb28] sm:$0xff]
    %v422 = vld [vmem:[%s3 + $0xb30] sm:$0xff]
    %v423 = vld [vmem:[%s3 + $0xb38] sm:$0xff]
    %v424 = vld [vmem:[%s3 + $0xb40] sm:$0xff]
    %v425 = vld [vmem:[%s3 + $0xb48] sm:$0xff]
    %v426 = vld [vmem:[%s3 + $0xb50] sm:$0xff]
    %v427 = vld [vmem:[%s3 + $0xb58] sm:$0xff]
    %v428 = vld [vmem:[%s3 + $0xb60] sm:$0xff]
    %v429 = vld [vmem:[%s3 + $0xb68] sm:$0xff]
    %v430 = vld [vmem:[%s3 + $0xb70] sm:$0xff]
    %v431 = vld [vmem:[%s3 + $0xb78] sm:$0xff]
    %v432 = vld [vmem:[%s3 + $0xb80] sm:$0xff]
    %v433 = vld [vmem:[%s3 + $0xb88] sm:$0xff]
    %v434 = vld [vmem:[%s3 + $0xb90] sm:$0xff]
    %v435 = vld [vmem:[%s3 + $0xb98] sm:$0xff]
    %v436 = vld [vmem:[%s3 + $0xba0] sm:$0xff]
    %v437 = vld [vmem:[%s3 + $0xba8] sm:$0xff]
    %v438 = vld [vmem:[%s3 + $0xbb0] sm:$0xff]
    %v439 = vld [vmem:[%s3 + $0xbb8] sm:$0xff]
    %v440 = vld [vmem:[%s3 + $0xbc0] sm:$0xff]
    %v441 = vld [vmem:[%s3 + $0xbc8] sm:$0xff]
    %v442 = vld [vmem:[%s3 + $0xbd0] sm:$0xff]
    %v443 = vld [vmem:[%s3 + $0xbd8] sm:$0xff]
    %v444 = vld [vmem:[%s3 + $0xbe0] sm:$0xff]
    %v445 = vld [vmem:[%s3 + $0xbe8] sm:$0xff]
    %v446 = vld [vmem:[%s3 + $0xbf0] sm:$0xff]
    %v447 = vld [vmem:[%s3 + $0xbf8] sm:$0xff]
    %v448 = vld [vmem:[%s3 + $0xc00] sm:$0xff]
    %v449 = vld [vmem:[%s3 + $0xc08] sm:$0xff]
    %v450 = vld [vmem:[%s3 + $0xc10] sm:$0xff]
    %v451 = vld [vmem:[%s3 + $0xc18] sm:$0xff]
    %v452 = vld [vmem:[%s3 + $0xc20] sm:$0xff]
    %v453 = vld [vmem:[%s3 + $0xc28] sm:$0xff]
    %v454 = vld [vmem:[%s3 + $0xc30] sm:$0xff]
    %v455 = vld [vmem:[%s3 + $0xc38] sm:$0xff]
    %v456 = vld [vmem:[%s3 + $0xc40] sm:$0xff]
    %v457 = vld [vmem:[%s3 + $0xc48] sm:$0xff]
    %v458 = vld [vmem:[%s3 + $0xc50] sm:$0xff]
    %v459 = vld [vmem:[%s3 + $0xc58] sm:$0xff]
    %v460 = vld [vmem:[%s3 + $0xc60] sm:$0xff]
    %v461 = vld [vmem:[%s3 + $0xc68] sm:$0xff]
    %v462 = vld [vmem:[%s3 + $0xc70] sm:$0xff]
    %v463 = vld [vmem:[%s3 + $0xc78] sm:$0xff]
    %v464 = vld [vmem:[%s3 + $0xc80] sm:$0xff]
    %v465 = vld [vmem:[%s3 + $0xc88] sm:$0xff]
    %v466 = vld [vmem:[%s3 + $0xc90] sm:$0xff]
    %v467 = vld [vmem:[%s3 + $0xc98] sm:$0xff]
    %v468 = vld [vmem:[%s3 + $0xca0] sm:$0xff]
    %v469 = vld [vmem:[%s3 + $0xca8] sm:$0xff]
    %v470 = vld [vmem:[%s3 + $0xcb0] sm:$0xff]
    %v471 = vld [vmem:[%s3 + $0xcb8] sm:$0xff]
    %v472 = vld [vmem:[%s3 + $0xcc0] sm:$0xff]
    %v473 = vld [vmem:[%s3 + $0xcc8] sm:$0xff]
    %v474 = vld [vmem:[%s3 + $0xcd0] sm:$0xff]
    %v475 = vld [vmem:[%s3 + $0xcd8] sm:$0xff]
    %v476 = vld [vmem:[%s3 + $0xce0] sm:$0xff]
    %v477 = vld [vmem:[%s3 + $0xce8] sm:$0xff]
    %v478 = vld [vmem:[%s3 + $0xcf0] sm:$0xff]
    %v479 = vld [vmem:[%s3 + $0xcf8] sm:$0xff]
    %v480 = vld [vmem:[%s3 + $0xd00] sm:$0xff]
    %v481 = vld [vmem:[%s3 + $0xd08] sm:$0xff]
    %v482 = vld [vmem:[%s3 + $0xd10] sm:$0xff]
    %v483 = vld [vmem:[%s3 + $0xd18] sm:$0xff]
    %v484 = vld [vmem:[%s3 + $0xd20] sm:$0xff]
    %v485 = vld [vmem:[%s3 + $0xd28] sm:$0xff]
    %v486 = vld [vmem:[%s3 + $0xd30] sm:$0xff]
    %v487 = vld [vmem:[%s3 + $0xd38] sm:$0xff]
    %v488 = vld [vmem:[%s3 + $0xd40] sm:$0xff]
    %v489 = vld [vmem:[%s3 + $0xd48] sm:$0xff]
    %v490 = vld [vmem:[%s3 + $0xd50] sm:$0xff]
    %v491 = vld [vmem:[%s3 + $0xd58] sm:$0xff]
    %v492 = vld [vmem:[%s3 + $0xd60] sm:$0xff]
    %v493 = vld [vmem:[%s3 + $0xd68] sm:$0xff]
    %v494 = vld [vmem:[%s3 + $0xd70] sm:$0xff]
    %v495 = vld [vmem:[%s3 + $0xd78] sm:$0xff]
    %v496 = vld [vmem:[%s3 + $0xd80] sm:$0xff]
    %v497 = vld [vmem:[%s3 + $0xd88] sm:$0xff]
    %v498 = vld [vmem:[%s3 + $0xd90] sm:$0xff]
    %v499 = vld [vmem:[%s3 + $0xd98] sm:$0xff]
    %v500 = vld [vmem:[%s3 + $0xda0] sm:$0xff]
    %v501 = vld [vmem:[%s3 + $0xda8] sm:$0xff]
    %v502 = vld [vmem:[%s3 + $0xdb0] sm:$0xff]
    %v503 = vld [vmem:[%s3 + $0xdb8] sm:$0xff]
    %v504 = vld [vmem:[%s3 + $0xdc0] sm:$0xff]
    %v505 = vld [vmem:[%s3 + $0xdc8] sm:$0xff]
    %v506 = vld [vmem:[%s3 + $0xdd0] sm:$0xff]
    %v507 = vld [vmem:[%s3 + $0xdd8] sm:$0xff]
    %v508 = vld [vmem:[%s3 + $0xde0] sm:$0xff]
    %v509 = vld [vmem:[%s3 + $0xde8] sm:$0xff]
    %v510 = vld [vmem:[%s3 + $0xdf0] sm:$0xff]
    %v511 = vld [vmem:[%s3 + $0xdf8] sm:$0xff]
    %v512 = vld [vmem:[%s3 + $0xe00] sm:$0xff]
    %v513 = vld [vmem:[%s3 + $0xe08] sm:$0xff]
    %v514 = vld [vmem:[%s3 + $0xe10] sm:$0xff]
    %v515 = vld [vmem:[%s3 + $0xe18] sm:$0xff]
    %v516 = vld [vmem:[%s3 + $0xe20] sm:$0xff]
    %v517 = vld [vmem:[%s3 + $0xe28] sm:$0xff]
    %v518 = vld [vmem:[%s3 + $0xe30] sm:$0xff]
    %v519 = vld [vmem:[%s3 + $0xe38] sm:$0xff]
    %v520 = vld [vmem:[%s3 + $0xe40] sm:$0xff]
    %v521 = vld [vmem:[%s3 + $0xe48] sm:$0xff]
    %v522 = vld [vmem:[%s3 + $0xe50] sm:$0xff]
    %v523 = vld [vmem:[%s3 + $0xe58] sm:$0xff]
    %v524 = vld [vmem:[%s3 + $0xe60] sm:$0xff]
    %v525 = vld [vmem:[%s3 + $0xe68] sm:$0xff]
    %v526 = vld [vmem:[%s3 + $0xe70] sm:$0xff]
    %v527 = vld [vmem:[%s3 + $0xe78] sm:$0xff]
    %v528 = vld [vmem:[%s3 + $0xe80] sm:$0xff]
    %v529 = vld [vmem:[%s3 + $0xe88] sm:$0xff]
    %v530 = vld [vmem:[%s3 + $0xe90] sm:$0xff]
    %v531 = vld [vmem:[%s3 + $0xe98] sm:$0xff]
    %v532 = vld [vmem:[%s3 + $0xea0] sm:$0xff]
    %v533 = vld [vmem:[%s3 + $0xea8] sm:$0xff]
    %v534 = vld [vmem:[%s3 + $0xeb0] sm:$0xff]
    %v535 = vld [vmem:[%s3 + $0xeb8] sm:$0xff]
    %v536 = vld [vmem:[%s3 + $0xec0] sm:$0xff]
    %v537 = vld [vmem:[%s3 + $0xec8] sm:$0xff]
    %v538 = vld [vmem:[%s3 + $0xed0] sm:$0xff]
    %v539 = vld [vmem:[%s3 + $0xed8] sm:$0xff]
    %v540 = vld [vmem:[%s3 + $0xee0] sm:$0xff]
    %v541 = vld [vmem:[%s3 + $0xee8] sm:$0xff]
    %v542 = vld [vmem:[%s3 + $0xef0] sm:$0xff]
    %v543 = vld [vmem:[%s3 + $0xef8] sm:$0xff]
    %v544 = vld [vmem:[%s3 + $0xf00] sm:$0xff]
    %v545 = vld [vmem:[%s3 + $0xf08] sm:$0xff]
    %v546 = vld [vmem:[%s3 + $0xf10] sm:$0xff]
    %v547 = vld [vmem:[%s3 + $0xf18] sm:$0xff]
    %v548 = vld [vmem:[%s3 + $0xf20] sm:$0xff]
    %v549 = vld [vmem:[%s3 + $0xf28] sm:$0xff]
    %v550 = vld [vmem:[%s3 + $0xf30] sm:$0xff]
    %v551 = vld [vmem:[%s3 + $0xf38] sm:$0xff]
    %v552 = vld [vmem:[%s3 + $0xf40] sm:$0xff]
    %v553 = vld [vmem:[%s3 + $0xf48] sm:$0xff]
    %v554 = vld [vmem:[%s3 + $0xf50] sm:$0xff]
    %v555 = vld [vmem:[%s3 + $0xf58] sm:$0xff]
    %v556 = vld [vmem:[%s3 + $0xf60] sm:$0xff]
    %v557 = vld [vmem:[%s3 + $0xf68] sm:$0xff]
    %v558 = vld [vmem:[%s3 + $0xf70] sm:$0xff]
    %v559 = vld [vmem:[%s3 + $0xf78] sm:$0xff]
    %v560 = vld [vmem:[%s3 + $0xf80] sm:$0xff]
    %v561 = vld [vmem:[%s3 + $0xf88] sm:$0xff]
    %v562 = vld [vmem:[%s3 + $0xf90] sm:$0xff]
    %v563 = vld [vmem:[%s3 + $0xf98] sm:$0xff]
    %v564 = vld [vmem:[%s3 + $0xfa0] sm:$0xff]
    %v565 = vld [vmem:[%s3 + $0xfa8] sm:$0xff]
    %v566 = vld [vmem:[%s3 + $0xfb0] sm:$0xff]
    %v567 = vld [vmem:[%s3 + $0xfb8] sm:$0xff]
    %v568 = vld [vmem:[%s3 + $0xfc0] sm:$0xff]
    %v569 = vld [vmem:[%s3 + $0xfc8] sm:$0xff]
    %v570 = vld [vmem:[%s3 + $0xfd0] sm:$0xff]
    %v571 = vld [vmem:[%s3 + $0xfd8] sm:$0xff]
    %v572 = vld [vmem:[%s3 + $0xfe0] sm:$0xff]
    %v573 = vld [vmem:[%s3 + $0xfe8] sm:$0xff]
    %v574 = vld [vmem:[%s3 + $0xff0] sm:$0xff]
    %v575 = vld [vmem:[%s3 + $0xff8] sm:$0xff]
    %v576 = vld [vmem:[%s4] sm:$0xf]
    %v578 = vlaneseq
    %v579 = vshrl.u32 %v578, 7
    %v580 = vsub.s32 0, %v579
    %v581 = vrot.slane %v576, %v580
    %v582 = vlaneseq
    %v583 = vshrl.u32 %v582, 7
    %v584 = vsub.s32 1, %v583
    %v585 = vrot.slane %v576, %v584
    %v586 = vlaneseq
    %v587 = vshrl.u32 %v586, 7
    %v588 = vsub.s32 2, %v587
    %v589 = vrot.slane %v576, %v588
    %v590 = vlaneseq
    %v591 = vshrl.u32 %v590, 7
    %v592 = vsub.s32 3, %v591
    %v593 = vrot.slane %v576, %v592
    %v600 = vcombine.high %v62, %v62
    %v602 = vunpack.c.l.s4 1983009808
    %v603 = vunpack.c.0.s8 %v602
    %v604 = vlaneseq
    %v605 = vshrl.u32 %v604, 7
    %v606 = vsub.s32 %v603, %v605
    %v607 = vrot.slane %v62, %v606
    %v609 = vunpack.c.l.s4 1983009808
    %v610 = vunpack.c.0.s8 %v609
    %v611 = vlaneseq
    %v612 = vshrl.u32 %v611, 7
    %v613 = vsub.s32 %v610, %v612
    %v614 = vrot.slane %v600, %v613
    %v615 = vcombine.high %v607, %v607
    %v616 = vcombine.high %v614, %v614
    %v617 = vcombine.high %v63, %v63
    %v619 = vunpack.c.l.s4 1983009808
    %v620 = vunpack.c.0.s8 %v619
    %v621 = vlaneseq
    %v622 = vshrl.u32 %v621, 7
    %v623 = vsub.s32 %v620, %v622
    %v624 = vrot.slane %v63, %v623
    %v626 = vunpack.c.l.s4 1983009808
    %v627 = vunpack.c.0.s8 %v626
    %v628 = vlaneseq
    %v629 = vshrl.u32 %v628, 7
    %v630 = vsub.s32 %v627, %v629
    %v631 = vrot.slane %v617, %v630
    %v632 = vcombine.high %v624, %v624
    %v633 = vcombine.high %v631, %v631
    %642 = vmatprep.subr.mxu0 %v125
    %643 = vmatpush1.msra.mxu0 %v124
    %644 = vmatprep.subr.mxu0 %v121
    %645 = vmatpush1.msra.mxu0 %v120
    %646 = vmatprep.subr.mxu0 %v117
    %647 = vmatpush1.msra.mxu0 %v116
    %648 = vmatprep.subr.mxu0 %v113
    %649 = vmatpush1.msra.mxu0 %v112
    %650 = vmatprep.subr.mxu0 %v109
    %651 = vmatpush1.msra.mxu0 %v108
    %652 = vmatprep.subr.mxu0 %v105
    %653 = vmatpush1.msra.mxu0 %v104
    %654 = vmatprep.subr.mxu0 %v101
    %655 = vmatpush1.msra.mxu0 %v100
    %656 = vmatprep.subr.mxu0 %v97
    %657 = vmatpush1.msra.mxu0 %v96
    %658 = vmatprep.subr.mxu0 %v93
    %659 = vmatpush1.msra.mxu0 %v92
    %660 = vmatprep.subr.mxu0 %v89
    %661 = vmatpush1.msra.mxu0 %v88
    %662 = vmatprep.subr.mxu0 %v85
    %663 = vmatpush1.msra.mxu0 %v84
    %664 = vmatprep.subr.mxu0 %v81
    %665 = vmatpush1.msra.mxu0 %v80
    %666 = vmatprep.subr.mxu0 %v77
    %667 = vmatpush1.msra.mxu0 %v76
    %668 = vmatprep.subr.mxu0 %v73
    %669 = vmatpush1.msra.mxu0 %v72
    %670 = vmatprep.subr.mxu0 %v69
    %671 = vmatpush1.msra.mxu0 %v68
    %672 = vmatprep.subr.mxu0 %v65
    %673 = vmatpush1.msra.mxu0 %v64
    %674 = vmatprep.subr.mxu0 %v189
    %675 = vmatpush2.msra.mxu0 %v188
    %676 = vmatprep.subr.mxu0 %v185
    %677 = vmatpush2.msra.mxu0 %v184
    %678 = vmatprep.subr.mxu0 %v181
    %679 = vmatpush2.msra.mxu0 %v180
    %680 = vmatprep.subr.mxu0 %v177
    %681 = vmatpush2.msra.mxu0 %v176
    %682 = vmatprep.subr.mxu0 %v173
    %683 = vmatpush2.msra.mxu0 %v172
    %684 = vmatprep.subr.mxu0 %v169
    %685 = vmatpush2.msra.mxu0 %v168
    %686 = vmatprep.subr.mxu0 %v165
    %687 = vmatpush2.msra.mxu0 %v164
    %688 = vmatprep.subr.mxu0 %v161
    %689 = vmatpush2.msra.mxu0 %v160
    %690 = vmatprep.subr.mxu0 %v157
    %691 = vmatpush2.msra.mxu0 %v156
    %692 = vmatprep.subr.mxu0 %v153
    %693 = vmatpush2.msra.mxu0 %v152
    %694 = vmatprep.subr.mxu0 %v149
    %695 = vmatpush2.msra.mxu0 %v148
    %696 = vmatprep.subr.mxu0 %v145
    %697 = vmatpush2.msra.mxu0 %v144
    %698 = vmatprep.subr.mxu0 %v141
    %699 = vmatpush2.msra.mxu0 %v140
    %700 = vmatprep.subr.mxu0 %v137
    %701 = vmatpush2.msra.mxu0 %v136
    %702 = vmatprep.subr.mxu0 %v133
    %703 = vmatpush2.msra.mxu0 %v132
    %704 = vmatprep.subr.mxu0 %v129
    %705 = vmatpush2.msra.mxu0 %v128
    %706 = vmatprep.mubr.f32.mxu0 %v615
    %707 = vmatmul.mubr.f32.gmra.mxu0 %v607
    %v708 = vpop.f32.mrf.mxu0
    %v709 = vadd.f32 %v581, %v708
    %v710 = vpop.f32.mrf.mxu0
    %v711 = vadd.f32 %v585, %v710
    %712 = vdwg.mxu0
    %713 = vmatprep.subr.mxu0 %v253
    %714 = vmatpush1.msra.mxu0 %v252
    %715 = vmatprep.subr.mxu0 %v249
    %716 = vmatpush1.msra.mxu0 %v248
    %717 = vmatprep.subr.mxu0 %v245
    %718 = vmatpush1.msra.mxu0 %v244
    %719 = vmatprep.subr.mxu0 %v241
    %720 = vmatpush1.msra.mxu0 %v240
    %721 = vmatprep.subr.mxu0 %v237
    %722 = vmatpush1.msra.mxu0 %v236
    %723 = vmatprep.subr.mxu0 %v233
    %724 = vmatpush1.msra.mxu0 %v232
    %725 = vmatprep.subr.mxu0 %v229
    %726 = vmatpush1.msra.mxu0 %v228
    %727 = vmatprep.subr.mxu0 %v225
    %728 = vmatpush1.msra.mxu0 %v224
    %729 = vmatprep.subr.mxu0 %v221
    %730 = vmatpush1.msra.mxu0 %v220
    %731 = vmatprep.subr.mxu0 %v217
    %732 = vmatpush1.msra.mxu0 %v216
    %733 = vmatprep.subr.mxu0 %v213
    %734 = vmatpush1.msra.mxu0 %v212
    %735 = vmatprep.subr.mxu0 %v209
    %736 = vmatpush1.msra.mxu0 %v208
    %737 = vmatprep.subr.mxu0 %v205
    %738 = vmatpush1.msra.mxu0 %v204
    %739 = vmatprep.subr.mxu0 %v201
    %740 = vmatpush1.msra.mxu0 %v200
    %741 = vmatprep.subr.mxu0 %v197
    %742 = vmatpush1.msra.mxu0 %v196
    %743 = vmatprep.subr.mxu0 %v193
    %744 = vmatpush1.msra.mxu0 %v192
    %745 = vmatprep.subr.mxu0 %v317
    %746 = vmatpush2.msra.mxu0 %v316
    %747 = vmatprep.subr.mxu0 %v313
    %748 = vmatpush2.msra.mxu0 %v312
    %749 = vmatprep.subr.mxu0 %v309
    %750 = vmatpush2.msra.mxu0 %v308
    %751 = vmatprep.subr.mxu0 %v305
    %752 = vmatpush2.msra.mxu0 %v304
    %753 = vmatprep.subr.mxu0 %v301
    %754 = vmatpush2.msra.mxu0 %v300
    %755 = vmatprep.subr.mxu0 %v297
    %756 = vmatpush2.msra.mxu0 %v296
    %757 = vmatprep.subr.mxu0 %v293
    %758 = vmatpush2.msra.mxu0 %v292
    %759 = vmatprep.subr.mxu0 %v289
    %760 = vmatpush2.msra.mxu0 %v288
    %761 = vmatprep.subr.mxu0 %v285
    %762 = vmatpush2.msra.mxu0 %v284
    %763 = vmatprep.subr.mxu0 %v281
    %764 = vmatpush2.msra.mxu0 %v280
    %765 = vmatprep.subr.mxu0 %v277
    %766 = vmatpush2.msra.mxu0 %v276
    %767 = vmatprep.subr.mxu0 %v273
    %768 = vmatpush2.msra.mxu0 %v272
    %769 = vmatprep.subr.mxu0 %v269
    %770 = vmatpush2.msra.mxu0 %v268
    %771 = vmatprep.subr.mxu0 %v265
    %772 = vmatpush2.msra.mxu0 %v264
    %773 = vmatprep.subr.mxu0 %v261
    %774 = vmatpush2.msra.mxu0 %v260
    %775 = vmatprep.subr.mxu0 %v257
    %776 = vmatpush2.msra.mxu0 %v256
    %777 = vmatprep.mubr.f32.mxu0 %v616
    %778 = vmatmul.mubr.f32.gmra.mxu0 %v614
    %v779 = vpop.f32.mrf.mxu0
    %v780 = vadd.f32 %v709, %v779
    %v781 = vpop.f32.mrf.mxu0
    %v782 = vadd.f32 %v711, %v781
    %783 = vdwg.mxu0
    %784 = vmatprep.subr.mxu0 %v381
    %785 = vmatpush1.msra.mxu0 %v380
    %786 = vmatprep.subr.mxu0 %v377
    %787 = vmatpush1.msra.mxu0 %v376
    %788 = vmatprep.subr.mxu0 %v373
    %789 = vmatpush1.msra.mxu0 %v372
    %790 = vmatprep.subr.mxu0 %v369
    %791 = vmatpush1.msra.mxu0 %v368
    %792 = vmatprep.subr.mxu0 %v365
    %793 = vmatpush1.msra.mxu0 %v364
    %794 = vmatprep.subr.mxu0 %v361
    %795 = vmatpush1.msra.mxu0 %v360
    %796 = vmatprep.subr.mxu0 %v357
    %797 = vmatpush1.msra.mxu0 %v356
    %798 = vmatprep.subr.mxu0 %v353
    %799 = vmatpush1.msra.mxu0 %v352
    %800 = vmatprep.subr.mxu0 %v349
    %801 = vmatpush1.msra.mxu0 %v348
    %802 = vmatprep.subr.mxu0 %v345
    %803 = vmatpush1.msra.mxu0 %v344
    %804 = vmatprep.subr.mxu0 %v341
    %805 = vmatpush1.msra.mxu0 %v340
    %806 = vmatprep.subr.mxu0 %v337
    %807 = vmatpush1.msra.mxu0 %v336
    %808 = vmatprep.subr.mxu0 %v333
    %809 = vmatpush1.msra.mxu0 %v332
    %810 = vmatprep.subr.mxu0 %v329
    %811 = vmatpush1.msra.mxu0 %v328
    %812 = vmatprep.subr.mxu0 %v325
    %813 = vmatpush1.msra.mxu0 %v324
    %814 = vmatprep.subr.mxu0 %v321
    %815 = vmatpush1.msra.mxu0 %v320
    %816 = vmatprep.subr.mxu0 %v445
    %817 = vmatpush2.msra.mxu0 %v444
    %818 = vmatprep.subr.mxu0 %v441
    %819 = vmatpush2.msra.mxu0 %v440
    %820 = vmatprep.subr.mxu0 %v437
    %821 = vmatpush2.msra.mxu0 %v436
    %822 = vmatprep.subr.mxu0 %v433
    %823 = vmatpush2.msra.mxu0 %v432
    %824 = vmatprep.subr.mxu0 %v429
    %825 = vmatpush2.msra.mxu0 %v428
    %826 = vmatprep.subr.mxu0 %v425
    %827 = vmatpush2.msra.mxu0 %v424
    %828 = vmatprep.subr.mxu0 %v421
    %829 = vmatpush2.msra.mxu0 %v420
    %830 = vmatprep.subr.mxu0 %v417
    %831 = vmatpush2.msra.mxu0 %v416
    %832 = vmatprep.subr.mxu0 %v413
    %833 = vmatpush2.msra.mxu0 %v412
    %834 = vmatprep.subr.mxu0 %v409
    %835 = vmatpush2.msra.mxu0 %v408
    %836 = vmatprep.subr.mxu0 %v405
    %837 = vmatpush2.msra.mxu0 %v404
    %838 = vmatprep.subr.mxu0 %v401
    %839 = vmatpush2.msra.mxu0 %v400
    %840 = vmatprep.subr.mxu0 %v397
    %841 = vmatpush2.msra.mxu0 %v396
    %842 = vmatprep.subr.mxu0 %v393
    %843 = vmatpush2.msra.mxu0 %v392
    %844 = vmatprep.subr.mxu0 %v389
    %845 = vmatpush2.msra.mxu0 %v388
    %846 = vmatprep.subr.mxu0 %v385
    %847 = vmatpush2.msra.mxu0 %v384
    %848 = vmatprep.mubr.f32.mxu0 %v632
    %849 = vmatmul.mubr.f32.gmra.mxu0 %v624
    %v850 = vpop.f32.mrf.mxu0
    %v851 = vadd.f32 %v780, %v850
    %v852 = vpop.f32.mrf.mxu0
    %v853 = vadd.f32 %v782, %v852
    %854 = vdwg.mxu0
    %855 = vmatprep.subr.mxu0 %v509
    %856 = vmatpush1.msra.mxu0 %v508
    %857 = vmatprep.subr.mxu0 %v505
    %858 = vmatpush1.msra.mxu0 %v504
    %859 = vmatprep.subr.mxu0 %v501
    %860 = vmatpush1.msra.mxu0 %v500
    %861 = vmatprep.subr.mxu0 %v497
    %862 = vmatpush1.msra.mxu0 %v496
    %863 = vmatprep.subr.mxu0 %v493
    %864 = vmatpush1.msra.mxu0 %v492
    %865 = vmatprep.subr.mxu0 %v489
    %866 = vmatpush1.msra.mxu0 %v488
    %867 = vmatprep.subr.mxu0 %v485
    %868 = vmatpush1.msra.mxu0 %v484
    %869 = vmatprep.subr.mxu0 %v481
    %870 = vmatpush1.msra.mxu0 %v480
    %871 = vmatprep.subr.mxu0 %v477
    %872 = vmatpush1.msra.mxu0 %v476
    %873 = vmatprep.subr.mxu0 %v473
    %874 = vmatpush1.msra.mxu0 %v472
    %875 = vmatprep.subr.mxu0 %v469
    %876 = vmatpush1.msra.mxu0 %v468
    %877 = vmatprep.subr.mxu0 %v465
    %878 = vmatpush1.msra.mxu0 %v464
    %879 = vmatprep.subr.mxu0 %v461
    %880 = vmatpush1.msra.mxu0 %v460
    %881 = vmatprep.subr.mxu0 %v457
    %882 = vmatpush1.msra.mxu0 %v456
    %883 = vmatprep.subr.mxu0 %v453
    %884 = vmatpush1.msra.mxu0 %v452
    %885 = vmatprep.subr.mxu0 %v449
    %886 = vmatpush1.msra.mxu0 %v448
    %887 = vmatprep.subr.mxu0 %v573
    %888 = vmatpush2.msra.mxu0 %v572
    %889 = vmatprep.subr.mxu0 %v569
    %890 = vmatpush2.msra.mxu0 %v568
    %891 = vmatprep.subr.mxu0 %v565
    %892 = vmatpush2.msra.mxu0 %v564
    %893 = vmatprep.subr.mxu0 %v561
    %894 = vmatpush2.msra.mxu0 %v560
    %895 = vmatprep.subr.mxu0 %v557
    %896 = vmatpush2.msra.mxu0 %v556
    %897 = vmatprep.subr.mxu0 %v553
    %898 = vmatpush2.msra.mxu0 %v552
    %899 = vmatprep.subr.mxu0 %v549
    %900 = vmatpush2.msra.mxu0 %v548
    %901 = vmatprep.subr.mxu0 %v545
    %902 = vmatpush2.msra.mxu0 %v544
    %903 = vmatprep.subr.mxu0 %v541
    %904 = vmatpush2.msra.mxu0 %v540
    %905 = vmatprep.subr.mxu0 %v537
    %906 = vmatpush2.msra.mxu0 %v536
    %907 = vmatprep.subr.mxu0 %v533
    %908 = vmatpush2.msra.mxu0 %v532
    %909 = vmatprep.subr.mxu0 %v529
    %910 = vmatpush2.msra.mxu0 %v528
    %911 = vmatprep.subr.mxu0 %v525
    %912 = vmatpush2.msra.mxu0 %v524
    %913 = vmatprep.subr.mxu0 %v521
    %914 = vmatpush2.msra.mxu0 %v520
    %915 = vmatprep.subr.mxu0 %v517
    %916 = vmatpush2.msra.mxu0 %v516
    %917 = vmatprep.subr.mxu0 %v513
    %918 = vmatpush2.msra.mxu0 %v512
    %919 = vmatprep.mubr.f32.mxu0 %v633
    %920 = vmatmul.mubr.f32.gmra.mxu0 %v631
    %v921 = vpop.f32.mrf.mxu0
    %v922 = vadd.f32 %v851, %v921
    %v923 = vpop.f32.mrf.mxu0
    %v924 = vadd.f32 %v853, %v923
    %925 = vdwg.mxu0
    %926 = vmatprep.subr.mxu0 %v127
    %927 = vmatpush1.msra.mxu0 %v126
    %928 = vmatprep.subr.mxu0 %v123
    %929 = vmatpush1.msra.mxu0 %v122
    %930 = vmatprep.subr.mxu0 %v119
    %931 = vmatpush1.msra.mxu0 %v118
    %932 = vmatprep.subr.mxu0 %v115
    %933 = vmatpush1.msra.mxu0 %v114
    %934 = vmatprep.subr.mxu0 %v111
    %935 = vmatpush1.msra.mxu0 %v110
    %936 = vmatprep.subr.mxu0 %v107
    %937 = vmatpush1.msra.mxu0 %v106
    %938 = vmatprep.subr.mxu0 %v103
    %939 = vmatpush1.msra.mxu0 %v102
    %940 = vmatprep.subr.mxu0 %v99
    %941 = vmatpush1.msra.mxu0 %v98
    %942 = vmatprep.subr.mxu0 %v95
    %943 = vmatpush1.msra.mxu0 %v94
    %944 = vmatprep.subr.mxu0 %v91
    %945 = vmatpush1.msra.mxu0 %v90
    %946 = vmatprep.subr.mxu0 %v87
    %947 = vmatpush1.msra.mxu0 %v86
    %948 = vmatprep.subr.mxu0 %v83
    %949 = vmatpush1.msra.mxu0 %v82
    %950 = vmatprep.subr.mxu0 %v79
    %951 = vmatpush1.msra.mxu0 %v78
    %952 = vmatprep.subr.mxu0 %v75
    %953 = vmatpush1.msra.mxu0 %v74
    %954 = vmatprep.subr.mxu0 %v71
    %955 = vmatpush1.msra.mxu0 %v70
    %956 = vmatprep.subr.mxu0 %v67
    %957 = vmatpush1.msra.mxu0 %v66
    %958 = vmatprep.subr.mxu0 %v191
    %959 = vmatpush2.msra.mxu0 %v190
    %960 = vmatprep.subr.mxu0 %v187
    %961 = vmatpush2.msra.mxu0 %v186
    %962 = vmatprep.subr.mxu0 %v183
    %963 = vmatpush2.msra.mxu0 %v182
    %964 = vmatprep.subr.mxu0 %v179
    %965 = vmatpush2.msra.mxu0 %v178
    %966 = vmatprep.subr.mxu0 %v175
    %967 = vmatpush2.msra.mxu0 %v174
    %968 = vmatprep.subr.mxu0 %v171
    %969 = vmatpush2.msra.mxu0 %v170
    %970 = vmatprep.subr.mxu0 %v167
    %971 = vmatpush2.msra.mxu0 %v166
    %972 = vmatprep.subr.mxu0 %v163
    %973 = vmatpush2.msra.mxu0 %v162
    %974 = vmatprep.subr.mxu0 %v159
    %975 = vmatpush2.msra.mxu0 %v158
    %976 = vmatprep.subr.mxu0 %v155
    %977 = vmatpush2.msra.mxu0 %v154
    %978 = vmatprep.subr.mxu0 %v151
    %979 = vmatpush2.msra.mxu0 %v150
    %980 = vmatprep.subr.mxu0 %v147
    %981 = vmatpush2.msra.mxu0 %v146
    %982 = vmatprep.subr.mxu0 %v143
    %983 = vmatpush2.msra.mxu0 %v142
    %984 = vmatprep.subr.mxu0 %v139
    %985 = vmatpush2.msra.mxu0 %v138
    %986 = vmatprep.subr.mxu0 %v135
    %987 = vmatpush2.msra.mxu0 %v134
    %988 = vmatprep.subr.mxu0 %v131
    %989 = vmatpush2.msra.mxu0 %v130
    %990 = vmatprep.mubr.f32.mxu0 %v615
    %991 = vmatmul.mubr.f32.gmra.mxu0 %v607
    %v992 = vpop.f32.mrf.mxu0
    %v993 = vadd.f32 %v589, %v992
    %v994 = vpop.f32.mrf.mxu0
    %v995 = vadd.f32 %v593, %v994
    %996 = vdwg.mxu0
    %997 = vmatprep.subr.mxu0 %v255
    %998 = vmatpush1.msra.mxu0 %v254
    %999 = vmatprep.subr.mxu0 %v251
    %1000 = vmatpush1.msra.mxu0 %v250
    %1001 = vmatprep.subr.mxu0 %v247
    %1002 = vmatpush1.msra.mxu0 %v246
    %1003 = vmatprep.subr.mxu0 %v243
    %1004 = vmatpush1.msra.mxu0 %v242
    %1005 = vmatprep.subr.mxu0 %v239
    %1006 = vmatpush1.msra.mxu0 %v238
    %1007 = vmatprep.subr.mxu0 %v235
    %1008 = vmatpush1.msra.mxu0 %v234
    %1009 = vmatprep.subr.mxu0 %v231
    %1010 = vmatpush1.msra.mxu0 %v230
    %1011 = vmatprep.subr.mxu0 %v227
    %1012 = vmatpush1.msra.mxu0 %v226
    %1013 = vmatprep.subr.mxu0 %v223
    %1014 = vmatpush1.msra.mxu0 %v222
    %1015 = vmatprep.subr.mxu0 %v219
    %1016 = vmatpush1.msra.mxu0 %v218
    %1017 = vmatprep.subr.mxu0 %v215
    %1018 = vmatpush1.msra.mxu0 %v214
    %1019 = vmatprep.subr.mxu0 %v211
    %1020 = vmatpush1.msra.mxu0 %v210
    %1021 = vmatprep.subr.mxu0 %v207
    %1022 = vmatpush1.msra.mxu0 %v206
    %1023 = vmatprep.subr.mxu0 %v203
    %1024 = vmatpush1.msra.mxu0 %v202
    %1025 = vmatprep.subr.mxu0 %v199
    %1026 = vmatpush1.msra.mxu0 %v198
    %1027 = vmatprep.subr.mxu0 %v195
    %1028 = vmatpush1.msra.mxu0 %v194
    %1029 = vmatprep.subr.mxu0 %v319
    %1030 = vmatpush2.msra.mxu0 %v318
    %1031 = vmatprep.subr.mxu0 %v315
    %1032 = vmatpush2.msra.mxu0 %v314
    %1033 = vmatprep.subr.mxu0 %v311
    %1034 = vmatpush2.msra.mxu0 %v310
    %1035 = vmatprep.subr.mxu0 %v307
    %1036 = vmatpush2.msra.mxu0 %v306
    %1037 = vmatprep.subr.mxu0 %v303
    %1038 = vmatpush2.msra.mxu0 %v302
    %1039 = vmatprep.subr.mxu0 %v299
    %1040 = vmatpush2.msra.mxu0 %v298
    %1041 = vmatprep.subr.mxu0 %v295
    %1042 = vmatpush2.msra.mxu0 %v294
    %1043 = vmatprep.subr.mxu0 %v291
    %1044 = vmatpush2.msra.mxu0 %v290
    %1045 = vmatprep.subr.mxu0 %v287
    %1046 = vmatpush2.msra.mxu0 %v286
    %1047 = vmatprep.subr.mxu0 %v283
    %1048 = vmatpush2.msra.mxu0 %v282
    %1049 = vmatprep.subr.mxu0 %v279
    %1050 = vmatpush2.msra.mxu0 %v278
    %1051 = vmatprep.subr.mxu0 %v275
    %1052 = vmatpush2.msra.mxu0 %v274
    %1053 = vmatprep.subr.mxu0 %v271
    %1054 = vmatpush2.msra.mxu0 %v270
    %1055 = vmatprep.subr.mxu0 %v267
    %1056 = vmatpush2.msra.mxu0 %v266
    %1057 = vmatprep.subr.mxu0 %v263
    %1058 = vmatpush2.msra.mxu0 %v262
    %1059 = vmatprep.subr.mxu0 %v259
    %1060 = vmatpush2.msra.mxu0 %v258
    %1061 = vmatprep.mubr.f32.mxu0 %v616
    %1062 = vmatmul.mubr.f32.gmra.mxu0 %v614
    %v1063 = vpop.f32.mrf.mxu0
    %v1064 = vadd.f32 %v993, %v1063
    %v1065 = vpop.f32.mrf.mxu0
    %v1066 = vadd.f32 %v995, %v1065
    %1067 = vdwg.mxu0
    %1068 = vmatprep.subr.mxu0 %v383
    %1069 = vmatpush1.msra.mxu0 %v382
    %1070 = vmatprep.subr.mxu0 %v379
    %1071 = vmatpush1.msra.mxu0 %v378
    %1072 = vmatprep.subr.mxu0 %v375
    %1073 = vmatpush1.msra.mxu0 %v374
    %1074 = vmatprep.subr.mxu0 %v371
    %1075 = vmatpush1.msra.mxu0 %v370
    %1076 = vmatprep.subr.mxu0 %v367
    %1077 = vmatpush1.msra.mxu0 %v366
    %1078 = vmatprep.subr.mxu0 %v363
    %1079 = vmatpush1.msra.mxu0 %v362
    %1080 = vmatprep.subr.mxu0 %v359
    %1081 = vmatpush1.msra.mxu0 %v358
    %1082 = vmatprep.subr.mxu0 %v355
    %1083 = vmatpush1.msra.mxu0 %v354
    %1084 = vmatprep.subr.mxu0 %v351
    %1085 = vmatpush1.msra.mxu0 %v350
    %1086 = vmatprep.subr.mxu0 %v347
    %1087 = vmatpush1.msra.mxu0 %v346
    %1088 = vmatprep.subr.mxu0 %v343
    %1089 = vmatpush1.msra.mxu0 %v342
    %1090 = vmatprep.subr.mxu0 %v339
    %1091 = vmatpush1.msra.mxu0 %v338
    %1092 = vmatprep.subr.mxu0 %v335
    %1093 = vmatpush1.msra.mxu0 %v334
    %1094 = vmatprep.subr.mxu0 %v331
    %1095 = vmatpush1.msra.mxu0 %v330
    %1096 = vmatprep.subr.mxu0 %v327
    %1097 = vmatpush1.msra.mxu0 %v326
    %1098 = vmatprep.subr.mxu0 %v323
    %1099 = vmatpush1.msra.mxu0 %v322
    %1100 = vmatprep.subr.mxu0 %v447
    %1101 = vmatpush2.msra.mxu0 %v446
    %1102 = vmatprep.subr.mxu0 %v443
    %1103 = vmatpush2.msra.mxu0 %v442
    %1104 = vmatprep.subr.mxu0 %v439
    %1105 = vmatpush2.msra.mxu0 %v438
    %1106 = vmatprep.subr.mxu0 %v435
    %1107 = vmatpush2.msra.mxu0 %v434
    %1108 = vmatprep.subr.mxu0 %v431
    %1109 = vmatpush2.msra.mxu0 %v430
    %1110 = vmatprep.subr.mxu0 %v427
    %1111 = vmatpush2.msra.mxu0 %v426
    %1112 = vmatprep.subr.mxu0 %v423
    %1113 = vmatpush2.msra.mxu0 %v422
    %1114 = vmatprep.subr.mxu0 %v419
    %1115 = vmatpush2.msra.mxu0 %v418
    %1116 = vmatprep.subr.mxu0 %v415
    %1117 = vmatpush2.msra.mxu0 %v414
    %1118 = vmatprep.subr.mxu0 %v411
    %1119 = vmatpush2.msra.mxu0 %v410
    %1120 = vmatprep.subr.mxu0 %v407
    %1121 = vmatpush2.msra.mxu0 %v406
    %1122 = vmatprep.subr.mxu0 %v403
    %1123 = vmatpush2.msra.mxu0 %v402
    %1124 = vmatprep.subr.mxu0 %v399
    %1125 = vmatpush2.msra.mxu0 %v398
    %1126 = vmatprep.subr.mxu0 %v395
    %1127 = vmatpush2.msra.mxu0 %v394
    %1128 = vmatprep.subr.mxu0 %v391
    %1129 = vmatpush2.msra.mxu0 %v390
    %1130 = vmatprep.subr.mxu0 %v387
    %1131 = vmatpush2.msra.mxu0 %v386
    %1132 = vmatprep.mubr.f32.mxu0 %v632
    %1133 = vmatmul.mubr.f32.gmra.mxu0 %v624
    %v1134 = vpop.f32.mrf.mxu0
    %v1135 = vadd.f32 %v1064, %v1134
    %v1136 = vpop.f32.mrf.mxu0
    %v1137 = vadd.f32 %v1066, %v1136
    %1138 = vdwg.mxu0
    %1139 = vmatprep.subr.mxu0 %v511
    %1140 = vmatpush1.msra.mxu0 %v510
    %1141 = vmatprep.subr.mxu0 %v507
    %1142 = vmatpush1.msra.mxu0 %v506
    %1143 = vmatprep.subr.mxu0 %v503
    %1144 = vmatpush1.msra.mxu0 %v502
    %1145 = vmatprep.subr.mxu0 %v499
    %1146 = vmatpush1.msra.mxu0 %v498
    %1147 = vmatprep.subr.mxu0 %v495
    %1148 = vmatpush1.msra.mxu0 %v494
    %1149 = vmatprep.subr.mxu0 %v491
    %1150 = vmatpush1.msra.mxu0 %v490
    %1151 = vmatprep.subr.mxu0 %v487
    %1152 = vmatpush1.msra.mxu0 %v486
    %1153 = vmatprep.subr.mxu0 %v483
    %1154 = vmatpush1.msra.mxu0 %v482
    %1155 = vmatprep.subr.mxu0 %v479
    %1156 = vmatpush1.msra.mxu0 %v478
    %1157 = vmatprep.subr.mxu0 %v475
    %1158 = vmatpush1.msra.mxu0 %v474
    %1159 = vmatprep.subr.mxu0 %v471
    %1160 = vmatpush1.msra.mxu0 %v470
    %1161 = vmatprep.subr.mxu0 %v467
    %1162 = vmatpush1.msra.mxu0 %v466
    %1163 = vmatprep.subr.mxu0 %v463
    %1164 = vmatpush1.msra.mxu0 %v462
    %1165 = vmatprep.subr.mxu0 %v459
    %1166 = vmatpush1.msra.mxu0 %v458
    %1167 = vmatprep.subr.mxu0 %v455
    %1168 = vmatpush1.msra.mxu0 %v454
    %1169 = vmatprep.subr.mxu0 %v451
    %1170 = vmatpush1.msra.mxu0 %v450
    %1171 = vmatprep.subr.mxu0 %v575
    %1172 = vmatpush2.msra.mxu0 %v574
    %1173 = vmatprep.subr.mxu0 %v571
    %1174 = vmatpush2.msra.mxu0 %v570
    %1175 = vmatprep.subr.mxu0 %v567
    %1176 = vmatpush2.msra.mxu0 %v566
    %1177 = vmatprep.subr.mxu0 %v563
    %1178 = vmatpush2.msra.mxu0 %v562
    %1179 = vmatprep.subr.mxu0 %v559
    %1180 = vmatpush2.msra.mxu0 %v558
    %1181 = vmatprep.subr.mxu0 %v555
    %1182 = vmatpush2.msra.mxu0 %v554
    %1183 = vmatprep.subr.mxu0 %v551
    %1184 = vmatpush2.msra.mxu0 %v550
    %1185 = vmatprep.subr.mxu0 %v547
    %1186 = vmatpush2.msra.mxu0 %v546
    %1187 = vmatprep.subr.mxu0 %v543
    %1188 = vmatpush2.msra.mxu0 %v542
    %1189 = vmatprep.subr.mxu0 %v539
    %1190 = vmatpush2.msra.mxu0 %v538
    %1191 = vmatprep.subr.mxu0 %v535
    %1192 = vmatpush2.msra.mxu0 %v534
    %1193 = vmatprep.subr.mxu0 %v531
    %1194 = vmatpush2.msra.mxu0 %v530
    %1195 = vmatprep.subr.mxu0 %v527
    %1196 = vmatpush2.msra.mxu0 %v526
    %1197 = vmatprep.subr.mxu0 %v523
    %1198 = vmatpush2.msra.mxu0 %v522
    %1199 = vmatprep.subr.mxu0 %v519
    %1200 = vmatpush2.msra.mxu0 %v518
    %1201 = vmatprep.subr.mxu0 %v515
    %1202 = vmatpush2.msra.mxu0 %v514
    %1203 = vmatprep.mubr.f32.mxu0 %v633
    %1204 = vmatmul.mubr.f32.gmra.mxu0 %v631
    %v1205 = vpop.f32.mrf.mxu0
    %v1206 = vadd.f32 %v1135, %v1205
    %v1207 = vpop.f32.mrf.mxu0
    %v1208 = vadd.f32 %v1137, %v1207
    %1209 = vdwg.mxu0
    %v1210 = vmax.f32 %v922, 0.0
    %v1211 = vmax.f32 %v924, 0.0
    %v1212 = vmax.f32 %v1206, 0.0
    %v1213 = vmax.f32 %v1208, 0.0
    %v1214 = vld [vmem:[%s5] sm:$0xff]
    %v1215 = vld [vmem:[%s5 + $0x8] sm:$0xff]
    %v1216 = vld [vmem:[%s5 + $0x10] sm:$0xff]
    %v1217 = vld [vmem:[%s5 + $0x18] sm:$0xff]
    %v1218 = vld [vmem:[%s5 + $0x20] sm:$0xff]
    %v1219 = vld [vmem:[%s5 + $0x28] sm:$0xff]
    %v1220 = vld [vmem:[%s5 + $0x30] sm:$0xff]
    %v1221 = vld [vmem:[%s5 + $0x38] sm:$0xff]
    %v1222 = vld [vmem:[%s5 + $0x40] sm:$0xff]
    %v1223 = vld [vmem:[%s5 + $0x48] sm:$0xff]
    %v1224 = vld [vmem:[%s5 + $0x50] sm:$0xff]
    %v1225 = vld [vmem:[%s5 + $0x58] sm:$0xff]
    %v1226 = vld [vmem:[%s5 + $0x60] sm:$0xff]
    %v1227 = vld [vmem:[%s5 + $0x68] sm:$0xff]
    %v1228 = vld [vmem:[%s5 + $0x70] sm:$0xff]
    %v1229 = vld [vmem:[%s5 + $0x78] sm:$0xff]
    %v1230 = vld [vmem:[%s5 + $0x80] sm:$0xff]
    %v1231 = vld [vmem:[%s5 + $0x88] sm:$0xff]
    %v1232 = vld [vmem:[%s5 + $0x90] sm:$0xff]
    %v1233 = vld [vmem:[%s5 + $0x98] sm:$0xff]
    %v1234 = vld [vmem:[%s5 + $0xa0] sm:$0xff]
    %v1235 = vld [vmem:[%s5 + $0xa8] sm:$0xff]
    %v1236 = vld [vmem:[%s5 + $0xb0] sm:$0xff]
    %v1237 = vld [vmem:[%s5 + $0xb8] sm:$0xff]
    %v1238 = vld [vmem:[%s5 + $0xc0] sm:$0xff]
    %v1239 = vld [vmem:[%s5 + $0xc8] sm:$0xff]
    %v1240 = vld [vmem:[%s5 + $0xd0] sm:$0xff]
    %v1241 = vld [vmem:[%s5 + $0xd8] sm:$0xff]
    %v1242 = vld [vmem:[%s5 + $0xe0] sm:$0xff]
    %v1243 = vld [vmem:[%s5 + $0xe8] sm:$0xff]
    %v1244 = vld [vmem:[%s5 + $0xf0] sm:$0xff]
    %v1245 = vld [vmem:[%s5 + $0xf8] sm:$0xff]
    %v1246 = vld [vmem:[%s5 + $0x100] sm:$0xff]
    %v1247 = vld [vmem:[%s5 + $0x108] sm:$0xff]
    %v1248 = vld [vmem:[%s5 + $0x110] sm:$0xff]
    %v1249 = vld [vmem:[%s5 + $0x118] sm:$0xff]
    %v1250 = vld [vmem:[%s5 + $0x120] sm:$0xff]
    %v1251 = vld [vmem:[%s5 + $0x128] sm:$0xff]
    %v1252 = vld [vmem:[%s5 + $0x130] sm:$0xff]
    %v1253 = vld [vmem:[%s5 + $0x138] sm:$0xff]
    %v1254 = vld [vmem:[%s5 + $0x140] sm:$0xff]
    %v1255 = vld [vmem:[%s5 + $0x148] sm:$0xff]
    %v1256 = vld [vmem:[%s5 + $0x150] sm:$0xff]
    %v1257 = vld [vmem:[%s5 + $0x158] sm:$0xff]
    %v1258 = vld [vmem:[%s5 + $0x160] sm:$0xff]
    %v1259 = vld [vmem:[%s5 + $0x168] sm:$0xff]
    %v1260 = vld [vmem:[%s5 + $0x170] sm:$0xff]
    %v1261 = vld [vmem:[%s5 + $0x178] sm:$0xff]
    %v1262 = vld [vmem:[%s5 + $0x180] sm:$0xff]
    %v1263 = vld [vmem:[%s6] sm:$0x1]
    %v1265 = vlaneseq
    %v1266 = vshrl.u32 %v1265, 7
    %v1267 = vsub.s32 0, %v1266
    %v1268 = vrot.slane %v1263, %v1267
    %vm1270 = vcmask 64512
    %v1272 = vsel %vm1270, %v1213, 0
    %1274 = vmatprep.subr.mxu0 0.0
    %1275 = vmatpush1.msra.mxu0 %v1229
    %1276 = vmatprep.subr.mxu0 0.0
    %1277 = vmatpush1.msra.mxu0 %v1228
    %1278 = vmatprep.subr.mxu0 0.0
    %1279 = vmatpush1.msra.mxu0 %v1227
    %1280 = vmatprep.subr.mxu0 0.0
    %1281 = vmatpush1.msra.mxu0 %v1226
    %1282 = vmatprep.subr.mxu0 0.0
    %1283 = vmatpush1.msra.mxu0 %v1225
    %1284 = vmatprep.subr.mxu0 0.0
    %1285 = vmatpush1.msra.mxu0 %v1224
    %1286 = vmatprep.subr.mxu0 0.0
    %1287 = vmatpush1.msra.mxu0 %v1223
    %1288 = vmatprep.subr.mxu0 0.0
    %1289 = vmatpush1.msra.mxu0 %v1222
    %1290 = vmatprep.subr.mxu0 0.0
    %1291 = vmatpush1.msra.mxu0 %v1221
    %1292 = vmatprep.subr.mxu0 0.0
    %1293 = vmatpush1.msra.mxu0 %v1220
    %1294 = vmatprep.subr.mxu0 0.0
    %1295 = vmatpush1.msra.mxu0 %v1219
    %1296 = vmatprep.subr.mxu0 0.0
    %1297 = vmatpush1.msra.mxu0 %v1218
    %1298 = vmatprep.subr.mxu0 0.0
    %1299 = vmatpush1.msra.mxu0 %v1217
    %1300 = vmatprep.subr.mxu0 0.0
    %1301 = vmatpush1.msra.mxu0 %v1216
    %1302 = vmatprep.subr.mxu0 0.0
    %1303 = vmatpush1.msra.mxu0 %v1215
    %1304 = vmatprep.subr.mxu0 0.0
    %1305 = vmatpush1.msra.mxu0 %v1214
    %1306 = vmatprep.subr.mxu0 0.0
    %1307 = vmatpush2.msra.mxu0 %v1245
    %1308 = vmatprep.subr.mxu0 0.0
    %1309 = vmatpush2.msra.mxu0 %v1244
    %1310 = vmatprep.subr.mxu0 0.0
    %1311 = vmatpush2.msra.mxu0 %v1243
    %1312 = vmatprep.subr.mxu0 0.0
    %1313 = vmatpush2.msra.mxu0 %v1242
    %1314 = vmatprep.subr.mxu0 0.0
    %1315 = vmatpush2.msra.mxu0 %v1241
    %1316 = vmatprep.subr.mxu0 0.0
    %1317 = vmatpush2.msra.mxu0 %v1240
    %1318 = vmatprep.subr.mxu0 0.0
    %1319 = vmatpush2.msra.mxu0 %v1239
    %1320 = vmatprep.subr.mxu0 0.0
    %1321 = vmatpush2.msra.mxu0 %v1238
    %1322 = vmatprep.subr.mxu0 0.0
    %1323 = vmatpush2.msra.mxu0 %v1237
    %1324 = vmatprep.subr.mxu0 0.0
    %1325 = vmatpush2.msra.mxu0 %v1236
    %1326 = vmatprep.subr.mxu0 0.0
    %1327 = vmatpush2.msra.mxu0 %v1235
    %1328 = vmatprep.subr.mxu0 0.0
    %1329 = vmatpush2.msra.mxu0 %v1234
    %1330 = vmatprep.subr.mxu0 0.0
    %1331 = vmatpush2.msra.mxu0 %v1233
    %1332 = vmatprep.subr.mxu0 0.0
    %1333 = vmatpush2.msra.mxu0 %v1232
    %1334 = vmatprep.subr.mxu0 0.0
    %1335 = vmatpush2.msra.mxu0 %v1231
    %1336 = vmatprep.subr.mxu0 0.0
    %1337 = vmatpush2.msra.mxu0 %v1230
    %1338 = vmatprep.mubr.f32.mxu0 %v1211
    %1339 = vmatmul.mubr.f32.gmra.mxu0 %v1210
    %v1340 = vpop.f32.mrf.mxu0
    %v1341 = vadd.f32 %v1268, %v1340
    %v1342 = vpop.f32.mrf.mxu0
    %1343 = vdwg.mxu0
    %1344 = vmatprep.subr.mxu0 0.0
    %1345 = vmatpush1.msra.mxu0 %v1261
    %1346 = vmatprep.subr.mxu0 0.0
    %1347 = vmatpush1.msra.mxu0 %v1260
    %1348 = vmatprep.subr.mxu0 0.0
    %1349 = vmatpush1.msra.mxu0 %v1259
    %1350 = vmatprep.subr.mxu0 0.0
    %1351 = vmatpush1.msra.mxu0 %v1258
    %1352 = vmatprep.subr.mxu0 0.0
    %1353 = vmatpush1.msra.mxu0 %v1257
    %1354 = vmatprep.subr.mxu0 0.0
    %1355 = vmatpush1.msra.mxu0 %v1256
    %1356 = vmatprep.subr.mxu0 0.0
    %1357 = vmatpush1.msra.mxu0 %v1255
    %1358 = vmatprep.subr.mxu0 0.0
    %1359 = vmatpush1.msra.mxu0 %v1254
    %1360 = vmatprep.subr.mxu0 0.0
    %1361 = vmatpush1.msra.mxu0 %v1253
    %1362 = vmatprep.subr.mxu0 0.0
    %1363 = vmatpush1.msra.mxu0 %v1252
    %1364 = vmatprep.subr.mxu0 0.0
    %1365 = vmatpush1.msra.mxu0 %v1251
    %1366 = vmatprep.subr.mxu0 0.0
    %1367 = vmatpush1.msra.mxu0 %v1250
    %1368 = vmatprep.subr.mxu0 0.0
    %1369 = vmatpush1.msra.mxu0 %v1249
    %1370 = vmatprep.subr.mxu0 0.0
    %1371 = vmatpush1.msra.mxu0 %v1248
    %1372 = vmatprep.subr.mxu0 0.0
    %1373 = vmatpush1.msra.mxu0 %v1247
    %1374 = vmatprep.subr.mxu0 0.0
    %1375 = vmatpush1.msra.mxu0 %v1246
    %1376 = vmatprep.subr.mxu0 0.0
    %1377 = vmatpush2.msra.mxu0 0.0
    %1378 = vmatprep.subr.mxu0 0.0
    %1379 = vmatpush2.msra.mxu0 0.0
    %1380 = vmatprep.subr.mxu0 0.0
    %1381 = vmatpush2.msra.mxu0 0.0
    %1382 = vmatprep.subr.mxu0 0.0
    %1383 = vmatpush2.msra.mxu0 0.0
    %1384 = vmatprep.subr.mxu0 0.0
    %1385 = vmatpush2.msra.mxu0 0.0
    %1386 = vmatprep.subr.mxu0 0.0
    %1387 = vmatpush2.msra.mxu0 0.0
    %1388 = vmatprep.subr.mxu0 0.0
    %1389 = vmatpush2.msra.mxu0 0.0
    %1390 = vmatprep.subr.mxu0 0.0
    %1391 = vmatpush2.msra.mxu0 0.0
    %1392 = vmatprep.subr.mxu0 0.0
    %1393 = vmatpush2.msra.mxu0 0.0
    %1394 = vmatprep.subr.mxu0 0.0
    %1395 = vmatpush2.msra.mxu0 0.0
    %1396 = vmatprep.subr.mxu0 0.0
    %1397 = vmatpush2.msra.mxu0 0.0
    %1398 = vmatprep.subr.mxu0 0.0
    %1399 = vmatpush2.msra.mxu0 0.0
    %1400 = vmatprep.subr.mxu0 0.0
    %1401 = vmatpush2.msra.mxu0 0.0
    %1402 = vmatprep.subr.mxu0 0.0
    %1403 = vmatpush2.msra.mxu0 0.0
    %1404 = vmatprep.subr.mxu0 0.0
    %1405 = vmatpush2.msra.mxu0 0.0
    %1406 = vmatprep.subr.mxu0 0.0
    %1407 = vmatpush2.msra.mxu0 %v1262
    %1408 = vmatprep.mubr.f32.mxu0 %v1272
    %1409 = vmatmul.mubr.f32.gmra.mxu0 %v1212
    %v1410 = vpop.f32.mrf.mxu0
    %v1411 = vadd.f32 %v1341, %v1410
    %v1412 = vpop.f32.mrf.mxu0
    %1413 = vdwg.mxu0
    %v1414 = vmax.f32 %v1411, 0.0
    %v1415 = vld [vmem:[%s7] sm:$0xff]
    %v1416 = vld [vmem:[%s7 + $0x8] sm:$0xff]
    %v1417 = vld [vmem:[%s7 + $0x10] sm:$0xff]
    %v1418 = vld [vmem:[%s7 + $0x18] sm:$0xff]
    %v1419 = vld [vmem:[%s7 + $0x20] sm:$0xff]
    %v1420 = vld [vmem:[%s7 + $0x28] sm:$0xff]
    %v1421 = vld [vmem:[%s7 + $0x30] sm:$0xff]
    %v1422 = vld [vmem:[%s7 + $0x38] sm:$0xff]
    %v1423 = vld [vmem:[%s7 + $0x40] sm:$0xff]
    %v1424 = vld [vmem:[%s8] sm:$0x1]
    %v1426 = vlaneseq
    %v1427 = vshrl.u32 %v1426, 7
    %v1428 = vsub.s32 0, %v1427
    %v1429 = vrot.slane %v1424, %v1428
    %vm1431 = vcmask 588800
    %v1433 = vsel %vm1431, %v1414, 0
    %1435 = vmatprep.subr.mxu0 0.0
    %1436 = vmatpush1.msra.mxu0 0.0
    %1437 = vmatprep.subr.mxu0 0.0
    %1438 = vmatpush1.msra.mxu0 0.0
    %1439 = vmatprep.subr.mxu0 0.0
    %1440 = vmatpush1.msra.mxu0 0.0
    %1441 = vmatprep.subr.mxu0 0.0
    %1442 = vmatpush1.msra.mxu0 0.0
    %1443 = vmatprep.subr.mxu0 0.0
    %1444 = vmatpush1.msra.mxu0 0.0
    %1445 = vmatprep.subr.mxu0 0.0
    %1446 = vmatpush1.msra.mxu0 0.0
    %1447 = vmatprep.subr.mxu0 0.0
    %1448 = vmatpush1.msra.mxu0 0.0
    %1449 = vmatprep.subr.mxu0 0.0
    %1450 = vmatpush1.msra.mxu0 %v1423
    %1451 = vmatprep.subr.mxu0 0.0
    %1452 = vmatpush1.msra.mxu0 %v1422
    %1453 = vmatprep.subr.mxu0 0.0
    %1454 = vmatpush1.msra.mxu0 %v1421
    %1455 = vmatprep.subr.mxu0 0.0
    %1456 = vmatpush1.msra.mxu0 %v1420
    %1457 = vmatprep.subr.mxu0 0.0
    %1458 = vmatpush1.msra.mxu0 %v1419
    %1459 = vmatprep.subr.mxu0 0.0
    %1460 = vmatpush1.msra.mxu0 %v1418
    %1461 = vmatprep.subr.mxu0 0.0
    %1462 = vmatpush1.msra.mxu0 %v1417
    %1463 = vmatprep.subr.mxu0 0.0
    %1464 = vmatpush1.msra.mxu0 %v1416
    %1465 = vmatprep.subr.mxu0 0.0
    %1466 = vmatpush1.msra.mxu0 %v1415
    %1467 = vmatprep.subr.mxu0 0.0
    %1468 = vmatpush2.msra.mxu0 0.0
    %1469 = vmatprep.subr.mxu0 0.0
    %1470 = vmatpush2.msra.mxu0 0.0
    %1471 = vmatprep.subr.mxu0 0.0
    %1472 = vmatpush2.msra.mxu0 0.0
    %1473 = vmatprep.subr.mxu0 0.0
    %1474 = vmatpush2.msra.mxu0 0.0
    %1475 = vmatprep.subr.mxu0 0.0
    %1476 = vmatpush2.msra.mxu0 0.0
    %1477 = vmatprep.subr.mxu0 0.0
    %1478 = vmatpush2.msra.mxu0 0.0
    %1479 = vmatprep.subr.mxu0 0.0
    %1480 = vmatpush2.msra.mxu0 0.0
    %1481 = vmatprep.subr.mxu0 0.0
    %1482 = vmatpush2.msra.mxu0 0.0
    %1483 = vmatprep.subr.mxu0 0.0
    %1484 = vmatpush2.msra.mxu0 0.0
    %1485 = vmatprep.subr.mxu0 0.0
    %1486 = vmatpush2.msra.mxu0 0.0
    %1487 = vmatprep.subr.mxu0 0.0
    %1488 = vmatpush2.msra.mxu0 0.0
    %1489 = vmatprep.subr.mxu0 0.0
    %1490 = vmatpush2.msra.mxu0 0.0
    %1491 = vmatprep.subr.mxu0 0.0
    %1492 = vmatpush2.msra.mxu0 0.0
    %1493 = vmatprep.subr.mxu0 0.0
    %1494 = vmatpush2.msra.mxu0 0.0
    %1495 = vmatprep.subr.mxu0 0.0
    %1496 = vmatpush2.msra.mxu0 0.0
    %1497 = vmatprep.subr.mxu0 0.0
    %1498 = vmatpush2.msra.mxu0 0.0
    %1499 = vmatprep.mubr.f32.mxu0 0.0
    %1500 = vmatmul.mubr.f32.gmra.mxu0 %v1433
    %v1501 = vpop.f32.mrf.mxu0
    %v1502 = vadd.f32 %v1429, %v1501
    %v1503 = vpop.f32.mrf.mxu0
    %1504 = vdwg.mxu0
    %v1505 = vmax.f32 %v1502, 0.0
    %v1506 = vld [vmem:[%s9] sm:$0xff]
    %v1507 = vld [vmem:[%s9 + $0x8] sm:$0xff]
    %v1508 = vld [vmem:[%s9 + $0x10] sm:$0xff]
    %v1509 = vld [vmem:[%s9 + $0x18] sm:$0xff]
    %v1510 = vld [vmem:[%s9 + $0x20] sm:$0xff]
    %v1511 = vld [vmem:[%s9 + $0x28] sm:$0xff]
    %v1512 = vld [vmem:[%s9 + $0x30] sm:$0xff]
    %v1513 = vld [vmem:[%s9 + $0x38] sm:$0xff]
    %v1514 = vld [vmem:[%s9 + $0x40] sm:$0xff]
    %v1515 = vld [vmem:[%s9 + $0x48] sm:$0xff]
    %v1516 = vld [vmem:[%s9 + $0x50] sm:$0xff]
    %v1517 = vld [vmem:[%s9 + $0x58] sm:$0xff]
    %v1518 = vld [vmem:[%s9 + $0x60] sm:$0xff]
    %v1519 = vld [vmem:[%s9 + $0x68] sm:$0xff]
    %v1520 = vld [vmem:[%s9 + $0x70] sm:$0xff]
    %v1521 = vld [vmem:[%s9 + $0x78] sm:$0xff]
    %v1522 = vld [vmem:[%s1] sm:$0x3]
    %v1523 = vld [vmem:[%s10] sm:$0xff]
    %v1524 = vld [vmem:[%s10 + $0x8] sm:$0xff]
    %v1525 = vld [vmem:[%s10 + $0x10] sm:$0xff]
    %v1526 = vld [vmem:[%s10 + $0x18] sm:$0xff]
    %v1528 = vsel %vm1270, %v1522, 0
    %1530 = vmatprep.subr.mxu0 0.0
    %1531 = vmatpush1.msra.mxu0 0.0
    %1532 = vmatprep.subr.mxu0 0.0
    %1533 = vmatpush1.msra.mxu0 0.0
    %1534 = vmatprep.subr.mxu0 0.0
    %1535 = vmatpush1.msra.mxu0 0.0
    %1536 = vmatprep.subr.mxu0 0.0
    %1537 = vmatpush1.msra.mxu0 0.0
    %1538 = vmatprep.subr.mxu0 0.0
    %1539 = vmatpush1.msra.mxu0 0.0
    %1540 = vmatprep.subr.mxu0 0.0
    %1541 = vmatpush1.msra.mxu0 0.0
    %1542 = vmatprep.subr.mxu0 0.0
    %1543 = vmatpush1.msra.mxu0 0.0
    %1544 = vmatprep.subr.mxu0 0.0
    %1545 = vmatpush1.msra.mxu0 0.0
    %1546 = vmatprep.subr.mxu0 0.0
    %1547 = vmatpush1.msra.mxu0 0.0
    %1548 = vmatprep.subr.mxu0 0.0
    %1549 = vmatpush1.msra.mxu0 0.0
    %1550 = vmatprep.subr.mxu0 0.0
    %1551 = vmatpush1.msra.mxu0 0.0
    %1552 = vmatprep.subr.mxu0 0.0
    %1553 = vmatpush1.msra.mxu0 0.0
    %1554 = vmatprep.subr.mxu0 0.0
    %1555 = vmatpush1.msra.mxu0 0.0
    %1556 = vmatprep.subr.mxu0 0.0
    %1557 = vmatpush1.msra.mxu0 0.0
    %1558 = vmatprep.subr.mxu0 0.0
    %1559 = vmatpush1.msra.mxu0 0.0
    %1560 = vmatprep.subr.mxu0 %v1524
    %1561 = vmatpush1.msra.mxu0 %v1523
    %1562 = vmatprep.subr.mxu0 0.0
    %1563 = vmatpush2.msra.mxu0 0.0
    %1564 = vmatprep.subr.mxu0 0.0
    %1565 = vmatpush2.msra.mxu0 0.0
    %1566 = vmatprep.subr.mxu0 0.0
    %1567 = vmatpush2.msra.mxu0 0.0
    %1568 = vmatprep.subr.mxu0 0.0
    %1569 = vmatpush2.msra.mxu0 0.0
    %1570 = vmatprep.subr.mxu0 0.0
    %1571 = vmatpush2.msra.mxu0 0.0
    %1572 = vmatprep.subr.mxu0 0.0
    %1573 = vmatpush2.msra.mxu0 0.0
    %1574 = vmatprep.subr.mxu0 0.0
    %1575 = vmatpush2.msra.mxu0 0.0
    %1576 = vmatprep.subr.mxu0 0.0
    %1577 = vmatpush2.msra.mxu0 0.0
    %1578 = vmatprep.subr.mxu0 0.0
    %1579 = vmatpush2.msra.mxu0 0.0
    %1580 = vmatprep.subr.mxu0 0.0
    %1581 = vmatpush2.msra.mxu0 0.0
    %1582 = vmatprep.subr.mxu0 0.0
    %1583 = vmatpush2.msra.mxu0 0.0
    %1584 = vmatprep.subr.mxu0 0.0
    %1585 = vmatpush2.msra.mxu0 0.0
    %1586 = vmatprep.subr.mxu0 0.0
    %1587 = vmatpush2.msra.mxu0 0.0
    %1588 = vmatprep.subr.mxu0 0.0
    %1589 = vmatpush2.msra.mxu0 0.0
    %1590 = vmatprep.subr.mxu0 0.0
    %1591 = vmatpush2.msra.mxu0 0.0
    %1592 = vmatprep.subr.mxu0 0.0
    %1593 = vmatpush2.msra.mxu0 0.0
    %1594 = vmatprep.mubr.f32.mxu0 0.0
    %1595 = vmatmul.mubr.f32.gmra.mxu0 %v1528
    %v1596 = vpop.f32.mrf.mxu0
    %v1597 = vadd.f32 0.0, %v1596
    %v1598 = vpop.f32.mrf.mxu0
    %v1599 = vadd.f32 0.0, %v1598
    %1600 = vdwg.mxu0
    %1601 = vmatprep.subr.mxu0 0.0
    %1602 = vmatpush1.msra.mxu0 0.0
    %1603 = vmatprep.subr.mxu0 0.0
    %1604 = vmatpush1.msra.mxu0 0.0
    %1605 = vmatprep.subr.mxu0 0.0
    %1606 = vmatpush1.msra.mxu0 0.0
    %1607 = vmatprep.subr.mxu0 0.0
    %1608 = vmatpush1.msra.mxu0 0.0
    %1609 = vmatprep.subr.mxu0 0.0
    %1610 = vmatpush1.msra.mxu0 0.0
    %1611 = vmatprep.subr.mxu0 0.0
    %1612 = vmatpush1.msra.mxu0 0.0
    %1613 = vmatprep.subr.mxu0 0.0
    %1614 = vmatpush1.msra.mxu0 0.0
    %1615 = vmatprep.subr.mxu0 0.0
    %1616 = vmatpush1.msra.mxu0 0.0
    %1617 = vmatprep.subr.mxu0 0.0
    %1618 = vmatpush1.msra.mxu0 0.0
    %1619 = vmatprep.subr.mxu0 0.0
    %1620 = vmatpush1.msra.mxu0 0.0
    %1621 = vmatprep.subr.mxu0 0.0
    %1622 = vmatpush1.msra.mxu0 0.0
    %1623 = vmatprep.subr.mxu0 0.0
    %1624 = vmatpush1.msra.mxu0 0.0
    %1625 = vmatprep.subr.mxu0 0.0
    %1626 = vmatpush1.msra.mxu0 0.0
    %1627 = vmatprep.subr.mxu0 0.0
    %1628 = vmatpush1.msra.mxu0 0.0
    %1629 = vmatprep.subr.mxu0 0.0
    %1630 = vmatpush1.msra.mxu0 0.0
    %1631 = vmatprep.subr.mxu0 %v1526
    %1632 = vmatpush1.msra.mxu0 %v1525
    %1633 = vmatprep.subr.mxu0 0.0
    %1634 = vmatpush2.msra.mxu0 0.0
    %1635 = vmatprep.subr.mxu0 0.0
    %1636 = vmatpush2.msra.mxu0 0.0
    %1637 = vmatprep.subr.mxu0 0.0
    %1638 = vmatpush2.msra.mxu0 0.0
    %1639 = vmatprep.subr.mxu0 0.0
    %1640 = vmatpush2.msra.mxu0 0.0
    %1641 = vmatprep.subr.mxu0 0.0
    %1642 = vmatpush2.msra.mxu0 0.0
    %1643 = vmatprep.subr.mxu0 0.0
    %1644 = vmatpush2.msra.mxu0 0.0
    %1645 = vmatprep.subr.mxu0 0.0
    %1646 = vmatpush2.msra.mxu0 0.0
    %1647 = vmatprep.subr.mxu0 0.0
    %1648 = vmatpush2.msra.mxu0 0.0
    %1649 = vmatprep.subr.mxu0 0.0
    %1650 = vmatpush2.msra.mxu0 0.0
    %1651 = vmatprep.subr.mxu0 0.0
    %1652 = vmatpush2.msra.mxu0 0.0
    %1653 = vmatprep.subr.mxu0 0.0
    %1654 = vmatpush2.msra.mxu0 0.0
    %1655 = vmatprep.subr.mxu0 0.0
    %1656 = vmatpush2.msra.mxu0 0.0
    %1657 = vmatprep.subr.mxu0 0.0
    %1658 = vmatpush2.msra.mxu0 0.0
    %1659 = vmatprep.subr.mxu0 0.0
    %1660 = vmatpush2.msra.mxu0 0.0
    %1661 = vmatprep.subr.mxu0 0.0
    %1662 = vmatpush2.msra.mxu0 0.0
    %1663 = vmatprep.subr.mxu0 0.0
    %1664 = vmatpush2.msra.mxu0 0.0
    %1665 = vmatprep.mubr.f32.mxu0 0.0
    %1666 = vmatmul.mubr.f32.gmra.mxu0 %v1528
    %v1667 = vpop.f32.mrf.mxu0
    %v1668 = vadd.f32 0.0, %v1667
    %v1669 = vpop.f32.mrf.mxu0
    %v1670 = vadd.f32 0.0, %v1669
    %1671 = vdwg.mxu0
    %vm1672 = vcmask 261120
    %v1674 = vsel %vm1672, %v1505, 0
    %1676 = vmatprep.subr.mxu0 0.0
    %1677 = vmatpush1.msra.mxu0 0.0
    %1678 = vmatprep.subr.mxu0 0.0
    %1679 = vmatpush1.msra.mxu0 0.0
    %1680 = vmatprep.subr.mxu0 0.0
    %1681 = vmatpush1.msra.mxu0 0.0
    %1682 = vmatprep.subr.mxu0 0.0
    %1683 = vmatpush1.msra.mxu0 0.0
    %1684 = vmatprep.subr.mxu0 0.0
    %1685 = vmatpush1.msra.mxu0 0.0
    %1686 = vmatprep.subr.mxu0 0.0
    %1687 = vmatpush1.msra.mxu0 0.0
    %1688 = vmatprep.subr.mxu0 0.0
    %1689 = vmatpush1.msra.mxu0 0.0
    %1690 = vmatprep.subr.mxu0 0.0
    %1691 = vmatpush1.msra.mxu0 0.0
    %1692 = vmatprep.subr.mxu0 0.0
    %1693 = vmatpush1.msra.mxu0 0.0
    %1694 = vmatprep.subr.mxu0 0.0
    %1695 = vmatpush1.msra.mxu0 0.0
    %1696 = vmatprep.subr.mxu0 0.0
    %1697 = vmatpush1.msra.mxu0 0.0
    %1698 = vmatprep.subr.mxu0 0.0
    %1699 = vmatpush1.msra.mxu0 0.0
    %1700 = vmatprep.subr.mxu0 %v1519
    %1701 = vmatpush1.msra.mxu0 %v1518
    %1702 = vmatprep.subr.mxu0 %v1515
    %1703 = vmatpush1.msra.mxu0 %v1514
    %1704 = vmatprep.subr.mxu0 %v1511
    %1705 = vmatpush1.msra.mxu0 %v1510
    %1706 = vmatprep.subr.mxu0 %v1507
    %1707 = vmatpush1.msra.mxu0 %v1506
    %1708 = vmatprep.subr.mxu0 0.0
    %1709 = vmatpush2.msra.mxu0 0.0
    %1710 = vmatprep.subr.mxu0 0.0
    %1711 = vmatpush2.msra.mxu0 0.0
    %1712 = vmatprep.subr.mxu0 0.0
    %1713 = vmatpush2.msra.mxu0 0.0
    %1714 = vmatprep.subr.mxu0 0.0
    %1715 = vmatpush2.msra.mxu0 0.0
    %1716 = vmatprep.subr.mxu0 0.0
    %1717 = vmatpush2.msra.mxu0 0.0
    %1718 = vmatprep.subr.mxu0 0.0
    %1719 = vmatpush2.msra.mxu0 0.0
    %1720 = vmatprep.subr.mxu0 0.0
    %1721 = vmatpush2.msra.mxu0 0.0
    %1722 = vmatprep.subr.mxu0 0.0
    %1723 = vmatpush2.msra.mxu0 0.0
    %1724 = vmatprep.subr.mxu0 0.0
    %1725 = vmatpush2.msra.mxu0 0.0
    %1726 = vmatprep.subr.mxu0 0.0
    %1727 = vmatpush2.msra.mxu0 0.0
    %1728 = vmatprep.subr.mxu0 0.0
    %1729 = vmatpush2.msra.mxu0 0.0
    %1730 = vmatprep.subr.mxu0 0.0
    %1731 = vmatpush2.msra.mxu0 0.0
    %1732 = vmatprep.subr.mxu0 0.0
    %1733 = vmatpush2.msra.mxu0 0.0
    %1734 = vmatprep.subr.mxu0 0.0
    %1735 = vmatpush2.msra.mxu0 0.0
    %1736 = vmatprep.subr.mxu0 0.0
    %1737 = vmatpush2.msra.mxu0 0.0
    %1738 = vmatprep.subr.mxu0 0.0
    %1739 = vmatpush2.msra.mxu0 0.0
    %1740 = vmatprep.mubr.f32.mxu0 0.0
    %1741 = vmatmul.mubr.f32.gmra.mxu0 %v1674
    %v1742 = vpop.f32.mrf.mxu0
    %v1743 = vadd.f32 %v1597, %v1742
    %v1744 = vpop.f32.mrf.mxu0
    %v1745 = vadd.f32 %v1599, %v1744
    %1746 = vdwg.mxu0
    %1747 = vmatprep.subr.mxu0 0.0
    %1748 = vmatpush1.msra.mxu0 0.0
    %1749 = vmatprep.subr.mxu0 0.0
    %1750 = vmatpush1.msra.mxu0 0.0
    %1751 = vmatprep.subr.mxu0 0.0
    %1752 = vmatpush1.msra.mxu0 0.0
    %1753 = vmatprep.subr.mxu0 0.0
    %1754 = vmatpush1.msra.mxu0 0.0
    %1755 = vmatprep.subr.mxu0 0.0
    %1756 = vmatpush1.msra.mxu0 0.0
    %1757 = vmatprep.subr.mxu0 0.0
    %1758 = vmatpush1.msra.mxu0 0.0
    %1759 = vmatprep.subr.mxu0 0.0
    %1760 = vmatpush1.msra.mxu0 0.0
    %1761 = vmatprep.subr.mxu0 0.0
    %1762 = vmatpush1.msra.mxu0 0.0
    %1763 = vmatprep.subr.mxu0 0.0
    %1764 = vmatpush1.msra.mxu0 0.0
    %1765 = vmatprep.subr.mxu0 0.0
    %1766 = vmatpush1.msra.mxu0 0.0
    %1767 = vmatprep.subr.mxu0 0.0
    %1768 = vmatpush1.msra.mxu0 0.0
    %1769 = vmatprep.subr.mxu0 0.0
    %1770 = vmatpush1.msra.mxu0 0.0
    %1771 = vmatprep.subr.mxu0 %v1521
    %1772 = vmatpush1.msra.mxu0 %v1520
    %1773 = vmatprep.subr.mxu0 %v1517
    %1774 = vmatpush1.msra.mxu0 %v1516
    %1775 = vmatprep.subr.mxu0 %v1513
    %1776 = vmatpush1.msra.mxu0 %v1512
    %1777 = vmatprep.subr.mxu0 %v1509
    %1778 = vmatpush1.msra.mxu0 %v1508
    %1779 = vmatprep.subr.mxu0 0.0
    %1780 = vmatpush2.msra.mxu0 0.0
    %1781 = vmatprep.subr.mxu0 0.0
    %1782 = vmatpush2.msra.mxu0 0.0
    %1783 = vmatprep.subr.mxu0 0.0
    %1784 = vmatpush2.msra.mxu0 0.0
    %1785 = vmatprep.subr.mxu0 0.0
    %1786 = vmatpush2.msra.mxu0 0.0
    %1787 = vmatprep.subr.mxu0 0.0
    %1788 = vmatpush2.msra.mxu0 0.0
    %1789 = vmatprep.subr.mxu0 0.0
    %1790 = vmatpush2.msra.mxu0 0.0
    %1791 = vmatprep.subr.mxu0 0.0
    %1792 = vmatpush2.msra.mxu0 0.0
    %1793 = vmatprep.subr.mxu0 0.0
    %1794 = vmatpush2.msra.mxu0 0.0
    %1795 = vmatprep.subr.mxu0 0.0
    %1796 = vmatpush2.msra.mxu0 0.0
    %1797 = vmatprep.subr.mxu0 0.0
    %1798 = vmatpush2.msra.mxu0 0.0
    %1799 = vmatprep.subr.mxu0 0.0
    %1800 = vmatpush2.msra.mxu0 0.0
    %1801 = vmatprep.subr.mxu0 0.0
    %1802 = vmatpush2.msra.mxu0 0.0
    %1803 = vmatprep.subr.mxu0 0.0
    %1804 = vmatpush2.msra.mxu0 0.0
    %1805 = vmatprep.subr.mxu0 0.0
    %1806 = vmatpush2.msra.mxu0 0.0
    %1807 = vmatprep.subr.mxu0 0.0
    %1808 = vmatpush2.msra.mxu0 0.0
    %1809 = vmatprep.subr.mxu0 0.0
    %1810 = vmatpush2.msra.mxu0 0.0
    %1811 = vmatprep.mubr.f32.mxu0 0.0
    %1812 = vmatmul.mubr.f32.gmra.mxu0 %v1674
    %v1813 = vpop.f32.mrf.mxu0
    %v1814 = vadd.f32 %v1668, %v1813
    %v1815 = vpop.f32.mrf.mxu0
    %v1816 = vadd.f32 %v1670, %v1815
    %1817 = vdwg.mxu0
    %v1818 = vld [vmem:[%s11] sm:$0xf]
    %v1820 = vlaneseq
    %v1821 = vshrl.u32 %v1820, 7
    %v1822 = vsub.s32 0, %v1821
    %v1823 = vrot.slane %v1818, %v1822
    %v1824 = vlaneseq
    %v1825 = vshrl.u32 %v1824, 7
    %v1826 = vsub.s32 1, %v1825
    %v1827 = vrot.slane %v1818, %v1826
    %v1828 = vlaneseq
    %v1829 = vshrl.u32 %v1828, 7
    %v1830 = vsub.s32 2, %v1829
    %v1831 = vrot.slane %v1818, %v1830
    %v1832 = vlaneseq
    %v1833 = vshrl.u32 %v1832, 7
    %v1834 = vsub.s32 3, %v1833
    %v1835 = vrot.slane %v1818, %v1834
    %v1840 = vadd.f32 %v1743, %v1823
    %v1841 = vadd.f32 %v1745, %v1827
    %v1842 = vadd.f32 %v1814, %v1831
    %v1843 = vadd.f32 %v1816, %v1835
    %v1844 = vmax.f32 %v1840, 0.0
    %v1845 = vmax.f32 %v1841, 0.0
    %v1846 = vmax.f32 %v1842, 0.0
    %v1847 = vmax.f32 %v1843, 0.0
    %v1848 = vld [vmem:[%s12] sm:$0xff]
    %v1849 = vld [vmem:[%s12 + $0x8] sm:$0xff]
    %v1850 = vld [vmem:[%s12 + $0x10] sm:$0xff]
    %v1851 = vld [vmem:[%s12 + $0x18] sm:$0xff]
    %v1852 = vld [vmem:[%s12 + $0x20] sm:$0xff]
    %v1853 = vld [vmem:[%s12 + $0x28] sm:$0xff]
    %v1854 = vld [vmem:[%s12 + $0x30] sm:$0xff]
    %v1855 = vld [vmem:[%s12 + $0x38] sm:$0xff]
    %v1856 = vld [vmem:[%s12 + $0x40] sm:$0xff]
    %v1857 = vld [vmem:[%s12 + $0x48] sm:$0xff]
    %v1858 = vld [vmem:[%s12 + $0x50] sm:$0xff]
    %v1859 = vld [vmem:[%s12 + $0x58] sm:$0xff]
    %v1860 = vld [vmem:[%s12 + $0x60] sm:$0xff]
    %v1861 = vld [vmem:[%s12 + $0x68] sm:$0xff]
    %v1862 = vld [vmem:[%s12 + $0x70] sm:$0xff]
    %v1863 = vld [vmem:[%s12 + $0x78] sm:$0xff]
    %v1864 = vld [vmem:[%s12 + $0x80] sm:$0xff]
    %v1865 = vld [vmem:[%s12 + $0x88] sm:$0xff]
    %v1866 = vld [vmem:[%s12 + $0x90] sm:$0xff]
    %v1867 = vld [vmem:[%s12 + $0x98] sm:$0xff]
    %v1868 = vld [vmem:[%s12 + $0xa0] sm:$0xff]
    %v1869 = vld [vmem:[%s12 + $0xa8] sm:$0xff]
    %v1870 = vld [vmem:[%s12 + $0xb0] sm:$0xff]
    %v1871 = vld [vmem:[%s12 + $0xb8] sm:$0xff]
    %v1872 = vld [vmem:[%s12 + $0xc0] sm:$0xff]
    %v1873 = vld [vmem:[%s12 + $0xc8] sm:$0xff]
    %v1874 = vld [vmem:[%s12 + $0xd0] sm:$0xff]
    %v1875 = vld [vmem:[%s12 + $0xd8] sm:$0xff]
    %v1876 = vld [vmem:[%s12 + $0xe0] sm:$0xff]
    %v1877 = vld [vmem:[%s12 + $0xe8] sm:$0xff]
    %v1878 = vld [vmem:[%s12 + $0xf0] sm:$0xff]
    %v1879 = vld [vmem:[%s12 + $0xf8] sm:$0xff]
    %v1880 = vld [vmem:[%s12 + $0x100] sm:$0xff]
    %v1881 = vld [vmem:[%s12 + $0x108] sm:$0xff]
    %v1882 = vld [vmem:[%s12 + $0x110] sm:$0xff]
    %v1883 = vld [vmem:[%s12 + $0x118] sm:$0xff]
    %v1884 = vld [vmem:[%s12 + $0x120] sm:$0xff]
    %v1885 = vld [vmem:[%s12 + $0x128] sm:$0xff]
    %v1886 = vld [vmem:[%s12 + $0x130] sm:$0xff]
    %v1887 = vld [vmem:[%s12 + $0x138] sm:$0xff]
    %v1888 = vld [vmem:[%s12 + $0x140] sm:$0xff]
    %v1889 = vld [vmem:[%s12 + $0x148] sm:$0xff]
    %v1890 = vld [vmem:[%s12 + $0x150] sm:$0xff]
    %v1891 = vld [vmem:[%s12 + $0x158] sm:$0xff]
    %v1892 = vld [vmem:[%s12 + $0x160] sm:$0xff]
    %v1893 = vld [vmem:[%s12 + $0x168] sm:$0xff]
    %v1894 = vld [vmem:[%s12 + $0x170] sm:$0xff]
    %v1895 = vld [vmem:[%s12 + $0x178] sm:$0xff]
    %v1896 = vld [vmem:[%s12 + $0x180] sm:$0xff]
    %v1897 = vld [vmem:[%s12 + $0x188] sm:$0xff]
    %v1898 = vld [vmem:[%s12 + $0x190] sm:$0xff]
    %v1899 = vld [vmem:[%s12 + $0x198] sm:$0xff]
    %v1900 = vld [vmem:[%s12 + $0x1a0] sm:$0xff]
    %v1901 = vld [vmem:[%s12 + $0x1a8] sm:$0xff]
    %v1902 = vld [vmem:[%s12 + $0x1b0] sm:$0xff]
    %v1903 = vld [vmem:[%s12 + $0x1b8] sm:$0xff]
    %v1904 = vld [vmem:[%s12 + $0x1c0] sm:$0xff]
    %v1905 = vld [vmem:[%s12 + $0x1c8] sm:$0xff]
    %v1906 = vld [vmem:[%s12 + $0x1d0] sm:$0xff]
    %v1907 = vld [vmem:[%s12 + $0x1d8] sm:$0xff]
    %v1908 = vld [vmem:[%s12 + $0x1e0] sm:$0xff]
    %v1909 = vld [vmem:[%s12 + $0x1e8] sm:$0xff]
    %v1910 = vld [vmem:[%s12 + $0x1f0] sm:$0xff]
    %v1911 = vld [vmem:[%s12 + $0x1f8] sm:$0xff]
    %v1912 = vld [vmem:[%s12 + $0x200] sm:$0xff]
    %v1913 = vld [vmem:[%s12 + $0x208] sm:$0xff]
    %v1914 = vld [vmem:[%s12 + $0x210] sm:$0xff]
    %v1915 = vld [vmem:[%s12 + $0x218] sm:$0xff]
    %v1916 = vld [vmem:[%s12 + $0x220] sm:$0xff]
    %v1917 = vld [vmem:[%s12 + $0x228] sm:$0xff]
    %v1918 = vld [vmem:[%s12 + $0x230] sm:$0xff]
    %v1919 = vld [vmem:[%s12 + $0x238] sm:$0xff]
    %v1920 = vld [vmem:[%s12 + $0x240] sm:$0xff]
    %v1921 = vld [vmem:[%s12 + $0x248] sm:$0xff]
    %v1922 = vld [vmem:[%s12 + $0x250] sm:$0xff]
    %v1923 = vld [vmem:[%s12 + $0x258] sm:$0xff]
    %v1924 = vld [vmem:[%s12 + $0x260] sm:$0xff]
    %v1925 = vld [vmem:[%s12 + $0x268] sm:$0xff]
    %v1926 = vld [vmem:[%s12 + $0x270] sm:$0xff]
    %v1927 = vld [vmem:[%s12 + $0x278] sm:$0xff]
    %v1928 = vld [vmem:[%s12 + $0x280] sm:$0xff]
    %v1929 = vld [vmem:[%s12 + $0x288] sm:$0xff]
    %v1930 = vld [vmem:[%s12 + $0x290] sm:$0xff]
    %v1931 = vld [vmem:[%s12 + $0x298] sm:$0xff]
    %v1932 = vld [vmem:[%s12 + $0x2a0] sm:$0xff]
    %v1933 = vld [vmem:[%s12 + $0x2a8] sm:$0xff]
    %v1934 = vld [vmem:[%s12 + $0x2b0] sm:$0xff]
    %v1935 = vld [vmem:[%s12 + $0x2b8] sm:$0xff]
    %v1936 = vld [vmem:[%s12 + $0x2c0] sm:$0xff]
    %v1937 = vld [vmem:[%s12 + $0x2c8] sm:$0xff]
    %v1938 = vld [vmem:[%s12 + $0x2d0] sm:$0xff]
    %v1939 = vld [vmem:[%s12 + $0x2d8] sm:$0xff]
    %v1940 = vld [vmem:[%s12 + $0x2e0] sm:$0xff]
    %v1941 = vld [vmem:[%s12 + $0x2e8] sm:$0xff]
    %v1942 = vld [vmem:[%s12 + $0x2f0] sm:$0xff]
    %v1943 = vld [vmem:[%s12 + $0x2f8] sm:$0xff]
    %v1944 = vld [vmem:[%s12 + $0x300] sm:$0xff]
    %v1945 = vld [vmem:[%s12 + $0x308] sm:$0xff]
    %v1946 = vld [vmem:[%s12 + $0x310] sm:$0xff]
    %v1947 = vld [vmem:[%s12 + $0x318] sm:$0xff]
    %v1948 = vld [vmem:[%s12 + $0x320] sm:$0xff]
    %v1949 = vld [vmem:[%s12 + $0x328] sm:$0xff]
    %v1950 = vld [vmem:[%s12 + $0x330] sm:$0xff]
    %v1951 = vld [vmem:[%s12 + $0x338] sm:$0xff]
    %v1952 = vld [vmem:[%s12 + $0x340] sm:$0xff]
    %v1953 = vld [vmem:[%s12 + $0x348] sm:$0xff]
    %v1954 = vld [vmem:[%s12 + $0x350] sm:$0xff]
    %v1955 = vld [vmem:[%s12 + $0x358] sm:$0xff]
    %v1956 = vld [vmem:[%s12 + $0x360] sm:$0xff]
    %v1957 = vld [vmem:[%s12 + $0x368] sm:$0xff]
    %v1958 = vld [vmem:[%s12 + $0x370] sm:$0xff]
    %v1959 = vld [vmem:[%s12 + $0x378] sm:$0xff]
    %v1960 = vld [vmem:[%s12 + $0x380] sm:$0xff]
    %v1961 = vld [vmem:[%s12 + $0x388] sm:$0xff]
    %v1962 = vld [vmem:[%s12 + $0x390] sm:$0xff]
    %v1963 = vld [vmem:[%s12 + $0x398] sm:$0xff]
    %v1964 = vld [vmem:[%s12 + $0x3a0] sm:$0xff]
    %v1965 = vld [vmem:[%s12 + $0x3a8] sm:$0xff]
    %v1966 = vld [vmem:[%s12 + $0x3b0] sm:$0xff]
    %v1967 = vld [vmem:[%s12 + $0x3b8] sm:$0xff]
    %v1968 = vld [vmem:[%s12 + $0x3c0] sm:$0xff]
    %v1969 = vld [vmem:[%s12 + $0x3c8] sm:$0xff]
    %v1970 = vld [vmem:[%s12 + $0x3d0] sm:$0xff]
    %v1971 = vld [vmem:[%s12 + $0x3d8] sm:$0xff]
    %v1972 = vld [vmem:[%s12 + $0x3e0] sm:$0xff]
    %v1973 = vld [vmem:[%s12 + $0x3e8] sm:$0xff]
    %v1974 = vld [vmem:[%s12 + $0x3f0] sm:$0xff]
    %v1975 = vld [vmem:[%s12 + $0x3f8] sm:$0xff]
    %v1976 = vld [vmem:[%s12 + $0x400] sm:$0xff]
    %v1977 = vld [vmem:[%s12 + $0x408] sm:$0xff]
    %v1978 = vld [vmem:[%s12 + $0x410] sm:$0xff]
    %v1979 = vld [vmem:[%s12 + $0x418] sm:$0xff]
    %v1980 = vld [vmem:[%s12 + $0x420] sm:$0xff]
    %v1981 = vld [vmem:[%s12 + $0x428] sm:$0xff]
    %v1982 = vld [vmem:[%s12 + $0x430] sm:$0xff]
    %v1983 = vld [vmem:[%s12 + $0x438] sm:$0xff]
    %v1984 = vld [vmem:[%s12 + $0x440] sm:$0xff]
    %v1985 = vld [vmem:[%s12 + $0x448] sm:$0xff]
    %v1986 = vld [vmem:[%s12 + $0x450] sm:$0xff]
    %v1987 = vld [vmem:[%s12 + $0x458] sm:$0xff]
    %v1988 = vld [vmem:[%s12 + $0x460] sm:$0xff]
    %v1989 = vld [vmem:[%s12 + $0x468] sm:$0xff]
    %v1990 = vld [vmem:[%s12 + $0x470] sm:$0xff]
    %v1991 = vld [vmem:[%s12 + $0x478] sm:$0xff]
    %v1992 = vld [vmem:[%s12 + $0x480] sm:$0xff]
    %v1993 = vld [vmem:[%s12 + $0x488] sm:$0xff]
    %v1994 = vld [vmem:[%s12 + $0x490] sm:$0xff]
    %v1995 = vld [vmem:[%s12 + $0x498] sm:$0xff]
    %v1996 = vld [vmem:[%s12 + $0x4a0] sm:$0xff]
    %v1997 = vld [vmem:[%s12 + $0x4a8] sm:$0xff]
    %v1998 = vld [vmem:[%s12 + $0x4b0] sm:$0xff]
    %v1999 = vld [vmem:[%s12 + $0x4b8] sm:$0xff]
    %v2000 = vld [vmem:[%s12 + $0x4c0] sm:$0xff]
    %v2001 = vld [vmem:[%s12 + $0x4c8] sm:$0xff]
    %v2002 = vld [vmem:[%s12 + $0x4d0] sm:$0xff]
    %v2003 = vld [vmem:[%s12 + $0x4d8] sm:$0xff]
    %v2004 = vld [vmem:[%s12 + $0x4e0] sm:$0xff]
    %v2005 = vld [vmem:[%s12 + $0x4e8] sm:$0xff]
    %v2006 = vld [vmem:[%s12 + $0x4f0] sm:$0xff]
    %v2007 = vld [vmem:[%s12 + $0x4f8] sm:$0xff]
    %v2008 = vld [vmem:[%s12 + $0x500] sm:$0xff]
    %v2009 = vld [vmem:[%s12 + $0x508] sm:$0xff]
    %v2010 = vld [vmem:[%s12 + $0x510] sm:$0xff]
    %v2011 = vld [vmem:[%s12 + $0x518] sm:$0xff]
    %v2012 = vld [vmem:[%s12 + $0x520] sm:$0xff]
    %v2013 = vld [vmem:[%s12 + $0x528] sm:$0xff]
    %v2014 = vld [vmem:[%s12 + $0x530] sm:$0xff]
    %v2015 = vld [vmem:[%s12 + $0x538] sm:$0xff]
    %v2016 = vld [vmem:[%s12 + $0x540] sm:$0xff]
    %v2017 = vld [vmem:[%s12 + $0x548] sm:$0xff]
    %v2018 = vld [vmem:[%s12 + $0x550] sm:$0xff]
    %v2019 = vld [vmem:[%s12 + $0x558] sm:$0xff]
    %v2020 = vld [vmem:[%s12 + $0x560] sm:$0xff]
    %v2021 = vld [vmem:[%s12 + $0x568] sm:$0xff]
    %v2022 = vld [vmem:[%s12 + $0x570] sm:$0xff]
    %v2023 = vld [vmem:[%s12 + $0x578] sm:$0xff]
    %v2024 = vld [vmem:[%s12 + $0x580] sm:$0xff]
    %v2025 = vld [vmem:[%s12 + $0x588] sm:$0xff]
    %v2026 = vld [vmem:[%s12 + $0x590] sm:$0xff]
    %v2027 = vld [vmem:[%s12 + $0x598] sm:$0xff]
    %v2028 = vld [vmem:[%s12 + $0x5a0] sm:$0xff]
    %v2029 = vld [vmem:[%s12 + $0x5a8] sm:$0xff]
    %v2030 = vld [vmem:[%s12 + $0x5b0] sm:$0xff]
    %v2031 = vld [vmem:[%s12 + $0x5b8] sm:$0xff]
    %v2032 = vld [vmem:[%s12 + $0x5c0] sm:$0xff]
    %v2033 = vld [vmem:[%s12 + $0x5c8] sm:$0xff]
    %v2034 = vld [vmem:[%s12 + $0x5d0] sm:$0xff]
    %v2035 = vld [vmem:[%s12 + $0x5d8] sm:$0xff]
    %v2036 = vld [vmem:[%s12 + $0x5e0] sm:$0xff]
    %v2037 = vld [vmem:[%s12 + $0x5e8] sm:$0xff]
    %v2038 = vld [vmem:[%s12 + $0x5f0] sm:$0xff]
    %v2039 = vld [vmem:[%s12 + $0x5f8] sm:$0xff]
    %v2040 = vld [vmem:[%s12 + $0x600] sm:$0xff]
    %v2041 = vld [vmem:[%s12 + $0x608] sm:$0xff]
    %v2042 = vld [vmem:[%s12 + $0x610] sm:$0xff]
    %v2043 = vld [vmem:[%s12 + $0x618] sm:$0xff]
    %v2044 = vld [vmem:[%s12 + $0x620] sm:$0xff]
    %v2045 = vld [vmem:[%s12 + $0x628] sm:$0xff]
    %v2046 = vld [vmem:[%s12 + $0x630] sm:$0xff]
    %v2047 = vld [vmem:[%s12 + $0x638] sm:$0xff]
    %v2048 = vld [vmem:[%s12 + $0x640] sm:$0xff]
    %v2049 = vld [vmem:[%s12 + $0x648] sm:$0xff]
    %v2050 = vld [vmem:[%s12 + $0x650] sm:$0xff]
    %v2051 = vld [vmem:[%s12 + $0x658] sm:$0xff]
    %v2052 = vld [vmem:[%s12 + $0x660] sm:$0xff]
    %v2053 = vld [vmem:[%s12 + $0x668] sm:$0xff]
    %v2054 = vld [vmem:[%s12 + $0x670] sm:$0xff]
    %v2055 = vld [vmem:[%s12 + $0x678] sm:$0xff]
    %v2056 = vld [vmem:[%s12 + $0x680] sm:$0xff]
    %v2057 = vld [vmem:[%s12 + $0x688] sm:$0xff]
    %v2058 = vld [vmem:[%s12 + $0x690] sm:$0xff]
    %v2059 = vld [vmem:[%s12 + $0x698] sm:$0xff]
    %v2060 = vld [vmem:[%s12 + $0x6a0] sm:$0xff]
    %v2061 = vld [vmem:[%s12 + $0x6a8] sm:$0xff]
    %v2062 = vld [vmem:[%s12 + $0x6b0] sm:$0xff]
    %v2063 = vld [vmem:[%s12 + $0x6b8] sm:$0xff]
    %v2064 = vld [vmem:[%s12 + $0x6c0] sm:$0xff]
    %v2065 = vld [vmem:[%s12 + $0x6c8] sm:$0xff]
    %v2066 = vld [vmem:[%s12 + $0x6d0] sm:$0xff]
    %v2067 = vld [vmem:[%s12 + $0x6d8] sm:$0xff]
    %v2068 = vld [vmem:[%s12 + $0x6e0] sm:$0xff]
    %v2069 = vld [vmem:[%s12 + $0x6e8] sm:$0xff]
    %v2070 = vld [vmem:[%s12 + $0x6f0] sm:$0xff]
    %v2071 = vld [vmem:[%s12 + $0x6f8] sm:$0xff]
    %v2072 = vld [vmem:[%s12 + $0x700] sm:$0xff]
    %v2073 = vld [vmem:[%s12 + $0x708] sm:$0xff]
    %v2074 = vld [vmem:[%s12 + $0x710] sm:$0xff]
    %v2075 = vld [vmem:[%s12 + $0x718] sm:$0xff]
    %v2076 = vld [vmem:[%s12 + $0x720] sm:$0xff]
    %v2077 = vld [vmem:[%s12 + $0x728] sm:$0xff]
    %v2078 = vld [vmem:[%s12 + $0x730] sm:$0xff]
    %v2079 = vld [vmem:[%s12 + $0x738] sm:$0xff]
    %v2080 = vld [vmem:[%s12 + $0x740] sm:$0xff]
    %v2081 = vld [vmem:[%s12 + $0x748] sm:$0xff]
    %v2082 = vld [vmem:[%s12 + $0x750] sm:$0xff]
    %v2083 = vld [vmem:[%s12 + $0x758] sm:$0xff]
    %v2084 = vld [vmem:[%s12 + $0x760] sm:$0xff]
    %v2085 = vld [vmem:[%s12 + $0x768] sm:$0xff]
    %v2086 = vld [vmem:[%s12 + $0x770] sm:$0xff]
    %v2087 = vld [vmem:[%s12 + $0x778] sm:$0xff]
    %v2088 = vld [vmem:[%s12 + $0x780] sm:$0xff]
    %v2089 = vld [vmem:[%s12 + $0x788] sm:$0xff]
    %v2090 = vld [vmem:[%s12 + $0x790] sm:$0xff]
    %v2091 = vld [vmem:[%s12 + $0x798] sm:$0xff]
    %v2092 = vld [vmem:[%s12 + $0x7a0] sm:$0xff]
    %v2093 = vld [vmem:[%s12 + $0x7a8] sm:$0xff]
    %v2094 = vld [vmem:[%s12 + $0x7b0] sm:$0xff]
    %v2095 = vld [vmem:[%s12 + $0x7b8] sm:$0xff]
    %v2096 = vld [vmem:[%s12 + $0x7c0] sm:$0xff]
    %v2097 = vld [vmem:[%s12 + $0x7c8] sm:$0xff]
    %v2098 = vld [vmem:[%s12 + $0x7d0] sm:$0xff]
    %v2099 = vld [vmem:[%s12 + $0x7d8] sm:$0xff]
    %v2100 = vld [vmem:[%s12 + $0x7e0] sm:$0xff]
    %v2101 = vld [vmem:[%s12 + $0x7e8] sm:$0xff]
    %v2102 = vld [vmem:[%s12 + $0x7f0] sm:$0xff]
    %v2103 = vld [vmem:[%s12 + $0x7f8] sm:$0xff]
    %v2104 = vld [vmem:[%s13] sm:$0xf]
    %v2106 = vlaneseq
    %v2107 = vshrl.u32 %v2106, 7
    %v2108 = vsub.s32 0, %v2107
    %v2109 = vrot.slane %v2104, %v2108
    %v2110 = vlaneseq
    %v2111 = vshrl.u32 %v2110, 7
    %v2112 = vsub.s32 1, %v2111
    %v2113 = vrot.slane %v2104, %v2112
    %v2114 = vlaneseq
    %v2115 = vshrl.u32 %v2114, 7
    %v2116 = vsub.s32 2, %v2115
    %v2117 = vrot.slane %v2104, %v2116
    %v2118 = vlaneseq
    %v2119 = vshrl.u32 %v2118, 7
    %v2120 = vsub.s32 3, %v2119
    %v2121 = vrot.slane %v2104, %v2120
    %2126 = vmatprep.subr.mxu0 %v1909
    %2127 = vmatpush1.msra.mxu0 %v1908
    %2128 = vmatprep.subr.mxu0 %v1905
    %2129 = vmatpush1.msra.mxu0 %v1904
    %2130 = vmatprep.subr.mxu0 %v1901
    %2131 = vmatpush1.msra.mxu0 %v1900
    %2132 = vmatprep.subr.mxu0 %v1897
    %2133 = vmatpush1.msra.mxu0 %v1896
    %2134 = vmatprep.subr.mxu0 %v1893
    %2135 = vmatpush1.msra.mxu0 %v1892
    %2136 = vmatprep.subr.mxu0 %v1889
    %2137 = vmatpush1.msra.mxu0 %v1888
    %2138 = vmatprep.subr.mxu0 %v1885
    %2139 = vmatpush1.msra.mxu0 %v1884
    %2140 = vmatprep.subr.mxu0 %v1881
    %2141 = vmatpush1.msra.mxu0 %v1880
    %2142 = vmatprep.subr.mxu0 %v1877
    %2143 = vmatpush1.msra.mxu0 %v1876
    %2144 = vmatprep.subr.mxu0 %v1873
    %2145 = vmatpush1.msra.mxu0 %v1872
    %2146 = vmatprep.subr.mxu0 %v1869
    %2147 = vmatpush1.msra.mxu0 %v1868
    %2148 = vmatprep.subr.mxu0 %v1865
    %2149 = vmatpush1.msra.mxu0 %v1864
    %2150 = vmatprep.subr.mxu0 %v1861
    %2151 = vmatpush1.msra.mxu0 %v1860
    %2152 = vmatprep.subr.mxu0 %v1857
    %2153 = vmatpush1.msra.mxu0 %v1856
    %2154 = vmatprep.subr.mxu0 %v1853
    %2155 = vmatpush1.msra.mxu0 %v1852
    %2156 = vmatprep.subr.mxu0 %v1849
    %2157 = vmatpush1.msra.mxu0 %v1848
    %2158 = vmatprep.subr.mxu0 %v1973
    %2159 = vmatpush2.msra.mxu0 %v1972
    %2160 = vmatprep.subr.mxu0 %v1969
    %2161 = vmatpush2.msra.mxu0 %v1968
    %2162 = vmatprep.subr.mxu0 %v1965
    %2163 = vmatpush2.msra.mxu0 %v1964
    %2164 = vmatprep.subr.mxu0 %v1961
    %2165 = vmatpush2.msra.mxu0 %v1960
    %2166 = vmatprep.subr.mxu0 %v1957
    %2167 = vmatpush2.msra.mxu0 %v1956
    %2168 = vmatprep.subr.mxu0 %v1953
    %2169 = vmatpush2.msra.mxu0 %v1952
    %2170 = vmatprep.subr.mxu0 %v1949
    %2171 = vmatpush2.msra.mxu0 %v1948
    %2172 = vmatprep.subr.mxu0 %v1945
    %2173 = vmatpush2.msra.mxu0 %v1944
    %2174 = vmatprep.subr.mxu0 %v1941
    %2175 = vmatpush2.msra.mxu0 %v1940
    %2176 = vmatprep.subr.mxu0 %v1937
    %2177 = vmatpush2.msra.mxu0 %v1936
    %2178 = vmatprep.subr.mxu0 %v1933
    %2179 = vmatpush2.msra.mxu0 %v1932
    %2180 = vmatprep.subr.mxu0 %v1929
    %2181 = vmatpush2.msra.mxu0 %v1928
    %2182 = vmatprep.subr.mxu0 %v1925
    %2183 = vmatpush2.msra.mxu0 %v1924
    %2184 = vmatprep.subr.mxu0 %v1921
    %2185 = vmatpush2.msra.mxu0 %v1920
    %2186 = vmatprep.subr.mxu0 %v1917
    %2187 = vmatpush2.msra.mxu0 %v1916
    %2188 = vmatprep.subr.mxu0 %v1913
    %2189 = vmatpush2.msra.mxu0 %v1912
    %2190 = vmatprep.mubr.f32.mxu0 %v1845
    %2191 = vmatmul.mubr.f32.gmra.mxu0 %v1844
    %v2192 = vpop.f32.mrf.mxu0
    %v2193 = vadd.f32 %v2109, %v2192
    %v2194 = vpop.f32.mrf.mxu0
    %v2195 = vadd.f32 %v2113, %v2194
    %2196 = vdwg.mxu0
    %2197 = vmatprep.subr.mxu0 %v2037
    %2198 = vmatpush1.msra.mxu0 %v2036
    %2199 = vmatprep.subr.mxu0 %v2033
    %2200 = vmatpush1.msra.mxu0 %v2032
    %2201 = vmatprep.subr.mxu0 %v2029
    %2202 = vmatpush1.msra.mxu0 %v2028
    %2203 = vmatprep.subr.mxu0 %v2025
    %2204 = vmatpush1.msra.mxu0 %v2024
    %2205 = vmatprep.subr.mxu0 %v2021
    %2206 = vmatpush1.msra.mxu0 %v2020
    %2207 = vmatprep.subr.mxu0 %v2017
    %2208 = vmatpush1.msra.mxu0 %v2016
    %2209 = vmatprep.subr.mxu0 %v2013
    %2210 = vmatpush1.msra.mxu0 %v2012
    %2211 = vmatprep.subr.mxu0 %v2009
    %2212 = vmatpush1.msra.mxu0 %v2008
    %2213 = vmatprep.subr.mxu0 %v2005
    %2214 = vmatpush1.msra.mxu0 %v2004
    %2215 = vmatprep.subr.mxu0 %v2001
    %2216 = vmatpush1.msra.mxu0 %v2000
    %2217 = vmatprep.subr.mxu0 %v1997
    %2218 = vmatpush1.msra.mxu0 %v1996
    %2219 = vmatprep.subr.mxu0 %v1993
    %2220 = vmatpush1.msra.mxu0 %v1992
    %2221 = vmatprep.subr.mxu0 %v1989
    %2222 = vmatpush1.msra.mxu0 %v1988
    %2223 = vmatprep.subr.mxu0 %v1985
    %2224 = vmatpush1.msra.mxu0 %v1984
    %2225 = vmatprep.subr.mxu0 %v1981
    %2226 = vmatpush1.msra.mxu0 %v1980
    %2227 = vmatprep.subr.mxu0 %v1977
    %2228 = vmatpush1.msra.mxu0 %v1976
    %2229 = vmatprep.subr.mxu0 %v2101
    %2230 = vmatpush2.msra.mxu0 %v2100
    %2231 = vmatprep.subr.mxu0 %v2097
    %2232 = vmatpush2.msra.mxu0 %v2096
    %2233 = vmatprep.subr.mxu0 %v2093
    %2234 = vmatpush2.msra.mxu0 %v2092
    %2235 = vmatprep.subr.mxu0 %v2089
    %2236 = vmatpush2.msra.mxu0 %v2088
    %2237 = vmatprep.subr.mxu0 %v2085
    %2238 = vmatpush2.msra.mxu0 %v2084
    %2239 = vmatprep.subr.mxu0 %v2081
    %2240 = vmatpush2.msra.mxu0 %v2080
    %2241 = vmatprep.subr.mxu0 %v2077
    %2242 = vmatpush2.msra.mxu0 %v2076
    %2243 = vmatprep.subr.mxu0 %v2073
    %2244 = vmatpush2.msra.mxu0 %v2072
    %2245 = vmatprep.subr.mxu0 %v2069
    %2246 = vmatpush2.msra.mxu0 %v2068
    %2247 = vmatprep.subr.mxu0 %v2065
    %2248 = vmatpush2.msra.mxu0 %v2064
    %2249 = vmatprep.subr.mxu0 %v2061
    %2250 = vmatpush2.msra.mxu0 %v2060
    %2251 = vmatprep.subr.mxu0 %v2057
    %2252 = vmatpush2.msra.mxu0 %v2056
    %2253 = vmatprep.subr.mxu0 %v2053
    %2254 = vmatpush2.msra.mxu0 %v2052
    %2255 = vmatprep.subr.mxu0 %v2049
    %2256 = vmatpush2.msra.mxu0 %v2048
    %2257 = vmatprep.subr.mxu0 %v2045
    %2258 = vmatpush2.msra.mxu0 %v2044
    %2259 = vmatprep.subr.mxu0 %v2041
    %2260 = vmatpush2.msra.mxu0 %v2040
    %2261 = vmatprep.mubr.f32.mxu0 %v1847
    %2262 = vmatmul.mubr.f32.gmra.mxu0 %v1846
    %v2263 = vpop.f32.mrf.mxu0
    %v2264 = vadd.f32 %v2193, %v2263
    %v2265 = vpop.f32.mrf.mxu0
    %v2266 = vadd.f32 %v2195, %v2265
    %2267 = vdwg.mxu0
    %2268 = vmatprep.subr.mxu0 %v1911
    %2269 = vmatpush1.msra.mxu0 %v1910
    %2270 = vmatprep.subr.mxu0 %v1907
    %2271 = vmatpush1.msra.mxu0 %v1906
    %2272 = vmatprep.subr.mxu0 %v1903
    %2273 = vmatpush1.msra.mxu0 %v1902
    %2274 = vmatprep.subr.mxu0 %v1899
    %2275 = vmatpush1.msra.mxu0 %v1898
    %2276 = vmatprep.subr.mxu0 %v1895
    %2277 = vmatpush1.msra.mxu0 %v1894
    %2278 = vmatprep.subr.mxu0 %v1891
    %2279 = vmatpush1.msra.mxu0 %v1890
    %2280 = vmatprep.subr.mxu0 %v1887
    %2281 = vmatpush1.msra.mxu0 %v1886
    %2282 = vmatprep.subr.mxu0 %v1883
    %2283 = vmatpush1.msra.mxu0 %v1882
    %2284 = vmatprep.subr.mxu0 %v1879
    %2285 = vmatpush1.msra.mxu0 %v1878
    %2286 = vmatprep.subr.mxu0 %v1875
    %2287 = vmatpush1.msra.mxu0 %v1874
    %2288 = vmatprep.subr.mxu0 %v1871
    %2289 = vmatpush1.msra.mxu0 %v1870
    %2290 = vmatprep.subr.mxu0 %v1867
    %2291 = vmatpush1.msra.mxu0 %v1866
    %2292 = vmatprep.subr.mxu0 %v1863
    %2293 = vmatpush1.msra.mxu0 %v1862
    %2294 = vmatprep.subr.mxu0 %v1859
    %2295 = vmatpush1.msra.mxu0 %v1858
    %2296 = vmatprep.subr.mxu0 %v1855
    %2297 = vmatpush1.msra.mxu0 %v1854
    %2298 = vmatprep.subr.mxu0 %v1851
    %2299 = vmatpush1.msra.mxu0 %v1850
    %2300 = vmatprep.subr.mxu0 %v1975
    %2301 = vmatpush2.msra.mxu0 %v1974
    %2302 = vmatprep.subr.mxu0 %v1971
    %2303 = vmatpush2.msra.mxu0 %v1970
    %2304 = vmatprep.subr.mxu0 %v1967
    %2305 = vmatpush2.msra.mxu0 %v1966
    %2306 = vmatprep.subr.mxu0 %v1963
    %2307 = vmatpush2.msra.mxu0 %v1962
    %2308 = vmatprep.subr.mxu0 %v1959
    %2309 = vmatpush2.msra.mxu0 %v1958
    %2310 = vmatprep.subr.mxu0 %v1955
    %2311 = vmatpush2.msra.mxu0 %v1954
    %2312 = vmatprep.subr.mxu0 %v1951
    %2313 = vmatpush2.msra.mxu0 %v1950
    %2314 = vmatprep.subr.mxu0 %v1947
    %2315 = vmatpush2.msra.mxu0 %v1946
    %2316 = vmatprep.subr.mxu0 %v1943
    %2317 = vmatpush2.msra.mxu0 %v1942
    %2318 = vmatprep.subr.mxu0 %v1939
    %2319 = vmatpush2.msra.mxu0 %v1938
    %2320 = vmatprep.subr.mxu0 %v1935
    %2321 = vmatpush2.msra.mxu0 %v1934
    %2322 = vmatprep.subr.mxu0 %v1931
    %2323 = vmatpush2.msra.mxu0 %v1930
    %2324 = vmatprep.subr.mxu0 %v1927
    %2325 = vmatpush2.msra.mxu0 %v1926
    %2326 = vmatprep.subr.mxu0 %v1923
    %2327 = vmatpush2.msra.mxu0 %v1922
    %2328 = vmatprep.subr.mxu0 %v1919
    %2329 = vmatpush2.msra.mxu0 %v1918
    %2330 = vmatprep.subr.mxu0 %v1915
    %2331 = vmatpush2.msra.mxu0 %v1914
    %2332 = vmatprep.mubr.f32.mxu0 %v1845
    %2333 = vmatmul.mubr.f32.gmra.mxu0 %v1844
    %v2334 = vpop.f32.mrf.mxu0
    %v2335 = vadd.f32 %v2117, %v2334
    %v2336 = vpop.f32.mrf.mxu0
    %v2337 = vadd.f32 %v2121, %v2336
    %2338 = vdwg.mxu0
    %2339 = vmatprep.subr.mxu0 %v2039
    %2340 = vmatpush1.msra.mxu0 %v2038
    %2341 = vmatprep.subr.mxu0 %v2035
    %2342 = vmatpush1.msra.mxu0 %v2034
    %2343 = vmatprep.subr.mxu0 %v2031
    %2344 = vmatpush1.msra.mxu0 %v2030
    %2345 = vmatprep.subr.mxu0 %v2027
    %2346 = vmatpush1.msra.mxu0 %v2026
    %2347 = vmatprep.subr.mxu0 %v2023
    %2348 = vmatpush1.msra.mxu0 %v2022
    %2349 = vmatprep.subr.mxu0 %v2019
    %2350 = vmatpush1.msra.mxu0 %v2018
    %2351 = vmatprep.subr.mxu0 %v2015
    %2352 = vmatpush1.msra.mxu0 %v2014
    %2353 = vmatprep.subr.mxu0 %v2011
    %2354 = vmatpush1.msra.mxu0 %v2010
    %2355 = vmatprep.subr.mxu0 %v2007
    %2356 = vmatpush1.msra.mxu0 %v2006
    %2357 = vmatprep.subr.mxu0 %v2003
    %2358 = vmatpush1.msra.mxu0 %v2002
    %2359 = vmatprep.subr.mxu0 %v1999
    %2360 = vmatpush1.msra.mxu0 %v1998
    %2361 = vmatprep.subr.mxu0 %v1995
    %2362 = vmatpush1.msra.mxu0 %v1994
    %2363 = vmatprep.subr.mxu0 %v1991
    %2364 = vmatpush1.msra.mxu0 %v1990
    %2365 = vmatprep.subr.mxu0 %v1987
    %2366 = vmatpush1.msra.mxu0 %v1986
    %2367 = vmatprep.subr.mxu0 %v1983
    %2368 = vmatpush1.msra.mxu0 %v1982
    %2369 = vmatprep.subr.mxu0 %v1979
    %2370 = vmatpush1.msra.mxu0 %v1978
    %2371 = vmatprep.subr.mxu0 %v2103
    %2372 = vmatpush2.msra.mxu0 %v2102
    %2373 = vmatprep.subr.mxu0 %v2099
    %2374 = vmatpush2.msra.mxu0 %v2098
    %2375 = vmatprep.subr.mxu0 %v2095
    %2376 = vmatpush2.msra.mxu0 %v2094
    %2377 = vmatprep.subr.mxu0 %v2091
    %2378 = vmatpush2.msra.mxu0 %v2090
    %2379 = vmatprep.subr.mxu0 %v2087
    %2380 = vmatpush2.msra.mxu0 %v2086
    %2381 = vmatprep.subr.mxu0 %v2083
    %2382 = vmatpush2.msra.mxu0 %v2082
    %2383 = vmatprep.subr.mxu0 %v2079
    %2384 = vmatpush2.msra.mxu0 %v2078
    %2385 = vmatprep.subr.mxu0 %v2075
    %2386 = vmatpush2.msra.mxu0 %v2074
    %2387 = vmatprep.subr.mxu0 %v2071
    %2388 = vmatpush2.msra.mxu0 %v2070
    %2389 = vmatprep.subr.mxu0 %v2067
    %2390 = vmatpush2.msra.mxu0 %v2066
    %2391 = vmatprep.subr.mxu0 %v2063
    %2392 = vmatpush2.msra.mxu0 %v2062
    %2393 = vmatprep.subr.mxu0 %v2059
    %2394 = vmatpush2.msra.mxu0 %v2058
    %2395 = vmatprep.subr.mxu0 %v2055
    %2396 = vmatpush2.msra.mxu0 %v2054
    %2397 = vmatprep.subr.mxu0 %v2051
    %2398 = vmatpush2.msra.mxu0 %v2050
    %2399 = vmatprep.subr.mxu0 %v2047
    %2400 = vmatpush2.msra.mxu0 %v2046
    %2401 = vmatprep.subr.mxu0 %v2043
    %2402 = vmatpush2.msra.mxu0 %v2042
    %2403 = vmatprep.mubr.f32.mxu0 %v1847
    %2404 = vmatmul.mubr.f32.gmra.mxu0 %v1846
    %v2405 = vpop.f32.mrf.mxu0
    %v2406 = vadd.f32 %v2335, %v2405
    %v2407 = vpop.f32.mrf.mxu0
    %v2408 = vadd.f32 %v2337, %v2407
    %2409 = vdwg.mxu0
    %v2410 = vmax.f32 %v2264, 0.0
    %v2411 = vmax.f32 %v2266, 0.0
    %v2412 = vmax.f32 %v2406, 0.0
    %v2413 = vmax.f32 %v2408, 0.0
    %v2414 = vld [vmem:[%s14] sm:$0xff]
    %v2415 = vld [vmem:[%s14 + $0x8] sm:$0xff]
    %v2416 = vld [vmem:[%s14 + $0x10] sm:$0xff]
    %v2417 = vld [vmem:[%s14 + $0x18] sm:$0xff]
    %v2418 = vld [vmem:[%s14 + $0x20] sm:$0xff]
    %v2419 = vld [vmem:[%s14 + $0x28] sm:$0xff]
    %v2420 = vld [vmem:[%s14 + $0x30] sm:$0xff]
    %v2421 = vld [vmem:[%s14 + $0x38] sm:$0xff]
    %v2422 = vld [vmem:[%s14 + $0x40] sm:$0xff]
    %v2423 = vld [vmem:[%s14 + $0x48] sm:$0xff]
    %v2424 = vld [vmem:[%s14 + $0x50] sm:$0xff]
    %v2425 = vld [vmem:[%s14 + $0x58] sm:$0xff]
    %v2426 = vld [vmem:[%s14 + $0x60] sm:$0xff]
    %v2427 = vld [vmem:[%s14 + $0x68] sm:$0xff]
    %v2428 = vld [vmem:[%s14 + $0x70] sm:$0xff]
    %v2429 = vld [vmem:[%s14 + $0x78] sm:$0xff]
    %v2430 = vld [vmem:[%s14 + $0x80] sm:$0xff]
    %v2431 = vld [vmem:[%s14 + $0x88] sm:$0xff]
    %v2432 = vld [vmem:[%s14 + $0x90] sm:$0xff]
    %v2433 = vld [vmem:[%s14 + $0x98] sm:$0xff]
    %v2434 = vld [vmem:[%s14 + $0xa0] sm:$0xff]
    %v2435 = vld [vmem:[%s14 + $0xa8] sm:$0xff]
    %v2436 = vld [vmem:[%s14 + $0xb0] sm:$0xff]
    %v2437 = vld [vmem:[%s14 + $0xb8] sm:$0xff]
    %v2438 = vld [vmem:[%s14 + $0xc0] sm:$0xff]
    %v2439 = vld [vmem:[%s14 + $0xc8] sm:$0xff]
    %v2440 = vld [vmem:[%s14 + $0xd0] sm:$0xff]
    %v2441 = vld [vmem:[%s14 + $0xd8] sm:$0xff]
    %v2442 = vld [vmem:[%s14 + $0xe0] sm:$0xff]
    %v2443 = vld [vmem:[%s14 + $0xe8] sm:$0xff]
    %v2444 = vld [vmem:[%s14 + $0xf0] sm:$0xff]
    %v2445 = vld [vmem:[%s14 + $0xf8] sm:$0xff]
    %v2446 = vld [vmem:[%s14 + $0x100] sm:$0xff]
    %v2447 = vld [vmem:[%s14 + $0x108] sm:$0xff]
    %v2448 = vld [vmem:[%s14 + $0x110] sm:$0xff]
    %v2449 = vld [vmem:[%s14 + $0x118] sm:$0xff]
    %v2450 = vld [vmem:[%s14 + $0x120] sm:$0xff]
    %v2451 = vld [vmem:[%s14 + $0x128] sm:$0xff]
    %v2452 = vld [vmem:[%s14 + $0x130] sm:$0xff]
    %v2453 = vld [vmem:[%s14 + $0x138] sm:$0xff]
    %v2454 = vld [vmem:[%s14 + $0x140] sm:$0xff]
    %v2455 = vld [vmem:[%s14 + $0x148] sm:$0xff]
    %v2456 = vld [vmem:[%s14 + $0x150] sm:$0xff]
    %v2457 = vld [vmem:[%s14 + $0x158] sm:$0xff]
    %v2458 = vld [vmem:[%s14 + $0x160] sm:$0xff]
    %v2459 = vld [vmem:[%s14 + $0x168] sm:$0xff]
    %v2460 = vld [vmem:[%s14 + $0x170] sm:$0xff]
    %v2461 = vld [vmem:[%s14 + $0x178] sm:$0xff]
    %v2462 = vld [vmem:[%s14 + $0x180] sm:$0xff]
    %v2463 = vld [vmem:[%s14 + $0x188] sm:$0xff]
    %v2464 = vld [vmem:[%s14 + $0x190] sm:$0xff]
    %v2465 = vld [vmem:[%s14 + $0x198] sm:$0xff]
    %v2466 = vld [vmem:[%s14 + $0x1a0] sm:$0xff]
    %v2467 = vld [vmem:[%s14 + $0x1a8] sm:$0xff]
    %v2468 = vld [vmem:[%s14 + $0x1b0] sm:$0xff]
    %v2469 = vld [vmem:[%s14 + $0x1b8] sm:$0xff]
    %v2470 = vld [vmem:[%s14 + $0x1c0] sm:$0xff]
    %v2471 = vld [vmem:[%s14 + $0x1c8] sm:$0xff]
    %v2472 = vld [vmem:[%s14 + $0x1d0] sm:$0xff]
    %v2473 = vld [vmem:[%s14 + $0x1d8] sm:$0xff]
    %v2474 = vld [vmem:[%s14 + $0x1e0] sm:$0xff]
    %v2475 = vld [vmem:[%s14 + $0x1e8] sm:$0xff]
    %v2476 = vld [vmem:[%s14 + $0x1f0] sm:$0xff]
    %v2477 = vld [vmem:[%s14 + $0x1f8] sm:$0xff]
    %v2478 = vld [vmem:[%s15] sm:$0x1]
    %v2480 = vlaneseq
    %v2481 = vshrl.u32 %v2480, 7
    %v2482 = vsub.s32 0, %v2481
    %v2483 = vrot.slane %v2478, %v2482
    %2485 = vmatprep.subr.mxu0 0.0
    %2486 = vmatpush1.msra.mxu0 %v2429
    %2487 = vmatprep.subr.mxu0 0.0
    %2488 = vmatpush1.msra.mxu0 %v2428
    %2489 = vmatprep.subr.mxu0 0.0
    %2490 = vmatpush1.msra.mxu0 %v2427
    %2491 = vmatprep.subr.mxu0 0.0
    %2492 = vmatpush1.msra.mxu0 %v2426
    %2493 = vmatprep.subr.mxu0 0.0
    %2494 = vmatpush1.msra.mxu0 %v2425
    %2495 = vmatprep.subr.mxu0 0.0
    %2496 = vmatpush1.msra.mxu0 %v2424
    %2497 = vmatprep.subr.mxu0 0.0
    %2498 = vmatpush1.msra.mxu0 %v2423
    %2499 = vmatprep.subr.mxu0 0.0
    %2500 = vmatpush1.msra.mxu0 %v2422
    %2501 = vmatprep.subr.mxu0 0.0
    %2502 = vmatpush1.msra.mxu0 %v2421
    %2503 = vmatprep.subr.mxu0 0.0
    %2504 = vmatpush1.msra.mxu0 %v2420
    %2505 = vmatprep.subr.mxu0 0.0
    %2506 = vmatpush1.msra.mxu0 %v2419
    %2507 = vmatprep.subr.mxu0 0.0
    %2508 = vmatpush1.msra.mxu0 %v2418
    %2509 = vmatprep.subr.mxu0 0.0
    %2510 = vmatpush1.msra.mxu0 %v2417
    %2511 = vmatprep.subr.mxu0 0.0
    %2512 = vmatpush1.msra.mxu0 %v2416
    %2513 = vmatprep.subr.mxu0 0.0
    %2514 = vmatpush1.msra.mxu0 %v2415
    %2515 = vmatprep.subr.mxu0 0.0
    %2516 = vmatpush1.msra.mxu0 %v2414
    %2517 = vmatprep.subr.mxu0 0.0
    %2518 = vmatpush2.msra.mxu0 %v2445
    %2519 = vmatprep.subr.mxu0 0.0
    %2520 = vmatpush2.msra.mxu0 %v2444
    %2521 = vmatprep.subr.mxu0 0.0
    %2522 = vmatpush2.msra.mxu0 %v2443
    %2523 = vmatprep.subr.mxu0 0.0
    %2524 = vmatpush2.msra.mxu0 %v2442
    %2525 = vmatprep.subr.mxu0 0.0
    %2526 = vmatpush2.msra.mxu0 %v2441
    %2527 = vmatprep.subr.mxu0 0.0
    %2528 = vmatpush2.msra.mxu0 %v2440
    %2529 = vmatprep.subr.mxu0 0.0
    %2530 = vmatpush2.msra.mxu0 %v2439
    %2531 = vmatprep.subr.mxu0 0.0
    %2532 = vmatpush2.msra.mxu0 %v2438
    %2533 = vmatprep.subr.mxu0 0.0
    %2534 = vmatpush2.msra.mxu0 %v2437
    %2535 = vmatprep.subr.mxu0 0.0
    %2536 = vmatpush2.msra.mxu0 %v2436
    %2537 = vmatprep.subr.mxu0 0.0
    %2538 = vmatpush2.msra.mxu0 %v2435
    %2539 = vmatprep.subr.mxu0 0.0
    %2540 = vmatpush2.msra.mxu0 %v2434
    %2541 = vmatprep.subr.mxu0 0.0
    %2542 = vmatpush2.msra.mxu0 %v2433
    %2543 = vmatprep.subr.mxu0 0.0
    %2544 = vmatpush2.msra.mxu0 %v2432
    %2545 = vmatprep.subr.mxu0 0.0
    %2546 = vmatpush2.msra.mxu0 %v2431
    %2547 = vmatprep.subr.mxu0 0.0
    %2548 = vmatpush2.msra.mxu0 %v2430
    %2549 = vmatprep.mubr.f32.mxu0 %v2411
    %2550 = vmatmul.mubr.f32.gmra.mxu0 %v2410
    %v2551 = vpop.f32.mrf.mxu0
    %v2552 = vadd.f32 %v2483, %v2551
    %v2553 = vpop.f32.mrf.mxu0
    %2554 = vdwg.mxu0
    %2555 = vmatprep.subr.mxu0 0.0
    %2556 = vmatpush1.msra.mxu0 %v2461
    %2557 = vmatprep.subr.mxu0 0.0
    %2558 = vmatpush1.msra.mxu0 %v2460
    %2559 = vmatprep.subr.mxu0 0.0
    %2560 = vmatpush1.msra.mxu0 %v2459
    %2561 = vmatprep.subr.mxu0 0.0
    %2562 = vmatpush1.msra.mxu0 %v2458
    %2563 = vmatprep.subr.mxu0 0.0
    %2564 = vmatpush1.msra.mxu0 %v2457
    %2565 = vmatprep.subr.mxu0 0.0
    %2566 = vmatpush1.msra.mxu0 %v2456
    %2567 = vmatprep.subr.mxu0 0.0
    %2568 = vmatpush1.msra.mxu0 %v2455
    %2569 = vmatprep.subr.mxu0 0.0
    %2570 = vmatpush1.msra.mxu0 %v2454
    %2571 = vmatprep.subr.mxu0 0.0
    %2572 = vmatpush1.msra.mxu0 %v2453
    %2573 = vmatprep.subr.mxu0 0.0
    %2574 = vmatpush1.msra.mxu0 %v2452
    %2575 = vmatprep.subr.mxu0 0.0
    %2576 = vmatpush1.msra.mxu0 %v2451
    %2577 = vmatprep.subr.mxu0 0.0
    %2578 = vmatpush1.msra.mxu0 %v2450
    %2579 = vmatprep.subr.mxu0 0.0
    %2580 = vmatpush1.msra.mxu0 %v2449
    %2581 = vmatprep.subr.mxu0 0.0
    %2582 = vmatpush1.msra.mxu0 %v2448
    %2583 = vmatprep.subr.mxu0 0.0
    %2584 = vmatpush1.msra.mxu0 %v2447
    %2585 = vmatprep.subr.mxu0 0.0
    %2586 = vmatpush1.msra.mxu0 %v2446
    %2587 = vmatprep.subr.mxu0 0.0
    %2588 = vmatpush2.msra.mxu0 %v2477
    %2589 = vmatprep.subr.mxu0 0.0
    %2590 = vmatpush2.msra.mxu0 %v2476
    %2591 = vmatprep.subr.mxu0 0.0
    %2592 = vmatpush2.msra.mxu0 %v2475
    %2593 = vmatprep.subr.mxu0 0.0
    %2594 = vmatpush2.msra.mxu0 %v2474
    %2595 = vmatprep.subr.mxu0 0.0
    %2596 = vmatpush2.msra.mxu0 %v2473
    %2597 = vmatprep.subr.mxu0 0.0
    %2598 = vmatpush2.msra.mxu0 %v2472
    %2599 = vmatprep.subr.mxu0 0.0
    %2600 = vmatpush2.msra.mxu0 %v2471
    %2601 = vmatprep.subr.mxu0 0.0
    %2602 = vmatpush2.msra.mxu0 %v2470
    %2603 = vmatprep.subr.mxu0 0.0
    %2604 = vmatpush2.msra.mxu0 %v2469
    %2605 = vmatprep.subr.mxu0 0.0
    %2606 = vmatpush2.msra.mxu0 %v2468
    %2607 = vmatprep.subr.mxu0 0.0
    %2608 = vmatpush2.msra.mxu0 %v2467
    %2609 = vmatprep.subr.mxu0 0.0
    %2610 = vmatpush2.msra.mxu0 %v2466
    %2611 = vmatprep.subr.mxu0 0.0
    %2612 = vmatpush2.msra.mxu0 %v2465
    %2613 = vmatprep.subr.mxu0 0.0
    %2614 = vmatpush2.msra.mxu0 %v2464
    %2615 = vmatprep.subr.mxu0 0.0
    %2616 = vmatpush2.msra.mxu0 %v2463
    %2617 = vmatprep.subr.mxu0 0.0
    %2618 = vmatpush2.msra.mxu0 %v2462
    %2619 = vmatprep.mubr.f32.mxu0 %v2413
    %2620 = vmatmul.mubr.f32.gmra.mxu0 %v2412
    %v2621 = vpop.f32.mrf.mxu0
    %v2622 = vadd.f32 %v2552, %v2621
    %v2623 = vpop.f32.mrf.mxu0
    %2624 = vdwg.mxu0
    %v2625 = vld [vmem:[%s16] sm:$0xff]
    %v2626 = vld [vmem:[%s16 + $0x8] sm:$0xff]
    %v2627 = vld [vmem:[%s16 + $0x10] sm:$0xff]
    %v2628 = vld [vmem:[%s16 + $0x18] sm:$0xff]
    %v2629 = vld [vmem:[%s16 + $0x20] sm:$0xff]
    %v2630 = vld [vmem:[%s16 + $0x28] sm:$0xff]
    %v2631 = vld [vmem:[%s16 + $0x30] sm:$0xff]
    %v2632 = vld [vmem:[%s16 + $0x38] sm:$0xff]
    %v2633 = vld [vmem:[%s16 + $0x40] sm:$0xff]
    %v2634 = vld [vmem:[%s16 + $0x48] sm:$0xff]
    %v2635 = vld [vmem:[%s16 + $0x50] sm:$0xff]
    %v2636 = vld [vmem:[%s16 + $0x58] sm:$0xff]
    %v2637 = vld [vmem:[%s16 + $0x60] sm:$0xff]
    %v2638 = vld [vmem:[%s16 + $0x68] sm:$0xff]
    %v2639 = vld [vmem:[%s16 + $0x70] sm:$0xff]
    %v2640 = vld [vmem:[%s16 + $0x78] sm:$0xff]
    %v2641 = vld [vmem:[%s16 + $0x80] sm:$0xff]
    %v2642 = vld [vmem:[%s16 + $0x88] sm:$0xff]
    %v2643 = vld [vmem:[%s16 + $0x90] sm:$0xff]
    %v2644 = vld [vmem:[%s16 + $0x98] sm:$0xff]
    %v2645 = vld [vmem:[%s16 + $0xa0] sm:$0xff]
    %v2646 = vld [vmem:[%s16 + $0xa8] sm:$0xff]
    %v2647 = vld [vmem:[%s16 + $0xb0] sm:$0xff]
    %v2648 = vld [vmem:[%s16 + $0xb8] sm:$0xff]
    %v2649 = vld [vmem:[%s16 + $0xc0] sm:$0xff]
    %v2650 = vld [vmem:[%s16 + $0xc8] sm:$0xff]
    %v2651 = vld [vmem:[%s16 + $0xd0] sm:$0xff]
    %v2652 = vld [vmem:[%s16 + $0xd8] sm:$0xff]
    %v2653 = vld [vmem:[%s16 + $0xe0] sm:$0xff]
    %v2654 = vld [vmem:[%s16 + $0xe8] sm:$0xff]
    %v2655 = vld [vmem:[%s16 + $0xf0] sm:$0xff]
    %v2656 = vld [vmem:[%s16 + $0xf8] sm:$0xff]
    %v2657 = vld [vmem:[%s16 + $0x100] sm:$0xff]
    %v2658 = vld [vmem:[%s16 + $0x108] sm:$0xff]
    %v2659 = vld [vmem:[%s16 + $0x110] sm:$0xff]
    %v2660 = vld [vmem:[%s16 + $0x118] sm:$0xff]
    %v2661 = vld [vmem:[%s16 + $0x120] sm:$0xff]
    %v2662 = vld [vmem:[%s16 + $0x128] sm:$0xff]
    %v2663 = vld [vmem:[%s16 + $0x130] sm:$0xff]
    %v2664 = vld [vmem:[%s16 + $0x138] sm:$0xff]
    %v2665 = vld [vmem:[%s16 + $0x140] sm:$0xff]
    %v2666 = vld [vmem:[%s16 + $0x148] sm:$0xff]
    %v2667 = vld [vmem:[%s16 + $0x150] sm:$0xff]
    %v2668 = vld [vmem:[%s16 + $0x158] sm:$0xff]
    %v2669 = vld [vmem:[%s16 + $0x160] sm:$0xff]
    %v2670 = vld [vmem:[%s16 + $0x168] sm:$0xff]
    %v2671 = vld [vmem:[%s16 + $0x170] sm:$0xff]
    %v2672 = vld [vmem:[%s16 + $0x178] sm:$0xff]
    %v2673 = vld [vmem:[%s16 + $0x180] sm:$0xff]
    %v2674 = vld [vmem:[%s16 + $0x188] sm:$0xff]
    %v2675 = vld [vmem:[%s16 + $0x190] sm:$0xff]
    %v2676 = vld [vmem:[%s16 + $0x198] sm:$0xff]
    %v2677 = vld [vmem:[%s16 + $0x1a0] sm:$0xff]
    %v2678 = vld [vmem:[%s16 + $0x1a8] sm:$0xff]
    %v2679 = vld [vmem:[%s16 + $0x1b0] sm:$0xff]
    %v2680 = vld [vmem:[%s16 + $0x1b8] sm:$0xff]
    %v2681 = vld [vmem:[%s16 + $0x1c0] sm:$0xff]
    %v2682 = vld [vmem:[%s16 + $0x1c8] sm:$0xff]
    %v2683 = vld [vmem:[%s16 + $0x1d0] sm:$0xff]
    %v2684 = vld [vmem:[%s16 + $0x1d8] sm:$0xff]
    %v2685 = vld [vmem:[%s16 + $0x1e0] sm:$0xff]
    %v2686 = vld [vmem:[%s16 + $0x1e8] sm:$0xff]
    %v2687 = vld [vmem:[%s16 + $0x1f0] sm:$0xff]
    %v2688 = vld [vmem:[%s16 + $0x1f8] sm:$0xff]
    %v2689 = vld [vmem:[%s17] sm:$0x1]
    %v2691 = vlaneseq
    %v2692 = vshrl.u32 %v2691, 7
    %v2693 = vsub.s32 0, %v2692
    %v2694 = vrot.slane %v2689, %v2693
    %2696 = vmatprep.subr.mxu0 0.0
    %2697 = vmatpush1.msra.mxu0 %v2640
    %2698 = vmatprep.subr.mxu0 0.0
    %2699 = vmatpush1.msra.mxu0 %v2639
    %2700 = vmatprep.subr.mxu0 0.0
    %2701 = vmatpush1.msra.mxu0 %v2638
    %2702 = vmatprep.subr.mxu0 0.0
    %2703 = vmatpush1.msra.mxu0 %v2637
    %2704 = vmatprep.subr.mxu0 0.0
    %2705 = vmatpush1.msra.mxu0 %v2636
    %2706 = vmatprep.subr.mxu0 0.0
    %2707 = vmatpush1.msra.mxu0 %v2635
    %2708 = vmatprep.subr.mxu0 0.0
    %2709 = vmatpush1.msra.mxu0 %v2634
    %2710 = vmatprep.subr.mxu0 0.0
    %2711 = vmatpush1.msra.mxu0 %v2633
    %2712 = vmatprep.subr.mxu0 0.0
    %2713 = vmatpush1.msra.mxu0 %v2632
    %2714 = vmatprep.subr.mxu0 0.0
    %2715 = vmatpush1.msra.mxu0 %v2631
    %2716 = vmatprep.subr.mxu0 0.0
    %2717 = vmatpush1.msra.mxu0 %v2630
    %2718 = vmatprep.subr.mxu0 0.0
    %2719 = vmatpush1.msra.mxu0 %v2629
    %2720 = vmatprep.subr.mxu0 0.0
    %2721 = vmatpush1.msra.mxu0 %v2628
    %2722 = vmatprep.subr.mxu0 0.0
    %2723 = vmatpush1.msra.mxu0 %v2627
    %2724 = vmatprep.subr.mxu0 0.0
    %2725 = vmatpush1.msra.mxu0 %v2626
    %2726 = vmatprep.subr.mxu0 0.0
    %2727 = vmatpush1.msra.mxu0 %v2625
    %2728 = vmatprep.subr.mxu0 0.0
    %2729 = vmatpush2.msra.mxu0 %v2656
    %2730 = vmatprep.subr.mxu0 0.0
    %2731 = vmatpush2.msra.mxu0 %v2655
    %2732 = vmatprep.subr.mxu0 0.0
    %2733 = vmatpush2.msra.mxu0 %v2654
    %2734 = vmatprep.subr.mxu0 0.0
    %2735 = vmatpush2.msra.mxu0 %v2653
    %2736 = vmatprep.subr.mxu0 0.0
    %2737 = vmatpush2.msra.mxu0 %v2652
    %2738 = vmatprep.subr.mxu0 0.0
    %2739 = vmatpush2.msra.mxu0 %v2651
    %2740 = vmatprep.subr.mxu0 0.0
    %2741 = vmatpush2.msra.mxu0 %v2650
    %2742 = vmatprep.subr.mxu0 0.0
    %2743 = vmatpush2.msra.mxu0 %v2649
    %2744 = vmatprep.subr.mxu0 0.0
    %2745 = vmatpush2.msra.mxu0 %v2648
    %2746 = vmatprep.subr.mxu0 0.0
    %2747 = vmatpush2.msra.mxu0 %v2647
    %2748 = vmatprep.subr.mxu0 0.0
    %2749 = vmatpush2.msra.mxu0 %v2646
    %2750 = vmatprep.subr.mxu0 0.0
    %2751 = vmatpush2.msra.mxu0 %v2645
    %2752 = vmatprep.subr.mxu0 0.0
    %2753 = vmatpush2.msra.mxu0 %v2644
    %2754 = vmatprep.subr.mxu0 0.0
    %2755 = vmatpush2.msra.mxu0 %v2643
    %2756 = vmatprep.subr.mxu0 0.0
    %2757 = vmatpush2.msra.mxu0 %v2642
    %2758 = vmatprep.subr.mxu0 0.0
    %2759 = vmatpush2.msra.mxu0 %v2641
    %2760 = vmatprep.mubr.f32.mxu0 %v2411
    %2761 = vmatmul.mubr.f32.gmra.mxu0 %v2410
    %v2762 = vpop.f32.mrf.mxu0
    %v2763 = vadd.f32 %v2694, %v2762
    %v2764 = vpop.f32.mrf.mxu0
    %2765 = vdwg.mxu0
    %2766 = vmatprep.subr.mxu0 0.0
    %2767 = vmatpush1.msra.mxu0 %v2672
    %2768 = vmatprep.subr.mxu0 0.0
    %2769 = vmatpush1.msra.mxu0 %v2671
    %2770 = vmatprep.subr.mxu0 0.0
    %2771 = vmatpush1.msra.mxu0 %v2670
    %2772 = vmatprep.subr.mxu0 0.0
    %2773 = vmatpush1.msra.mxu0 %v2669
    %2774 = vmatprep.subr.mxu0 0.0
    %2775 = vmatpush1.msra.mxu0 %v2668
    %2776 = vmatprep.subr.mxu0 0.0
    %2777 = vmatpush1.msra.mxu0 %v2667
    %2778 = vmatprep.subr.mxu0 0.0
    %2779 = vmatpush1.msra.mxu0 %v2666
    %2780 = vmatprep.subr.mxu0 0.0
    %2781 = vmatpush1.msra.mxu0 %v2665
    %2782 = vmatprep.subr.mxu0 0.0
    %2783 = vmatpush1.msra.mxu0 %v2664
    %2784 = vmatprep.subr.mxu0 0.0
    %2785 = vmatpush1.msra.mxu0 %v2663
    %2786 = vmatprep.subr.mxu0 0.0
    %2787 = vmatpush1.msra.mxu0 %v2662
    %2788 = vmatprep.subr.mxu0 0.0
    %2789 = vmatpush1.msra.mxu0 %v2661
    %2790 = vmatprep.subr.mxu0 0.0
    %2791 = vmatpush1.msra.mxu0 %v2660
    %2792 = vmatprep.subr.mxu0 0.0
    %2793 = vmatpush1.msra.mxu0 %v2659
    %2794 = vmatprep.subr.mxu0 0.0
    %2795 = vmatpush1.msra.mxu0 %v2658
    %2796 = vmatprep.subr.mxu0 0.0
    %2797 = vmatpush1.msra.mxu0 %v2657
    %2798 = vmatprep.subr.mxu0 0.0
    %2799 = vmatpush2.msra.mxu0 %v2688
    %2800 = vmatprep.subr.mxu0 0.0
    %2801 = vmatpush2.msra.mxu0 %v2687
    %2802 = vmatprep.subr.mxu0 0.0
    %2803 = vmatpush2.msra.mxu0 %v2686
    %2804 = vmatprep.subr.mxu0 0.0
    %2805 = vmatpush2.msra.mxu0 %v2685
    %2806 = vmatprep.subr.mxu0 0.0
    %2807 = vmatpush2.msra.mxu0 %v2684
    %2808 = vmatprep.subr.mxu0 0.0
    %2809 = vmatpush2.msra.mxu0 %v2683
    %2810 = vmatprep.subr.mxu0 0.0
    %2811 = vmatpush2.msra.mxu0 %v2682
    %2812 = vmatprep.subr.mxu0 0.0
    %2813 = vmatpush2.msra.mxu0 %v2681
    %2814 = vmatprep.subr.mxu0 0.0
    %2815 = vmatpush2.msra.mxu0 %v2680
    %2816 = vmatprep.subr.mxu0 0.0
    %2817 = vmatpush2.msra.mxu0 %v2679
    %2818 = vmatprep.subr.mxu0 0.0
    %2819 = vmatpush2.msra.mxu0 %v2678
    %2820 = vmatprep.subr.mxu0 0.0
    %2821 = vmatpush2.msra.mxu0 %v2677
    %2822 = vmatprep.subr.mxu0 0.0
    %2823 = vmatpush2.msra.mxu0 %v2676
    %2824 = vmatprep.subr.mxu0 0.0
    %2825 = vmatpush2.msra.mxu0 %v2675
    %2826 = vmatprep.subr.mxu0 0.0
    %2827 = vmatpush2.msra.mxu0 %v2674
    %2828 = vmatprep.subr.mxu0 0.0
    %2829 = vmatpush2.msra.mxu0 %v2673
    %2830 = vmatprep.mubr.f32.mxu0 %v2413
    %2831 = vmatmul.mubr.f32.gmra.mxu0 %v2412
    %v2832 = vpop.f32.mrf.mxu0
    %v2833 = vadd.f32 %v2763, %v2832
    %v2834 = vpop.f32.mrf.mxu0
    %2835 = vdwg.mxu0
    %v2836 = vtanh.pop %v2833
    %v2837 = vadd.f32 %v2836, 1.0
    %v2838 = vmul.f32 %v2837, 11.0
    %v2839 = vadd.f32 %v2838, -20.0
    %v2840 = vmul.f32 %v2839, 1.442695
    %v2841 = vpow.pop %v2840
    %v2842 = vsub.f32 0.0, %v2839
    %v2843 = vmul.f32 %v2842, 1.442695
    %v2844 = vpow.pop %v2843
    %v2845 = vld [vmem:[%s2] sm:$0x3]
    %v2846 = vmul.f32 %v2841, %v2845
    %v2847 = vadd.f32 %v2622, %v2846
    %v2848 = vsub.f32 %v2847, %v2622
    %v2849 = vmul.f32 %v2848, %v2844
    %v2850 = vmul.f32 %v2849, -0.5
    %v2851 = vmul.f32 %v2850, %v2849
    %v2852 = vsub.f32 %v2851, %v2839
    %v2853 = vsub.f32 %v2852, 0.9189385
    %vm2854 = vcmask 25600
    %v2855 = vsel %vm2854, %v2853, 0.0
    %2856 = vadd.xlane.f32.xlu0 %v2855
    %v2857 = vpop.xlane.xlu0 %2856
    %v2858 = vtanh.pop %v2847
    %v2859 = vmul.f32 %v2858, %v2858
    %v2860 = vsub.f32 1.0, %v2859
    %v2861 = vadd.f32 %v2860, 1e-06
    %v2862 = vlog2.pop %v2861
    %v2863 = vmul.f32 %v2862, 0.6931472
    %v2864 = vsel %vm2854, %v2863, 0.0
    %2865 = vadd.xlane.f32.xlu0 %v2864
    %v2866 = vpop.xlane.xlu0 %2865
    %v2867 = vsub.f32 %v2857, %v2866
    %2868 = vst.msk [vmem:[#allocation2] sm:$0x3] %vm2854, %v2858
    %vm2869 = vcmask 1024
    %2870 = vst.msk [vmem:[%s19] sm:$0x3] %vm2869, %v2867
    // Predicated region
    $region74: #{actor_forward.1} parent=1 // pred_check
      _
    $region75: #{actor_forward.1} parent=1 // pred_check_branch
      %2872 = sbr.rel (0) target = $region77
    $region76: #{actor_forward.1} parent=1 // pred_region
      %s2874 = ssub.s32 32, 32
      %2875 = vsyncadd [#allocation3], %s2874
      %s2877 = sshll.u32 [#allocation2], 4
      %s2878 = int_to_ptr.vmem [resolvable:$true] %s2877
      %2880 = dma.vmem_to_hbm [thread:$0]  %s2878, 32, %s18, [#allocation3]
    $region77: #{actor_forward.1} parent=1 // pred_fallthru
      _
    // Predicated region
    $region78: #{actor_forward.1} parent=1 // pred_check
      _
    $region79: #{actor_forward.1} parent=1 // pred_check_branch
      %2882 = sbr.rel (0) target = $region81
    $region80: #{actor_forward.1} parent=1 // pred_region
      _
    $region81: #{actor_forward.1} parent=1 // pred_fallthru
      _
    // Predicated region
    $region82: #{actor_forward.1} parent=1 // pred_check
      _
    $region83: #{actor_forward.1} parent=1 // pred_check_branch
      %2884 = sbr.rel (0) target = $region85
    $region84: #{actor_forward.1} parent=1 // pred_region
      %2885 = dma.done [#allocation3], 32
    $region85: #{actor_forward.1} parent=1 // pred_fallthru
      _
    // Predicated region
    $region86: #{actor_forward.1} parent=1 // pred_check
      _
    $region87: #{actor_forward.1} parent=1 // pred_check_branch
      %2887 = sbr.rel (0) target = $region89
    $region88: #{actor_forward.1} parent=1 // pred_region
      _
    $region89: #{actor_forward.1} parent=1 // pred_fallthru
      _
    %2888 = vsyncpa [#allocation3], 1

</llo_original>
